<compile_context>
chip_gen: v6e
topology: v6e:2x2x1
jax: 0.10.0
libtpu: 0.0.40
codegen_flags: <defaults>
</compile_context>

<pallas_src>
import functools

import numpy as np
import jax
import jax.numpy as jnp
from jax.experimental import pallas as pl
from jax.experimental.pallas import tpu as pltpu


# --------------------------------------------------------------------------
# Fused kernel: bidirectional LSTM + Linear projection + GroupNorm + residual.
#
# Layout: time-major (T, N, D) where N = B * Nb groups the Nb sequences of each
# batch element contiguously (n = b * Nb + j), D = channels on the lane axis.
#   x_ref    : (T, N, D)  -- RNN input AND residual base (same permuted view)
#   wih_ref  : (D, 8H)    -- [fwd | bwd] input->gate weights, gate order (i,f,o,g)
#   whh_*    : (H, 4H)    -- hidden->gate weights per direction
#   b_*      : (1, 4H)    -- combined bias (b_ih + b_hh) per direction
#   wp_ref   : (2H, D)    -- projection Linear(2H, D): rows [0:H] fwd, [H:2H] bwd
#   b_p      : (1, D)
#   gamma/beta: (1, D)    -- GroupNorm(1, D) affine params (per channel)
#   out_ref  : (T, N, D)  = x + GN(proj)   (GN stats per batch element)
# --------------------------------------------------------------------------
def _bilstm_gn_res_kernel(B, x_ref, wih_ref, whh_f_ref, whh_b_ref,
                          bf_ref, bb_ref, wp_ref, bp_ref,
                          gamma_ref, beta_ref, out_ref, h_scr):
    T, N, D = x_ref.shape
    H = whh_f_ref.shape[0]
    Nb = N // B

    x = x_ref[...]                                        # (T, N, D)

    # ---- hoisted input->gate projection for BOTH directions: one MXU op ----
    dn = (((2,), (0,)), ((), ()))
    gx = jax.lax.dot_general(x, wih_ref[...], dn,
                             preferred_element_type=jnp.float32)   # (T, N, 8H)
    gx_f = gx[:, :, :4 * H]
    gx_b = gx[:, :, 4 * H:]

    # ---- weights/biases loaded ONCE, outside the recurrence ----
    whh_f = whh_f_ref[...]
    whh_b = whh_b_ref[...]
    b_f = bf_ref[...]
    b_b = bb_ref[...]
    wp = wp_ref[...]
    b_p = bp_ref[...]
    gamma = gamma_ref[...]
    beta = beta_ref[...]

    def lstm_step(g_in, h, c, whh, bias):
        # g_in already contains x_t @ W_ih; only the recurrent dot is left.
        gates = g_in + jnp.dot(h, whh, preferred_element_type=jnp.float32) + bias
        # gate order (i, f, o, g): one contiguous sigmoid slice + one tanh slice
        s = jax.nn.sigmoid(gates[:, :3 * H])
        g = jnp.tanh(gates[:, 3 * H:])
        i = s[:, :H]
        f = s[:, H:2 * H]
        o = s[:, 2 * H:]
        c_new = f * c + i * g
        h_new = o * jnp.tanh(c_new)
        return h_new, c_new

    zeros = jnp.zeros((N, H), jnp.float32)

    # Forward direction (fully unrolled: T is small & static).
    h, c = zeros, zeros
    for t in range(T):
        h, c = lstm_step(gx_f[t], h, c, whh_f, b_f)
        h_scr[0, t] = h

    # Backward direction.
    h, c = zeros, zeros
    for s_ in range(T):
        t = T - 1 - s_
        h, c = lstm_step(gx_b[t], h, c, whh_b, b_b)
        h_scr[1, t] = h

    # Projection of concat([h_fwd, h_bwd]) -> D, expressed as a split sum
    # (epilogue-only work; kept as two small dots for robust lowering).
    proj = (jax.lax.dot_general(h_scr[0], wp[:H, :], dn,
                                preferred_element_type=jnp.float32)
            + jax.lax.dot_general(h_scr[1], wp[H:, :], dn,
                                  preferred_element_type=jnp.float32)
            + b_p)                                        # (T, N, D)

    # Fused GroupNorm(1, D, eps=1e-8) per batch element + residual add.
    for b in range(B):
        lo, hi = b * Nb, (b + 1) * Nb
        p_b = proj[:, lo:hi, :]
        mean = jnp.mean(p_b)
        var = jnp.mean(jnp.square(p_b - mean))            # biased variance (PyTorch GN)
        normed = (p_b - mean) * jax.lax.rsqrt(var + 1e-8)
        out_ref[:, lo:hi, :] = x[:, lo:hi, :] + normed * gamma + beta


def bilstm_gn_res(x_tnd, rnn_p, norm_p, B):
    """x_tnd: (T, N=B*Nb, D) time-major; returns x + GN(proj(BiLSTM(x))) in the
    same layout."""
    T, N, D = x_tnd.shape
    H = rnn_p['whh_f'].shape[0]
    vmem = pl.BlockSpec(memory_space=pltpu.MemorySpace.VMEM)
    return pl.pallas_call(
        functools.partial(_bilstm_gn_res_kernel, B),
        out_shape=jax.ShapeDtypeStruct((T, N, D), jnp.float32),
        in_specs=[vmem] * 10,
        out_specs=vmem,
        scratch_shapes=[pltpu.VMEM((2, T, N, H), jnp.float32)],
        input_output_aliases={0: 0},      # residual input aliases the output buffer
    )(x_tnd, rnn_p['wih'], rnn_p['whh_f'], rnn_p['whh_b'],
      rnn_p['b_f'], rnn_p['b_b'], rnn_p['wp'], rnn_p['b_p'],
      norm_p['gamma'], norm_p['beta'])


# --------------------------------------------------------------------------
# Output head: PReLU (single shared parameter) + 1x1 Conv2d.
# Channels-first flat layout: x (C, P) with P = B*d1*d2 = 128 on the lane axis
# -> output (O, P) is a full-lane, unmasked store slab.
# --------------------------------------------------------------------------
def _prelu_conv_kernel(x_ref, a_ref, w_ref, b_ref, out_ref):
    x = x_ref[...]                                        # (C, P)
    a = a_ref[...]                                        # (1, 1)
    y = jnp.maximum(x, 0.0) + a * jnp.minimum(x, 0.0)
    out_ref[...] = (jnp.dot(w_ref[...], y, preferred_element_type=jnp.float32)
                    + b_ref[...])                         # (O, P)


def prelu_conv1x1(x_row, a, w, b, B, d1, d2):
    """x_row: (d1, B*d2, C) row layout -> (B, O, d1, d2) NCHW."""
    C = x_row.shape[-1]
    O = w.shape[0]
    # row layout (i, b*d2+j, c) -> (C, B*d1*d2) with p = (b*d1 + i)*d2 + j
    x_cp = jnp.transpose(x_row.reshape(d1, B, d2, C),
                         (3, 1, 0, 2)).reshape(C, B * d1 * d2)
    vmem = pl.BlockSpec(memory_space=pltpu.MemorySpace.VMEM)
    out = pl.pallas_call(
        _prelu_conv_kernel,
        out_shape=jax.ShapeDtypeStruct((O, B * d1 * d2), jnp.float32),
        in_specs=[vmem] * 4,
        out_specs=vmem,
    )(x_cp, a, w, b)
    return jnp.transpose(out.reshape(O, B, d1, d2), (1, 0, 2, 3))


# --------------------------------------------------------------------------
# Parameter construction (deterministic, synthetic) and DPRNN forward.
# --------------------------------------------------------------------------
def init_dprnn_params(key, num_layers, D, H, O):
    def rnd(shape, scale=0.1):
        nonlocal key
        key, sub = jax.random.split(key)
        return jax.random.normal(sub, shape, jnp.float32) * scale

    params = {'layers': []}
    for _ in range(num_layers):
        layer = {}
        for name in ('row', 'col'):
            layer[name] = {
                'wih': rnd((D, 8 * H)),            # [fwd | bwd], gate order (i,f,o,g)
                'whh_f': rnd((H, 4 * H)), 'whh_b': rnd((H, 4 * H)),
                'b_f': rnd((1, 4 * H)), 'b_b': rnd((1, 4 * H)),
                'wp': rnd((2 * H, D)),             # Linear(2H, D): [fwd ; bwd]
                'b_p': rnd((1, D)),
            }
            layer[name + '_norm'] = {
                'gamma': 1.0 + rnd((1, D)),
                'beta': rnd((1, D)),
            }
        params['layers'].append(layer)
    params['prelu_a'] = jnp.full((1, 1), 0.25, jnp.float32)   # nn.PReLU default init
    params['conv_w'] = rnd((O, D))                            # (C_out, C_in), 1x1 conv
    params['conv_b'] = rnd((O, 1))
    return params


@jax.jit
def dprnn_forward(x, params):
    """x: (B, C, dim1, dim2) NCHW -> (B, O, dim1, dim2)."""
    B, C, d1, d2 = x.shape
    # Canonical working layout between stages: "row layout" (d1, B*d2, C),
    # element (i, b*d2 + j, c) == output[b, c, i, j].
    cur = jnp.transpose(x, (2, 0, 3, 1)).reshape(d1, B * d2, C)
    for layer in params['layers']:
        # row stage: sequences along dim1, batch = B * dim2
        cur = bilstm_gn_res(cur, layer['row'], layer['row_norm'], B)
        # row layout -> col layout (d2, B*d1, C): element (j, b*d1 + i, c)
        cur = jnp.transpose(cur.reshape(d1, B, d2, C),
                            (2, 1, 0, 3)).reshape(d2, B * d1, C)
        # col stage: sequences along dim2, batch = B * dim1
        cur = bilstm_gn_res(cur, layer['col'], layer['col_norm'], B)
        # col layout -> row layout for the next layer / output head
        cur = jnp.transpose(cur.reshape(d2, B, d1, C),
                            (2, 1, 0, 3)).reshape(d1, B * d2, C)
    return prelu_conv1x1(cur, params['prelu_a'], params['conv_w'],
                         params['conv_b'], B, d1, d2)


# --------------------------------------------------------------------------
# Pure-JAX reference (same params, NCHW structure of the PyTorch module).
# --------------------------------------------------------------------------
_HI = jax.lax.Precision.HIGHEST


def _ref_bilstm_proj(x, p):
    N, T, D = x.shape
    H = p['whh_f'].shape[0]
    wih_f = p['wih'][:, :4 * H]
    wih_b = p['wih'][:, 4 * H:]

    def run(xs, wih, whh, b):
        h = jnp.zeros((N, H), jnp.float32)
        c = jnp.zeros((N, H), jnp.float32)
        hs = []
        for t in range(T):
            gates = (jnp.dot(xs[:, t], wih, precision=_HI)
                     + jnp.dot(h, whh, precision=_HI) + b[0])
            i = jax.nn.sigmoid(gates[:, :H])
            f = jax.nn.sigmoid(gates[:, H:2 * H])
            o = jax.nn.sigmoid(gates[:, 2 * H:3 * H])
            g = jnp.tanh(gates[:, 3 * H:])
            c = f * c + i * g
            h = o * jnp.tanh(c)
            hs.append(h)
        return jnp.stack(hs, axis=1)          # (N, T, H)

    hf = run(x, wih_f, p['whh_f'], p['b_f'])
    hb = run(x[:, ::-1], wih_b, p['whh_b'], p['b_b'])[:, ::-1]
    hcat = jnp.concatenate([hf, hb], axis=-1)
    return jnp.einsum('nth,hd->ntd', hcat, p['wp'], precision=_HI) + p['b_p'][0]


def _ref_gn(x, p):
    mean = jnp.mean(x, axis=(1, 2, 3), keepdims=True)
    var = jnp.mean(jnp.square(x - mean), axis=(1, 2, 3), keepdims=True)
    gamma = p['gamma'][0][None, :, None, None]
    beta = p['beta'][0][None, :, None, None]
    return (x - mean) * jax.lax.rsqrt(var + 1e-8) * gamma + beta


def dprnn_reference(x, params):
    B, C, d1, d2 = x.shape
    output = x
    for layer in params['layers']:
        row_in = jnp.transpose(output, (0, 3, 2, 1)).reshape(B * d2, d1, C)
        row_out = _ref_bilstm_proj(row_in, layer['row'])
        row_out = jnp.transpose(row_out.reshape(B, d2, d1, C), (0, 3, 2, 1))
        output = output + _ref_gn(row_out, layer['row_norm'])
        col_in = jnp.transpose(output, (0, 2, 3, 1)).reshape(B * d1, d2, C)
        col_out = _ref_bilstm_proj(col_in, layer['col'])
        col_out = jnp.transpose(col_out.reshape(B, d1, d2, C), (0, 3, 1, 2))
        output = output + _ref_gn(col_out, layer['col_norm'])
    a = params['prelu_a'][0, 0]
    y = jnp.maximum(output, 0.0) + a * jnp.minimum(output, 0.0)
    out = jnp.einsum('bchw,oc->bohw', y, params['conv_w'], precision=_HI)
    return out + params['conv_b'][:, 0][None, :, None, None]


if __name__ == "__main__":
    B, C, d1, d2 = 2, 16, 8, 8          # input: (batch, input_size, dim1, dim2)
    H, O, num_layers = 32, 8, 2

    key = jax.random.PRNGKey(0)
    kx, kp = jax.random.split(key)
    x = jax.random.normal(kx, (B, C, d1, d2), jnp.float32)
    params = init_dprnn_params(kp, num_layers, C, H, O)

    out = jax.block_until_ready(dprnn_forward(x, params))
    assert out.shape == (B, O, d1, d2)

    ref = dprnn_reference(x, params)
    np.testing.assert_allclose(np.asarray(out), np.asarray(ref),
                               rtol=1e-3, atol=1e-3)
    print("KERNEL_OK")
</pallas_src>

<mosaic_0001>
module attributes {stable_mosaic.version = 11 : i64} {
  func.func @_bilstm_gn_res_kernel(%arg0: memref<8x16x16xf32, #tpu.memory_space<vmem>>, %arg1: memref<16x256xf32, #tpu.memory_space<vmem>>, %arg2: memref<32x128xf32, #tpu.memory_space<vmem>>, %arg3: memref<32x128xf32, #tpu.memory_space<vmem>>, %arg4: memref<1x128xf32, #tpu.memory_space<vmem>>, %arg5: memref<1x128xf32, #tpu.memory_space<vmem>>, %arg6: memref<64x16xf32, #tpu.memory_space<vmem>>, %arg7: memref<1x16xf32, #tpu.memory_space<vmem>>, %arg8: memref<1x16xf32, #tpu.memory_space<vmem>>, %arg9: memref<1x16xf32, #tpu.memory_space<vmem>>, %arg10: memref<8x16x16xf32, #tpu.memory_space<vmem>>, %arg11: memref<2x8x16x32xf32, #tpu.memory_space<vmem>>) attributes {dimension_semantics = [], scalar_prefetch = 0 : i64, scratch_operands = 1 : i64, tpu.core_type = #tpu.core_type<tc>} {
    %c0 = arith.constant 0 : index
    %c0_0 = arith.constant 0 : index
    %c0_1 = arith.constant 0 : index
    %0 = vector.load %arg0[%c0, %c0_0, %c0_1] : memref<8x16x16xf32, #tpu.memory_space<vmem>>, vector<8x16x16xf32>
    %c0_2 = arith.constant 0 : index
    %c0_3 = arith.constant 0 : index
    %1 = vector.load %arg1[%c0_2, %c0_3] : memref<16x256xf32, #tpu.memory_space<vmem>>, vector<16x256xf32>
    %cst = arith.constant dense<0.000000e+00> : vector<8x16x256xf32>
    %2 = tpu.matmul %0, %1, %cst {dimension_numbers = #tpu.dot_dimension_numbers<[2], [0], [0, 1], [1], [0, 0, 0, 1, 1, 1], [], []>} : vector<8x16x16xf32>, vector<16x256xf32>, vector<8x16x256xf32> -> vector<8x16x256xf32>
    %3 = vector.extract_strided_slice %2 {offsets = [0, 0, 0], sizes = [8, 16, 128], strides = [1, 1, 1]} : vector<8x16x256xf32> to vector<8x16x128xf32>
    %4 = vector.extract_strided_slice %2 {offsets = [0, 0, 128], sizes = [8, 16, 128], strides = [1, 1, 1]} : vector<8x16x256xf32> to vector<8x16x128xf32>
    %c0_4 = arith.constant 0 : index
    %c0_5 = arith.constant 0 : index
    %5 = vector.load %arg2[%c0_4, %c0_5] : memref<32x128xf32, #tpu.memory_space<vmem>>, vector<32x128xf32>
    %c0_6 = arith.constant 0 : index
    %c0_7 = arith.constant 0 : index
    %6 = vector.load %arg3[%c0_6, %c0_7] : memref<32x128xf32, #tpu.memory_space<vmem>>, vector<32x128xf32>
    %c0_8 = arith.constant 0 : index
    %c0_9 = arith.constant 0 : index
    %7 = vector.load %arg4[%c0_8, %c0_9] : memref<1x128xf32, #tpu.memory_space<vmem>>, vector<1x128xf32>
    %c0_10 = arith.constant 0 : index
    %c0_11 = arith.constant 0 : index
    %8 = vector.load %arg5[%c0_10, %c0_11] : memref<1x128xf32, #tpu.memory_space<vmem>>, vector<1x128xf32>
    %c0_12 = arith.constant 0 : index
    %c0_13 = arith.constant 0 : index
    %9 = vector.load %arg6[%c0_12, %c0_13] : memref<64x16xf32, #tpu.memory_space<vmem>>, vector<64x16xf32>
    %c0_14 = arith.constant 0 : index
    %c0_15 = arith.constant 0 : index
    %10 = vector.load %arg7[%c0_14, %c0_15] : memref<1x16xf32, #tpu.memory_space<vmem>>, vector<1x16xf32>
    %c0_16 = arith.constant 0 : index
    %c0_17 = arith.constant 0 : index
    %11 = vector.load %arg8[%c0_16, %c0_17] : memref<1x16xf32, #tpu.memory_space<vmem>>, vector<1x16xf32>
    %c0_18 = arith.constant 0 : index
    %c0_19 = arith.constant 0 : index
    %12 = vector.load %arg9[%c0_18, %c0_19] : memref<1x16xf32, #tpu.memory_space<vmem>>, vector<1x16xf32>
    %cst_20 = arith.constant 0.000000e+00 : f32
    %13 = vector.broadcast %cst_20 : f32 to vector<16x32xf32>
    %14 = vector.extract_strided_slice %3 {offsets = [0, 0, 0], sizes = [1, 16, 128], strides = [1, 1, 1]} : vector<8x16x128xf32> to vector<1x16x128xf32>
    %15 = vector.shape_cast %14 : vector<1x16x128xf32> to vector<16x128xf32>
    %cst_21 = arith.constant dense<0.000000e+00> : vector<16x128xf32>
    %16 = tpu.matmul %13, %5, %cst_21 {dimension_numbers = #tpu.dot_dimension_numbers<[1], [0], [0], [1], [0, 0, 1, 1], [], []>} : vector<16x32xf32>, vector<32x128xf32>, vector<16x128xf32> -> vector<16x128xf32>
    %17 = arith.addf %15, %16 : vector<16x128xf32>
    %18 = vector.broadcast %7 : vector<1x128xf32> to vector<16x128xf32>
    %19 = arith.addf %17, %18 : vector<16x128xf32>
    %20 = vector.extract_strided_slice %19 {offsets = [0, 0], sizes = [16, 96], strides = [1, 1]} : vector<16x128xf32> to vector<16x96xf32>
    %21 = arith.negf %20 : vector<16x96xf32>
    %22 = math.exp %21 : vector<16x96xf32>
    %cst_22 = arith.constant 1.000000e+00 : f32
    %23 = vector.broadcast %cst_22 : f32 to vector<16x96xf32>
    %24 = arith.addf %23, %22 : vector<16x96xf32>
    %25 = arith.divf %23, %24 : vector<16x96xf32>
    %26 = vector.extract_strided_slice %19 {offsets = [0, 96], sizes = [16, 32], strides = [1, 1]} : vector<16x128xf32> to vector<16x32xf32>
    %27 = math.tanh %26 : vector<16x32xf32>
    %28 = vector.extract_strided_slice %25 {offsets = [0, 0], sizes = [16, 32], strides = [1, 1]} : vector<16x96xf32> to vector<16x32xf32>
    %29 = vector.extract_strided_slice %25 {offsets = [0, 32], sizes = [16, 32], strides = [1, 1]} : vector<16x96xf32> to vector<16x32xf32>
    %30 = vector.extract_strided_slice %25 {offsets = [0, 64], sizes = [16, 32], strides = [1, 1]} : vector<16x96xf32> to vector<16x32xf32>
    %31 = arith.mulf %29, %13 : vector<16x32xf32>
    %32 = arith.mulf %28, %27 : vector<16x32xf32>
    %33 = arith.addf %31, %32 : vector<16x32xf32>
    %34 = math.tanh %33 : vector<16x32xf32>
    %35 = arith.mulf %30, %34 : vector<16x32xf32>
    %c0_23 = arith.constant 0 : index
    %c0_24 = arith.constant 0 : index
    %c0_25 = arith.constant 0 : index
    %c0_26 = arith.constant 0 : index
    %36 = vector.load %arg11[%c0_23, %c0_24, %c0_25, %c0_26] : memref<2x8x16x32xf32, #tpu.memory_space<vmem>>, vector<1x1x16x32xf32>
    %37 = vector.shape_cast %36 : vector<1x1x16x32xf32> to vector<16x32xf32>
    %38 = vector.shape_cast %35 : vector<16x32xf32> to vector<1x1x16x32xf32>
    tpu.vector_store %arg11[%c0_23, %c0_24, %c0_25, %c0_26], %38 {strides = array<i32>} : memref<2x8x16x32xf32, #tpu.memory_space<vmem>>, vector<1x1x16x32xf32>,
    %39 = vector.extract_strided_slice %3 {offsets = [1, 0, 0], sizes = [1, 16, 128], strides = [1, 1, 1]} : vector<8x16x128xf32> to vector<1x16x128xf32>
    %40 = vector.shape_cast %39 : vector<1x16x128xf32> to vector<16x128xf32>
    %cst_27 = arith.constant dense<0.000000e+00> : vector<16x128xf32>
    %41 = tpu.matmul %35, %5, %cst_27 {dimension_numbers = #tpu.dot_dimension_numbers<[1], [0], [0], [1], [0, 0, 1, 1], [], []>} : vector<16x32xf32>, vector<32x128xf32>, vector<16x128xf32> -> vector<16x128xf32>
    %42 = arith.addf %40, %41 : vector<16x128xf32>
    %43 = vector.broadcast %7 : vector<1x128xf32> to vector<16x128xf32>
    %44 = arith.addf %42, %43 : vector<16x128xf32>
    %45 = vector.extract_strided_slice %44 {offsets = [0, 0], sizes = [16, 96], strides = [1, 1]} : vector<16x128xf32> to vector<16x96xf32>
    %46 = arith.negf %45 : vector<16x96xf32>
    %47 = math.exp %46 : vector<16x96xf32>
    %cst_28 = arith.constant 1.000000e+00 : f32
    %48 = vector.broadcast %cst_28 : f32 to vector<16x96xf32>
    %49 = arith.addf %48, %47 : vector<16x96xf32>
    %50 = arith.divf %48, %49 : vector<16x96xf32>
    %51 = vector.extract_strided_slice %44 {offsets = [0, 96], sizes = [16, 32], strides = [1, 1]} : vector<16x128xf32> to vector<16x32xf32>
    %52 = math.tanh %51 : vector<16x32xf32>
    %53 = vector.extract_strided_slice %50 {offsets = [0, 0], sizes = [16, 32], strides = [1, 1]} : vector<16x96xf32> to vector<16x32xf32>
    %54 = vector.extract_strided_slice %50 {offsets = [0, 32], sizes = [16, 32], strides = [1, 1]} : vector<16x96xf32> to vector<16x32xf32>
    %55 = vector.extract_strided_slice %50 {offsets = [0, 64], sizes = [16, 32], strides = [1, 1]} : vector<16x96xf32> to vector<16x32xf32>
    %56 = arith.mulf %54, %33 : vector<16x32xf32>
    %57 = arith.mulf %53, %52 : vector<16x32xf32>
    %58 = arith.addf %56, %57 : vector<16x32xf32>
    %59 = math.tanh %58 : vector<16x32xf32>
    %60 = arith.mulf %55, %59 : vector<16x32xf32>
    %c0_29 = arith.constant 0 : index
    %c1 = arith.constant 1 : index
    %c0_30 = arith.constant 0 : index
    %c0_31 = arith.constant 0 : index
    %61 = vector.load %arg11[%c0_29, %c1, %c0_30, %c0_31] : memref<2x8x16x32xf32, #tpu.memory_space<vmem>>, vector<1x1x16x32xf32>
    %62 = vector.shape_cast %61 : vector<1x1x16x32xf32> to vector<16x32xf32>
    %63 = vector.shape_cast %60 : vector<16x32xf32> to vector<1x1x16x32xf32>
    tpu.vector_store %arg11[%c0_29, %c1, %c0_30, %c0_31], %63 {strides = array<i32>} : memref<2x8x16x32xf32, #tpu.memory_space<vmem>>, vector<1x1x16x32xf32>,
    %64 = vector.extract_strided_slice %3 {offsets = [2, 0, 0], sizes = [1, 16, 128], strides = [1, 1, 1]} : vector<8x16x128xf32> to vector<1x16x128xf32>
    %65 = vector.shape_cast %64 : vector<1x16x128xf32> to vector<16x128xf32>
    %cst_32 = arith.constant dense<0.000000e+00> : vector<16x128xf32>
    %66 = tpu.matmul %60, %5, %cst_32 {dimension_numbers = #tpu.dot_dimension_numbers<[1], [0], [0], [1], [0, 0, 1, 1], [], []>} : vector<16x32xf32>, vector<32x128xf32>, vector<16x128xf32> -> vector<16x128xf32>
    %67 = arith.addf %65, %66 : vector<16x128xf32>
    %68 = vector.broadcast %7 : vector<1x128xf32> to vector<16x128xf32>
    %69 = arith.addf %67, %68 : vector<16x128xf32>
    %70 = vector.extract_strided_slice %69 {offsets = [0, 0], sizes = [16, 96], strides = [1, 1]} : vector<16x128xf32> to vector<16x96xf32>
    %71 = arith.negf %70 : vector<16x96xf32>
    %72 = math.exp %71 : vector<16x96xf32>
    %cst_33 = arith.constant 1.000000e+00 : f32
    %73 = vector.broadcast %cst_33 : f32 to vector<16x96xf32>
    %74 = arith.addf %73, %72 : vector<16x96xf32>
    %75 = arith.divf %73, %74 : vector<16x96xf32>
    %76 = vector.extract_strided_slice %69 {offsets = [0, 96], sizes = [16, 32], strides = [1, 1]} : vector<16x128xf32> to vector<16x32xf32>
    %77 = math.tanh %76 : vector<16x32xf32>
    %78 = vector.extract_strided_slice %75 {offsets = [0, 0], sizes = [16, 32], strides = [1, 1]} : vector<16x96xf32> to vector<16x32xf32>
    %79 = vector.extract_strided_slice %75 {offsets = [0, 32], sizes = [16, 32], strides = [1, 1]} : vector<16x96xf32> to vector<16x32xf32>
    %80 = vector.extract_strided_slice %75 {offsets = [0, 64], sizes = [16, 32], strides = [1, 1]} : vector<16x96xf32> to vector<16x32xf32>
    %81 = arith.mulf %79, %58 : vector<16x32xf32>
    %82 = arith.mulf %78, %77 : vector<16x32xf32>
    %83 = arith.addf %81, %82 : vector<16x32xf32>
    %84 = math.tanh %83 : vector<16x32xf32>
    %85 = arith.mulf %80, %84 : vector<16x32xf32>
    %c0_34 = arith.constant 0 : index
    %c2 = arith.constant 2 : index
    %c0_35 = arith.constant 0 : index
    %c0_36 = arith.constant 0 : index
    %86 = vector.load %arg11[%c0_34, %c2, %c0_35, %c0_36] : memref<2x8x16x32xf32, #tpu.memory_space<vmem>>, vector<1x1x16x32xf32>
    %87 = vector.shape_cast %86 : vector<1x1x16x32xf32> to vector<16x32xf32>
    %88 = vector.shape_cast %85 : vector<16x32xf32> to vector<1x1x16x32xf32>
    tpu.vector_store %arg11[%c0_34, %c2, %c0_35, %c0_36], %88 {strides = array<i32>} : memref<2x8x16x32xf32, #tpu.memory_space<vmem>>, vector<1x1x16x32xf32>,
    %89 = vector.extract_strided_slice %3 {offsets = [3, 0, 0], sizes = [1, 16, 128], strides = [1, 1, 1]} : vector<8x16x128xf32> to vector<1x16x128xf32>
    %90 = vector.shape_cast %89 : vector<1x16x128xf32> to vector<16x128xf32>
    %cst_37 = arith.constant dense<0.000000e+00> : vector<16x128xf32>
    %91 = tpu.matmul %85, %5, %cst_37 {dimension_numbers = #tpu.dot_dimension_numbers<[1], [0], [0], [1], [0, 0, 1, 1], [], []>} : vector<16x32xf32>, vector<32x128xf32>, vector<16x128xf32> -> vector<16x128xf32>
    %92 = arith.addf %90, %91 : vector<16x128xf32>
    %93 = vector.broadcast %7 : vector<1x128xf32> to vector<16x128xf32>
    %94 = arith.addf %92, %93 : vector<16x128xf32>
    %95 = vector.extract_strided_slice %94 {offsets = [0, 0], sizes = [16, 96], strides = [1, 1]} : vector<16x128xf32> to vector<16x96xf32>
    %96 = arith.negf %95 : vector<16x96xf32>
    %97 = math.exp %96 : vector<16x96xf32>
    %cst_38 = arith.constant 1.000000e+00 : f32
    %98 = vector.broadcast %cst_38 : f32 to vector<16x96xf32>
    %99 = arith.addf %98, %97 : vector<16x96xf32>
    %100 = arith.divf %98, %99 : vector<16x96xf32>
    %101 = vector.extract_strided_slice %94 {offsets = [0, 96], sizes = [16, 32], strides = [1, 1]} : vector<16x128xf32> to vector<16x32xf32>
    %102 = math.tanh %101 : vector<16x32xf32>
    %103 = vector.extract_strided_slice %100 {offsets = [0, 0], sizes = [16, 32], strides = [1, 1]} : vector<16x96xf32> to vector<16x32xf32>
    %104 = vector.extract_strided_slice %100 {offsets = [0, 32], sizes = [16, 32], strides = [1, 1]} : vector<16x96xf32> to vector<16x32xf32>
    %105 = vector.extract_strided_slice %100 {offsets = [0, 64], sizes = [16, 32], strides = [1, 1]} : vector<16x96xf32> to vector<16x32xf32>
    %106 = arith.mulf %104, %83 : vector<16x32xf32>
    %107 = arith.mulf %103, %102 : vector<16x32xf32>
    %108 = arith.addf %106, %107 : vector<16x32xf32>
    %109 = math.tanh %108 : vector<16x32xf32>
    %110 = arith.mulf %105, %109 : vector<16x32xf32>
    %c0_39 = arith.constant 0 : index
    %c3 = arith.constant 3 : index
    %c0_40 = arith.constant 0 : index
    %c0_41 = arith.constant 0 : index
    %111 = vector.load %arg11[%c0_39, %c3, %c0_40, %c0_41] : memref<2x8x16x32xf32, #tpu.memory_space<vmem>>, vector<1x1x16x32xf32>
    %112 = vector.shape_cast %111 : vector<1x1x16x32xf32> to vector<16x32xf32>
    %113 = vector.shape_cast %110 : vector<16x32xf32> to vector<1x1x16x32xf32>
    tpu.vector_store %arg11[%c0_39, %c3, %c0_40, %c0_41], %113 {strides = array<i32>} : memref<2x8x16x32xf32, #tpu.memory_space<vmem>>, vector<1x1x16x32xf32>,
    %114 = vector.extract_strided_slice %3 {offsets = [4, 0, 0], sizes = [1, 16, 128], strides = [1, 1, 1]} : vector<8x16x128xf32> to vector<1x16x128xf32>
    %115 = vector.shape_cast %114 : vector<1x16x128xf32> to vector<16x128xf32>
    %cst_42 = arith.constant dense<0.000000e+00> : vector<16x128xf32>
    %116 = tpu.matmul %110, %5, %cst_42 {dimension_numbers = #tpu.dot_dimension_numbers<[1], [0], [0], [1], [0, 0, 1, 1], [], []>} : vector<16x32xf32>, vector<32x128xf32>, vector<16x128xf32> -> vector<16x128xf32>
    %117 = arith.addf %115, %116 : vector<16x128xf32>
    %118 = vector.broadcast %7 : vector<1x128xf32> to vector<16x128xf32>
    %119 = arith.addf %117, %118 : vector<16x128xf32>
    %120 = vector.extract_strided_slice %119 {offsets = [0, 0], sizes = [16, 96], strides = [1, 1]} : vector<16x128xf32> to vector<16x96xf32>
    %121 = arith.negf %120 : vector<16x96xf32>
    %122 = math.exp %121 : vector<16x96xf32>
    %cst_43 = arith.constant 1.000000e+00 : f32
    %123 = vector.broadcast %cst_43 : f32 to vector<16x96xf32>
    %124 = arith.addf %123, %122 : vector<16x96xf32>
    %125 = arith.divf %123, %124 : vector<16x96xf32>
    %126 = vector.extract_strided_slice %119 {offsets = [0, 96], sizes = [16, 32], strides = [1, 1]} : vector<16x128xf32> to vector<16x32xf32>
    %127 = math.tanh %126 : vector<16x32xf32>
    %128 = vector.extract_strided_slice %125 {offsets = [0, 0], sizes = [16, 32], strides = [1, 1]} : vector<16x96xf32> to vector<16x32xf32>
    %129 = vector.extract_strided_slice %125 {offsets = [0, 32], sizes = [16, 32], strides = [1, 1]} : vector<16x96xf32> to vector<16x32xf32>
    %130 = vector.extract_strided_slice %125 {offsets = [0, 64], sizes = [16, 32], strides = [1, 1]} : vector<16x96xf32> to vector<16x32xf32>
    %131 = arith.mulf %129, %108 : vector<16x32xf32>
    %132 = arith.mulf %128, %127 : vector<16x32xf32>
    %133 = arith.addf %131, %132 : vector<16x32xf32>
    %134 = math.tanh %133 : vector<16x32xf32>
    %135 = arith.mulf %130, %134 : vector<16x32xf32>
    %c0_44 = arith.constant 0 : index
    %c4 = arith.constant 4 : index
    %c0_45 = arith.constant 0 : index
    %c0_46 = arith.constant 0 : index
    %136 = vector.load %arg11[%c0_44, %c4, %c0_45, %c0_46] : memref<2x8x16x32xf32, #tpu.memory_space<vmem>>, vector<1x1x16x32xf32>
    %137 = vector.shape_cast %136 : vector<1x1x16x32xf32> to vector<16x32xf32>
    %138 = vector.shape_cast %135 : vector<16x32xf32> to vector<1x1x16x32xf32>
    tpu.vector_store %arg11[%c0_44, %c4, %c0_45, %c0_46], %138 {strides = array<i32>} : memref<2x8x16x32xf32, #tpu.memory_space<vmem>>, vector<1x1x16x32xf32>,
    %139 = vector.extract_strided_slice %3 {offsets = [5, 0, 0], sizes = [1, 16, 128], strides = [1, 1, 1]} : vector<8x16x128xf32> to vector<1x16x128xf32>
    %140 = vector.shape_cast %139 : vector<1x16x128xf32> to vector<16x128xf32>
    %cst_47 = arith.constant dense<0.000000e+00> : vector<16x128xf32>
    %141 = tpu.matmul %135, %5, %cst_47 {dimension_numbers = #tpu.dot_dimension_numbers<[1], [0], [0], [1], [0, 0, 1, 1], [], []>} : vector<16x32xf32>, vector<32x128xf32>, vector<16x128xf32> -> vector<16x128xf32>
    %142 = arith.addf %140, %141 : vector<16x128xf32>
    %143 = vector.broadcast %7 : vector<1x128xf32> to vector<16x128xf32>
    %144 = arith.addf %142, %143 : vector<16x128xf32>
    %145 = vector.extract_strided_slice %144 {offsets = [0, 0], sizes = [16, 96], strides = [1, 1]} : vector<16x128xf32> to vector<16x96xf32>
    %146 = arith.negf %145 : vector<16x96xf32>
    %147 = math.exp %146 : vector<16x96xf32>
    %cst_48 = arith.constant 1.000000e+00 : f32
    %148 = vector.broadcast %cst_48 : f32 to vector<16x96xf32>
    %149 = arith.addf %148, %147 : vector<16x96xf32>
    %150 = arith.divf %148, %149 : vector<16x96xf32>
    %151 = vector.extract_strided_slice %144 {offsets = [0, 96], sizes = [16, 32], strides = [1, 1]} : vector<16x128xf32> to vector<16x32xf32>
    %152 = math.tanh %151 : vector<16x32xf32>
    %153 = vector.extract_strided_slice %150 {offsets = [0, 0], sizes = [16, 32], strides = [1, 1]} : vector<16x96xf32> to vector<16x32xf32>
    %154 = vector.extract_strided_slice %150 {offsets = [0, 32], sizes = [16, 32], strides = [1, 1]} : vector<16x96xf32> to vector<16x32xf32>
    %155 = vector.extract_strided_slice %150 {offsets = [0, 64], sizes = [16, 32], strides = [1, 1]} : vector<16x96xf32> to vector<16x32xf32>
    %156 = arith.mulf %154, %133 : vector<16x32xf32>
    %157 = arith.mulf %153, %152 : vector<16x32xf32>
    %158 = arith.addf %156, %157 : vector<16x32xf32>
    %159 = math.tanh %158 : vector<16x32xf32>
    %160 = arith.mulf %155, %159 : vector<16x32xf32>
    %c0_49 = arith.constant 0 : index
    %c5 = arith.constant 5 : index
    %c0_50 = arith.constant 0 : index
    %c0_51 = arith.constant 0 : index
    %161 = vector.load %arg11[%c0_49, %c5, %c0_50, %c0_51] : memref<2x8x16x32xf32, #tpu.memory_space<vmem>>, vector<1x1x16x32xf32>
    %162 = vector.shape_cast %161 : vector<1x1x16x32xf32> to vector<16x32xf32>
    %163 = vector.shape_cast %160 : vector<16x32xf32> to vector<1x1x16x32xf32>
    tpu.vector_store %arg11[%c0_49, %c5, %c0_50, %c0_51], %163 {strides = array<i32>} : memref<2x8x16x32xf32, #tpu.memory_space<vmem>>, vector<1x1x16x32xf32>,
    %164 = vector.extract_strided_slice %3 {offsets = [6, 0, 0], sizes = [1, 16, 128], strides = [1, 1, 1]} : vector<8x16x128xf32> to vector<1x16x128xf32>
    %165 = vector.shape_cast %164 : vector<1x16x128xf32> to vector<16x128xf32>
    %cst_52 = arith.constant dense<0.000000e+00> : vector<16x128xf32>
    %166 = tpu.matmul %160, %5, %cst_52 {dimension_numbers = #tpu.dot_dimension_numbers<[1], [0], [0], [1], [0, 0, 1, 1], [], []>} : vector<16x32xf32>, vector<32x128xf32>, vector<16x128xf32> -> vector<16x128xf32>
    %167 = arith.addf %165, %166 : vector<16x128xf32>
    %168 = vector.broadcast %7 : vector<1x128xf32> to vector<16x128xf32>
    %169 = arith.addf %167, %168 : vector<16x128xf32>
    %170 = vector.extract_strided_slice %169 {offsets = [0, 0], sizes = [16, 96], strides = [1, 1]} : vector<16x128xf32> to vector<16x96xf32>
    %171 = arith.negf %170 : vector<16x96xf32>
    %172 = math.exp %171 : vector<16x96xf32>
    %cst_53 = arith.constant 1.000000e+00 : f32
    %173 = vector.broadcast %cst_53 : f32 to vector<16x96xf32>
    %174 = arith.addf %173, %172 : vector<16x96xf32>
    %175 = arith.divf %173, %174 : vector<16x96xf32>
    %176 = vector.extract_strided_slice %169 {offsets = [0, 96], sizes = [16, 32], strides = [1, 1]} : vector<16x128xf32> to vector<16x32xf32>
    %177 = math.tanh %176 : vector<16x32xf32>
    %178 = vector.extract_strided_slice %175 {offsets = [0, 0], sizes = [16, 32], strides = [1, 1]} : vector<16x96xf32> to vector<16x32xf32>
    %179 = vector.extract_strided_slice %175 {offsets = [0, 32], sizes = [16, 32], strides = [1, 1]} : vector<16x96xf32> to vector<16x32xf32>
    %180 = vector.extract_strided_slice %175 {offsets = [0, 64], sizes = [16, 32], strides = [1, 1]} : vector<16x96xf32> to vector<16x32xf32>
    %181 = arith.mulf %179, %158 : vector<16x32xf32>
    %182 = arith.mulf %178, %177 : vector<16x32xf32>
    %183 = arith.addf %181, %182 : vector<16x32xf32>
    %184 = math.tanh %183 : vector<16x32xf32>
    %185 = arith.mulf %180, %184 : vector<16x32xf32>
    %c0_54 = arith.constant 0 : index
    %c6 = arith.constant 6 : index
    %c0_55 = arith.constant 0 : index
    %c0_56 = arith.constant 0 : index
    %186 = vector.load %arg11[%c0_54, %c6, %c0_55, %c0_56] : memref<2x8x16x32xf32, #tpu.memory_space<vmem>>, vector<1x1x16x32xf32>
    %187 = vector.shape_cast %186 : vector<1x1x16x32xf32> to vector<16x32xf32>
    %188 = vector.shape_cast %185 : vector<16x32xf32> to vector<1x1x16x32xf32>
    tpu.vector_store %arg11[%c0_54, %c6, %c0_55, %c0_56], %188 {strides = array<i32>} : memref<2x8x16x32xf32, #tpu.memory_space<vmem>>, vector<1x1x16x32xf32>,
    %189 = vector.extract_strided_slice %3 {offsets = [7, 0, 0], sizes = [1, 16, 128], strides = [1, 1, 1]} : vector<8x16x128xf32> to vector<1x16x128xf32>
    %190 = vector.shape_cast %189 : vector<1x16x128xf32> to vector<16x128xf32>
    %cst_57 = arith.constant dense<0.000000e+00> : vector<16x128xf32>
    %191 = tpu.matmul %185, %5, %cst_57 {dimension_numbers = #tpu.dot_dimension_numbers<[1], [0], [0], [1], [0, 0, 1, 1], [], []>} : vector<16x32xf32>, vector<32x128xf32>, vector<16x128xf32> -> vector<16x128xf32>
    %192 = arith.addf %190, %191 : vector<16x128xf32>
    %193 = vector.broadcast %7 : vector<1x128xf32> to vector<16x128xf32>
    %194 = arith.addf %192, %193 : vector<16x128xf32>
    %195 = vector.extract_strided_slice %194 {offsets = [0, 0], sizes = [16, 96], strides = [1, 1]} : vector<16x128xf32> to vector<16x96xf32>
    %196 = arith.negf %195 : vector<16x96xf32>
    %197 = math.exp %196 : vector<16x96xf32>
    %cst_58 = arith.constant 1.000000e+00 : f32
    %198 = vector.broadcast %cst_58 : f32 to vector<16x96xf32>
    %199 = arith.addf %198, %197 : vector<16x96xf32>
    %200 = arith.divf %198, %199 : vector<16x96xf32>
    %201 = vector.extract_strided_slice %194 {offsets = [0, 96], sizes = [16, 32], strides = [1, 1]} : vector<16x128xf32> to vector<16x32xf32>
    %202 = math.tanh %201 : vector<16x32xf32>
    %203 = vector.extract_strided_slice %200 {offsets = [0, 0], sizes = [16, 32], strides = [1, 1]} : vector<16x96xf32> to vector<16x32xf32>
    %204 = vector.extract_strided_slice %200 {offsets = [0, 32], sizes = [16, 32], strides = [1, 1]} : vector<16x96xf32> to vector<16x32xf32>
    %205 = vector.extract_strided_slice %200 {offsets = [0, 64], sizes = [16, 32], strides = [1, 1]} : vector<16x96xf32> to vector<16x32xf32>
    %206 = arith.mulf %204, %183 : vector<16x32xf32>
    %207 = arith.mulf %203, %202 : vector<16x32xf32>
    %208 = arith.addf %206, %207 : vector<16x32xf32>
    %209 = math.tanh %208 : vector<16x32xf32>
    %210 = arith.mulf %205, %209 : vector<16x32xf32>
    %c0_59 = arith.constant 0 : index
    %c7 = arith.constant 7 : index
    %c0_60 = arith.constant 0 : index
    %c0_61 = arith.constant 0 : index
    %211 = vector.load %arg11[%c0_59, %c7, %c0_60, %c0_61] : memref<2x8x16x32xf32, #tpu.memory_space<vmem>>, vector<1x1x16x32xf32>
    %212 = vector.shape_cast %211 : vector<1x1x16x32xf32> to vector<16x32xf32>
    %213 = vector.shape_cast %210 : vector<16x32xf32> to vector<1x1x16x32xf32>
    tpu.vector_store %arg11[%c0_59, %c7, %c0_60, %c0_61], %213 {strides = array<i32>} : memref<2x8x16x32xf32, #tpu.memory_space<vmem>>, vector<1x1x16x32xf32>,
    %214 = vector.extract_strided_slice %4 {offsets = [7, 0, 0], sizes = [1, 16, 128], strides = [1, 1, 1]} : vector<8x16x128xf32> to vector<1x16x128xf32>
    %215 = vector.shape_cast %214 : vector<1x16x128xf32> to vector<16x128xf32>
    %cst_62 = arith.constant dense<0.000000e+00> : vector<16x128xf32>
    %216 = tpu.matmul %13, %6, %cst_62 {dimension_numbers = #tpu.dot_dimension_numbers<[1], [0], [0], [1], [0, 0, 1, 1], [], []>} : vector<16x32xf32>, vector<32x128xf32>, vector<16x128xf32> -> vector<16x128xf32>
    %217 = arith.addf %215, %216 : vector<16x128xf32>
    %218 = vector.broadcast %8 : vector<1x128xf32> to vector<16x128xf32>
    %219 = arith.addf %217, %218 : vector<16x128xf32>
    %220 = vector.extract_strided_slice %219 {offsets = [0, 0], sizes = [16, 96], strides = [1, 1]} : vector<16x128xf32> to vector<16x96xf32>
    %221 = arith.negf %220 : vector<16x96xf32>
    %222 = math.exp %221 : vector<16x96xf32>
    %cst_63 = arith.constant 1.000000e+00 : f32
    %223 = vector.broadcast %cst_63 : f32 to vector<16x96xf32>
    %224 = arith.addf %223, %222 : vector<16x96xf32>
    %225 = arith.divf %223, %224 : vector<16x96xf32>
    %226 = vector.extract_strided_slice %219 {offsets = [0, 96], sizes = [16, 32], strides = [1, 1]} : vector<16x128xf32> to vector<16x32xf32>
    %227 = math.tanh %226 : vector<16x32xf32>
    %228 = vector.extract_strided_slice %225 {offsets = [0, 0], sizes = [16, 32], strides = [1, 1]} : vector<16x96xf32> to vector<16x32xf32>
    %229 = vector.extract_strided_slice %225 {offsets = [0, 32], sizes = [16, 32], strides = [1, 1]} : vector<16x96xf32> to vector<16x32xf32>
    %230 = vector.extract_strided_slice %225 {offsets = [0, 64], sizes = [16, 32], strides = [1, 1]} : vector<16x96xf32> to vector<16x32xf32>
    %231 = arith.mulf %229, %13 : vector<16x32xf32>
    %232 = arith.mulf %228, %227 : vector<16x32xf32>
    %233 = arith.addf %231, %232 : vector<16x32xf32>
    %234 = math.tanh %233 : vector<16x32xf32>
    %235 = arith.mulf %230, %234 : vector<16x32xf32>
    %c1_64 = arith.constant 1 : index
    %c7_65 = arith.constant 7 : index
    %c0_66 = arith.constant 0 : index
    %c0_67 = arith.constant 0 : index
    %236 = vector.load %arg11[%c1_64, %c7_65, %c0_66, %c0_67] : memref<2x8x16x32xf32, #tpu.memory_space<vmem>>, vector<1x1x16x32xf32>
    %237 = vector.shape_cast %236 : vector<1x1x16x32xf32> to vector<16x32xf32>
    %238 = vector.shape_cast %235 : vector<16x32xf32> to vector<1x1x16x32xf32>
    tpu.vector_store %arg11[%c1_64, %c7_65, %c0_66, %c0_67], %238 {strides = array<i32>} : memref<2x8x16x32xf32, #tpu.memory_space<vmem>>, vector<1x1x16x32xf32>,
    %239 = vector.extract_strided_slice %4 {offsets = [6, 0, 0], sizes = [1, 16, 128], strides = [1, 1, 1]} : vector<8x16x128xf32> to vector<1x16x128xf32>
    %240 = vector.shape_cast %239 : vector<1x16x128xf32> to vector<16x128xf32>
    %cst_68 = arith.constant dense<0.000000e+00> : vector<16x128xf32>
    %241 = tpu.matmul %235, %6, %cst_68 {dimension_numbers = #tpu.dot_dimension_numbers<[1], [0], [0], [1], [0, 0, 1, 1], [], []>} : vector<16x32xf32>, vector<32x128xf32>, vector<16x128xf32> -> vector<16x128xf32>
    %242 = arith.addf %240, %241 : vector<16x128xf32>
    %243 = vector.broadcast %8 : vector<1x128xf32> to vector<16x128xf32>
    %244 = arith.addf %242, %243 : vector<16x128xf32>
    %245 = vector.extract_strided_slice %244 {offsets = [0, 0], sizes = [16, 96], strides = [1, 1]} : vector<16x128xf32> to vector<16x96xf32>
    %246 = arith.negf %245 : vector<16x96xf32>
    %247 = math.exp %246 : vector<16x96xf32>
    %cst_69 = arith.constant 1.000000e+00 : f32
    %248 = vector.broadcast %cst_69 : f32 to vector<16x96xf32>
    %249 = arith.addf %248, %247 : vector<16x96xf32>
    %250 = arith.divf %248, %249 : vector<16x96xf32>
    %251 = vector.extract_strided_slice %244 {offsets = [0, 96], sizes = [16, 32], strides = [1, 1]} : vector<16x128xf32> to vector<16x32xf32>
    %252 = math.tanh %251 : vector<16x32xf32>
    %253 = vector.extract_strided_slice %250 {offsets = [0, 0], sizes = [16, 32], strides = [1, 1]} : vector<16x96xf32> to vector<16x32xf32>
    %254 = vector.extract_strided_slice %250 {offsets = [0, 32], sizes = [16, 32], strides = [1, 1]} : vector<16x96xf32> to vector<16x32xf32>
    %255 = vector.extract_strided_slice %250 {offsets = [0, 64], sizes = [16, 32], strides = [1, 1]} : vector<16x96xf32> to vector<16x32xf32>
    %256 = arith.mulf %254, %233 : vector<16x32xf32>
    %257 = arith.mulf %253, %252 : vector<16x32xf32>
    %258 = arith.addf %256, %257 : vector<16x32xf32>
    %259 = math.tanh %258 : vector<16x32xf32>
    %260 = arith.mulf %255, %259 : vector<16x32xf32>
    %c1_70 = arith.constant 1 : index
    %c6_71 = arith.constant 6 : index
    %c0_72 = arith.constant 0 : index
    %c0_73 = arith.constant 0 : index
    %261 = vector.load %arg11[%c1_70, %c6_71, %c0_72, %c0_73] : memref<2x8x16x32xf32, #tpu.memory_space<vmem>>, vector<1x1x16x32xf32>
    %262 = vector.shape_cast %261 : vector<1x1x16x32xf32> to vector<16x32xf32>
    %263 = vector.shape_cast %260 : vector<16x32xf32> to vector<1x1x16x32xf32>
    tpu.vector_store %arg11[%c1_70, %c6_71, %c0_72, %c0_73], %263 {strides = array<i32>} : memref<2x8x16x32xf32, #tpu.memory_space<vmem>>, vector<1x1x16x32xf32>,
    %264 = vector.extract_strided_slice %4 {offsets = [5, 0, 0], sizes = [1, 16, 128], strides = [1, 1, 1]} : vector<8x16x128xf32> to vector<1x16x128xf32>
    %265 = vector.shape_cast %264 : vector<1x16x128xf32> to vector<16x128xf32>
    %cst_74 = arith.constant dense<0.000000e+00> : vector<16x128xf32>
    %266 = tpu.matmul %260, %6, %cst_74 {dimension_numbers = #tpu.dot_dimension_numbers<[1], [0], [0], [1], [0, 0, 1, 1], [], []>} : vector<16x32xf32>, vector<32x128xf32>, vector<16x128xf32> -> vector<16x128xf32>
    %267 = arith.addf %265, %266 : vector<16x128xf32>
    %268 = vector.broadcast %8 : vector<1x128xf32> to vector<16x128xf32>
    %269 = arith.addf %267, %268 : vector<16x128xf32>
    %270 = vector.extract_strided_slice %269 {offsets = [0, 0], sizes = [16, 96], strides = [1, 1]} : vector<16x128xf32> to vector<16x96xf32>
    %271 = arith.negf %270 : vector<16x96xf32>
    %272 = math.exp %271 : vector<16x96xf32>
    %cst_75 = arith.constant 1.000000e+00 : f32
    %273 = vector.broadcast %cst_75 : f32 to vector<16x96xf32>
    %274 = arith.addf %273, %272 : vector<16x96xf32>
    %275 = arith.divf %273, %274 : vector<16x96xf32>
    %276 = vector.extract_strided_slice %269 {offsets = [0, 96], sizes = [16, 32], strides = [1, 1]} : vector<16x128xf32> to vector<16x32xf32>
    %277 = math.tanh %276 : vector<16x32xf32>
    %278 = vector.extract_strided_slice %275 {offsets = [0, 0], sizes = [16, 32], strides = [1, 1]} : vector<16x96xf32> to vector<16x32xf32>
    %279 = vector.extract_strided_slice %275 {offsets = [0, 32], sizes = [16, 32], strides = [1, 1]} : vector<16x96xf32> to vector<16x32xf32>
    %280 = vector.extract_strided_slice %275 {offsets = [0, 64], sizes = [16, 32], strides = [1, 1]} : vector<16x96xf32> to vector<16x32xf32>
    %281 = arith.mulf %279, %258 : vector<16x32xf32>
    %282 = arith.mulf %278, %277 : vector<16x32xf32>
    %283 = arith.addf %281, %282 : vector<16x32xf32>
    %284 = math.tanh %283 : vector<16x32xf32>
    %285 = arith.mulf %280, %284 : vector<16x32xf32>
    %c1_76 = arith.constant 1 : index
    %c5_77 = arith.constant 5 : index
    %c0_78 = arith.constant 0 : index
    %c0_79 = arith.constant 0 : index
    %286 = vector.load %arg11[%c1_76, %c5_77, %c0_78, %c0_79] : memref<2x8x16x32xf32, #tpu.memory_space<vmem>>, vector<1x1x16x32xf32>
    %287 = vector.shape_cast %286 : vector<1x1x16x32xf32> to vector<16x32xf32>
    %288 = vector.shape_cast %285 : vector<16x32xf32> to vector<1x1x16x32xf32>
    tpu.vector_store %arg11[%c1_76, %c5_77, %c0_78, %c0_79], %288 {strides = array<i32>} : memref<2x8x16x32xf32, #tpu.memory_space<vmem>>, vector<1x1x16x32xf32>,
    %289 = vector.extract_strided_slice %4 {offsets = [4, 0, 0], sizes = [1, 16, 128], strides = [1, 1, 1]} : vector<8x16x128xf32> to vector<1x16x128xf32>
    %290 = vector.shape_cast %289 : vector<1x16x128xf32> to vector<16x128xf32>
    %cst_80 = arith.constant dense<0.000000e+00> : vector<16x128xf32>
    %291 = tpu.matmul %285, %6, %cst_80 {dimension_numbers = #tpu.dot_dimension_numbers<[1], [0], [0], [1], [0, 0, 1, 1], [], []>} : vector<16x32xf32>, vector<32x128xf32>, vector<16x128xf32> -> vector<16x128xf32>
    %292 = arith.addf %290, %291 : vector<16x128xf32>
    %293 = vector.broadcast %8 : vector<1x128xf32> to vector<16x128xf32>
    %294 = arith.addf %292, %293 : vector<16x128xf32>
    %295 = vector.extract_strided_slice %294 {offsets = [0, 0], sizes = [16, 96], strides = [1, 1]} : vector<16x128xf32> to vector<16x96xf32>
    %296 = arith.negf %295 : vector<16x96xf32>
    %297 = math.exp %296 : vector<16x96xf32>
    %cst_81 = arith.constant 1.000000e+00 : f32
    %298 = vector.broadcast %cst_81 : f32 to vector<16x96xf32>
    %299 = arith.addf %298, %297 : vector<16x96xf32>
    %300 = arith.divf %298, %299 : vector<16x96xf32>
    %301 = vector.extract_strided_slice %294 {offsets = [0, 96], sizes = [16, 32], strides = [1, 1]} : vector<16x128xf32> to vector<16x32xf32>
    %302 = math.tanh %301 : vector<16x32xf32>
    %303 = vector.extract_strided_slice %300 {offsets = [0, 0], sizes = [16, 32], strides = [1, 1]} : vector<16x96xf32> to vector<16x32xf32>
    %304 = vector.extract_strided_slice %300 {offsets = [0, 32], sizes = [16, 32], strides = [1, 1]} : vector<16x96xf32> to vector<16x32xf32>
    %305 = vector.extract_strided_slice %300 {offsets = [0, 64], sizes = [16, 32], strides = [1, 1]} : vector<16x96xf32> to vector<16x32xf32>
    %306 = arith.mulf %304, %283 : vector<16x32xf32>
    %307 = arith.mulf %303, %302 : vector<16x32xf32>
    %308 = arith.addf %306, %307 : vector<16x32xf32>
    %309 = math.tanh %308 : vector<16x32xf32>
    %310 = arith.mulf %305, %309 : vector<16x32xf32>
    %c1_82 = arith.constant 1 : index
    %c4_83 = arith.constant 4 : index
    %c0_84 = arith.constant 0 : index
    %c0_85 = arith.constant 0 : index
    %311 = vector.load %arg11[%c1_82, %c4_83, %c0_84, %c0_85] : memref<2x8x16x32xf32, #tpu.memory_space<vmem>>, vector<1x1x16x32xf32>
    %312 = vector.shape_cast %311 : vector<1x1x16x32xf32> to vector<16x32xf32>
    %313 = vector.shape_cast %310 : vector<16x32xf32> to vector<1x1x16x32xf32>
    tpu.vector_store %arg11[%c1_82, %c4_83, %c0_84, %c0_85], %313 {strides = array<i32>} : memref<2x8x16x32xf32, #tpu.memory_space<vmem>>, vector<1x1x16x32xf32>,
    %314 = vector.extract_strided_slice %4 {offsets = [3, 0, 0], sizes = [1, 16, 128], strides = [1, 1, 1]} : vector<8x16x128xf32> to vector<1x16x128xf32>
    %315 = vector.shape_cast %314 : vector<1x16x128xf32> to vector<16x128xf32>
    %cst_86 = arith.constant dense<0.000000e+00> : vector<16x128xf32>
    %316 = tpu.matmul %310, %6, %cst_86 {dimension_numbers = #tpu.dot_dimension_numbers<[1], [0], [0], [1], [0, 0, 1, 1], [], []>} : vector<16x32xf32>, vector<32x128xf32>, vector<16x128xf32> -> vector<16x128xf32>
    %317 = arith.addf %315, %316 : vector<16x128xf32>
    %318 = vector.broadcast %8 : vector<1x128xf32> to vector<16x128xf32>
    %319 = arith.addf %317, %318 : vector<16x128xf32>
    %320 = vector.extract_strided_slice %319 {offsets = [0, 0], sizes = [16, 96], strides = [1, 1]} : vector<16x128xf32> to vector<16x96xf32>
    %321 = arith.negf %320 : vector<16x96xf32>
    %322 = math.exp %321 : vector<16x96xf32>
    %cst_87 = arith.constant 1.000000e+00 : f32
    %323 = vector.broadcast %cst_87 : f32 to vector<16x96xf32>
    %324 = arith.addf %323, %322 : vector<16x96xf32>
    %325 = arith.divf %323, %324 : vector<16x96xf32>
    %326 = vector.extract_strided_slice %319 {offsets = [0, 96], sizes = [16, 32], strides = [1, 1]} : vector<16x128xf32> to vector<16x32xf32>
    %327 = math.tanh %326 : vector<16x32xf32>
    %328 = vector.extract_strided_slice %325 {offsets = [0, 0], sizes = [16, 32], strides = [1, 1]} : vector<16x96xf32> to vector<16x32xf32>
    %329 = vector.extract_strided_slice %325 {offsets = [0, 32], sizes = [16, 32], strides = [1, 1]} : vector<16x96xf32> to vector<16x32xf32>
    %330 = vector.extract_strided_slice %325 {offsets = [0, 64], sizes = [16, 32], strides = [1, 1]} : vector<16x96xf32> to vector<16x32xf32>
    %331 = arith.mulf %329, %308 : vector<16x32xf32>
    %332 = arith.mulf %328, %327 : vector<16x32xf32>
    %333 = arith.addf %331, %332 : vector<16x32xf32>
    %334 = math.tanh %333 : vector<16x32xf32>
    %335 = arith.mulf %330, %334 : vector<16x32xf32>
    %c1_88 = arith.constant 1 : index
    %c3_89 = arith.constant 3 : index
    %c0_90 = arith.constant 0 : index
    %c0_91 = arith.constant 0 : index
    %336 = vector.load %arg11[%c1_88, %c3_89, %c0_90, %c0_91] : memref<2x8x16x32xf32, #tpu.memory_space<vmem>>, vector<1x1x16x32xf32>
    %337 = vector.shape_cast %336 : vector<1x1x16x32xf32> to vector<16x32xf32>
    %338 = vector.shape_cast %335 : vector<16x32xf32> to vector<1x1x16x32xf32>
    tpu.vector_store %arg11[%c1_88, %c3_89, %c0_90, %c0_91], %338 {strides = array<i32>} : memref<2x8x16x32xf32, #tpu.memory_space<vmem>>, vector<1x1x16x32xf32>,
    %339 = vector.extract_strided_slice %4 {offsets = [2, 0, 0], sizes = [1, 16, 128], strides = [1, 1, 1]} : vector<8x16x128xf32> to vector<1x16x128xf32>
    %340 = vector.shape_cast %339 : vector<1x16x128xf32> to vector<16x128xf32>
    %cst_92 = arith.constant dense<0.000000e+00> : vector<16x128xf32>
    %341 = tpu.matmul %335, %6, %cst_92 {dimension_numbers = #tpu.dot_dimension_numbers<[1], [0], [0], [1], [0, 0, 1, 1], [], []>} : vector<16x32xf32>, vector<32x128xf32>, vector<16x128xf32> -> vector<16x128xf32>
    %342 = arith.addf %340, %341 : vector<16x128xf32>
    %343 = vector.broadcast %8 : vector<1x128xf32> to vector<16x128xf32>
    %344 = arith.addf %342, %343 : vector<16x128xf32>
    %345 = vector.extract_strided_slice %344 {offsets = [0, 0], sizes = [16, 96], strides = [1, 1]} : vector<16x128xf32> to vector<16x96xf32>
    %346 = arith.negf %345 : vector<16x96xf32>
    %347 = math.exp %346 : vector<16x96xf32>
    %cst_93 = arith.constant 1.000000e+00 : f32
    %348 = vector.broadcast %cst_93 : f32 to vector<16x96xf32>
    %349 = arith.addf %348, %347 : vector<16x96xf32>
    %350 = arith.divf %348, %349 : vector<16x96xf32>
    %351 = vector.extract_strided_slice %344 {offsets = [0, 96], sizes = [16, 32], strides = [1, 1]} : vector<16x128xf32> to vector<16x32xf32>
    %352 = math.tanh %351 : vector<16x32xf32>
    %353 = vector.extract_strided_slice %350 {offsets = [0, 0], sizes = [16, 32], strides = [1, 1]} : vector<16x96xf32> to vector<16x32xf32>
    %354 = vector.extract_strided_slice %350 {offsets = [0, 32], sizes = [16, 32], strides = [1, 1]} : vector<16x96xf32> to vector<16x32xf32>
    %355 = vector.extract_strided_slice %350 {offsets = [0, 64], sizes = [16, 32], strides = [1, 1]} : vector<16x96xf32> to vector<16x32xf32>
    %356 = arith.mulf %354, %333 : vector<16x32xf32>
    %357 = arith.mulf %353, %352 : vector<16x32xf32>
    %358 = arith.addf %356, %357 : vector<16x32xf32>
    %359 = math.tanh %358 : vector<16x32xf32>
    %360 = arith.mulf %355, %359 : vector<16x32xf32>
    %c1_94 = arith.constant 1 : index
    %c2_95 = arith.constant 2 : index
    %c0_96 = arith.constant 0 : index
    %c0_97 = arith.constant 0 : index
    %361 = vector.load %arg11[%c1_94, %c2_95, %c0_96, %c0_97] : memref<2x8x16x32xf32, #tpu.memory_space<vmem>>, vector<1x1x16x32xf32>
    %362 = vector.shape_cast %361 : vector<1x1x16x32xf32> to vector<16x32xf32>
    %363 = vector.shape_cast %360 : vector<16x32xf32> to vector<1x1x16x32xf32>
    tpu.vector_store %arg11[%c1_94, %c2_95, %c0_96, %c0_97], %363 {strides = array<i32>} : memref<2x8x16x32xf32, #tpu.memory_space<vmem>>, vector<1x1x16x32xf32>,
    %364 = vector.extract_strided_slice %4 {offsets = [1, 0, 0], sizes = [1, 16, 128], strides = [1, 1, 1]} : vector<8x16x128xf32> to vector<1x16x128xf32>
    %365 = vector.shape_cast %364 : vector<1x16x128xf32> to vector<16x128xf32>
    %cst_98 = arith.constant dense<0.000000e+00> : vector<16x128xf32>
    %366 = tpu.matmul %360, %6, %cst_98 {dimension_numbers = #tpu.dot_dimension_numbers<[1], [0], [0], [1], [0, 0, 1, 1], [], []>} : vector<16x32xf32>, vector<32x128xf32>, vector<16x128xf32> -> vector<16x128xf32>
    %367 = arith.addf %365, %366 : vector<16x128xf32>
    %368 = vector.broadcast %8 : vector<1x128xf32> to vector<16x128xf32>
    %369 = arith.addf %367, %368 : vector<16x128xf32>
    %370 = vector.extract_strided_slice %369 {offsets = [0, 0], sizes = [16, 96], strides = [1, 1]} : vector<16x128xf32> to vector<16x96xf32>
    %371 = arith.negf %370 : vector<16x96xf32>
    %372 = math.exp %371 : vector<16x96xf32>
    %cst_99 = arith.constant 1.000000e+00 : f32
    %373 = vector.broadcast %cst_99 : f32 to vector<16x96xf32>
    %374 = arith.addf %373, %372 : vector<16x96xf32>
    %375 = arith.divf %373, %374 : vector<16x96xf32>
    %376 = vector.extract_strided_slice %369 {offsets = [0, 96], sizes = [16, 32], strides = [1, 1]} : vector<16x128xf32> to vector<16x32xf32>
    %377 = math.tanh %376 : vector<16x32xf32>
    %378 = vector.extract_strided_slice %375 {offsets = [0, 0], sizes = [16, 32], strides = [1, 1]} : vector<16x96xf32> to vector<16x32xf32>
    %379 = vector.extract_strided_slice %375 {offsets = [0, 32], sizes = [16, 32], strides = [1, 1]} : vector<16x96xf32> to vector<16x32xf32>
    %380 = vector.extract_strided_slice %375 {offsets = [0, 64], sizes = [16, 32], strides = [1, 1]} : vector<16x96xf32> to vector<16x32xf32>
    %381 = arith.mulf %379, %358 : vector<16x32xf32>
    %382 = arith.mulf %378, %377 : vector<16x32xf32>
    %383 = arith.addf %381, %382 : vector<16x32xf32>
    %384 = math.tanh %383 : vector<16x32xf32>
    %385 = arith.mulf %380, %384 : vector<16x32xf32>
    %c1_100 = arith.constant 1 : index
    %c1_101 = arith.constant 1 : index
    %c0_102 = arith.constant 0 : index
    %c0_103 = arith.constant 0 : index
    %386 = vector.load %arg11[%c1_100, %c1_101, %c0_102, %c0_103] : memref<2x8x16x32xf32, #tpu.memory_space<vmem>>, vector<1x1x16x32xf32>
    %387 = vector.shape_cast %386 : vector<1x1x16x32xf32> to vector<16x32xf32>
    %388 = vector.shape_cast %385 : vector<16x32xf32> to vector<1x1x16x32xf32>
    tpu.vector_store %arg11[%c1_100, %c1_101, %c0_102, %c0_103], %388 {strides = array<i32>} : memref<2x8x16x32xf32, #tpu.memory_space<vmem>>, vector<1x1x16x32xf32>,
    %389 = vector.extract_strided_slice %4 {offsets = [0, 0, 0], sizes = [1, 16, 128], strides = [1, 1, 1]} : vector<8x16x128xf32> to vector<1x16x128xf32>
    %390 = vector.shape_cast %389 : vector<1x16x128xf32> to vector<16x128xf32>
    %cst_104 = arith.constant dense<0.000000e+00> : vector<16x128xf32>
    %391 = tpu.matmul %385, %6, %cst_104 {dimension_numbers = #tpu.dot_dimension_numbers<[1], [0], [0], [1], [0, 0, 1, 1], [], []>} : vector<16x32xf32>, vector<32x128xf32>, vector<16x128xf32> -> vector<16x128xf32>
    %392 = arith.addf %390, %391 : vector<16x128xf32>
    %393 = vector.broadcast %8 : vector<1x128xf32> to vector<16x128xf32>
    %394 = arith.addf %392, %393 : vector<16x128xf32>
    %395 = vector.extract_strided_slice %394 {offsets = [0, 0], sizes = [16, 96], strides = [1, 1]} : vector<16x128xf32> to vector<16x96xf32>
    %396 = arith.negf %395 : vector<16x96xf32>
    %397 = math.exp %396 : vector<16x96xf32>
    %cst_105 = arith.constant 1.000000e+00 : f32
    %398 = vector.broadcast %cst_105 : f32 to vector<16x96xf32>
    %399 = arith.addf %398, %397 : vector<16x96xf32>
    %400 = arith.divf %398, %399 : vector<16x96xf32>
    %401 = vector.extract_strided_slice %394 {offsets = [0, 96], sizes = [16, 32], strides = [1, 1]} : vector<16x128xf32> to vector<16x32xf32>
    %402 = math.tanh %401 : vector<16x32xf32>
    %403 = vector.extract_strided_slice %400 {offsets = [0, 0], sizes = [16, 32], strides = [1, 1]} : vector<16x96xf32> to vector<16x32xf32>
    %404 = vector.extract_strided_slice %400 {offsets = [0, 32], sizes = [16, 32], strides = [1, 1]} : vector<16x96xf32> to vector<16x32xf32>
    %405 = vector.extract_strided_slice %400 {offsets = [0, 64], sizes = [16, 32], strides = [1, 1]} : vector<16x96xf32> to vector<16x32xf32>
    %406 = arith.mulf %404, %383 : vector<16x32xf32>
    %407 = arith.mulf %403, %402 : vector<16x32xf32>
    %408 = arith.addf %406, %407 : vector<16x32xf32>
    %409 = math.tanh %408 : vector<16x32xf32>
    %410 = arith.mulf %405, %409 : vector<16x32xf32>
    %c1_106 = arith.constant 1 : index
    %c0_107 = arith.constant 0 : index
    %c0_108 = arith.constant 0 : index
    %c0_109 = arith.constant 0 : index
    %411 = vector.load %arg11[%c1_106, %c0_107, %c0_108, %c0_109] : memref<2x8x16x32xf32, #tpu.memory_space<vmem>>, vector<1x1x16x32xf32>
    %412 = vector.shape_cast %411 : vector<1x1x16x32xf32> to vector<16x32xf32>
    %413 = vector.shape_cast %410 : vector<16x32xf32> to vector<1x1x16x32xf32>
    tpu.vector_store %arg11[%c1_106, %c0_107, %c0_108, %c0_109], %413 {strides = array<i32>} : memref<2x8x16x32xf32, #tpu.memory_space<vmem>>, vector<1x1x16x32xf32>,
    %c0_110 = arith.constant 0 : index
    %c0_111 = arith.constant 0 : index
    %c0_112 = arith.constant 0 : index
    %c0_113 = arith.constant 0 : index
    %414 = vector.load %arg11[%c0_110, %c0_111, %c0_112, %c0_113] : memref<2x8x16x32xf32, #tpu.memory_space<vmem>>, vector<1x8x16x32xf32>
    %415 = vector.shape_cast %414 : vector<1x8x16x32xf32> to vector<8x16x32xf32>
    %416 = vector.extract_strided_slice %9 {offsets = [0, 0], sizes = [32, 16], strides = [1, 1]} : vector<64x16xf32> to vector<32x16xf32>
    %cst_114 = arith.constant dense<0.000000e+00> : vector<8x16x16xf32>
    %417 = tpu.matmul %415, %416, %cst_114 {dimension_numbers = #tpu.dot_dimension_numbers<[2], [0], [0, 1], [1], [0, 0, 0, 1, 1, 1], [], []>} : vector<8x16x32xf32>, vector<32x16xf32>, vector<8x16x16xf32> -> vector<8x16x16xf32>
    %c1_115 = arith.constant 1 : index
    %c0_116 = arith.constant 0 : index
    %c0_117 = arith.constant 0 : index
    %c0_118 = arith.constant 0 : index
    %418 = vector.load %arg11[%c1_115, %c0_116, %c0_117, %c0_118] : memref<2x8x16x32xf32, #tpu.memory_space<vmem>>, vector<1x8x16x32xf32>
    %419 = vector.shape_cast %418 : vector<1x8x16x32xf32> to vector<8x16x32xf32>
    %420 = vector.extract_strided_slice %9 {offsets = [32, 0], sizes = [32, 16], strides = [1, 1]} : vector<64x16xf32> to vector<32x16xf32>
    %cst_119 = arith.constant dense<0.000000e+00> : vector<8x16x16xf32>
    %421 = tpu.matmul %419, %420, %cst_119 {dimension_numbers = #tpu.dot_dimension_numbers<[2], [0], [0, 1], [1], [0, 0, 0, 1, 1, 1], [], []>} : vector<8x16x32xf32>, vector<32x16xf32>, vector<8x16x16xf32> -> vector<8x16x16xf32>
    %422 = arith.addf %417, %421 : vector<8x16x16xf32>
    %423 = vector.shape_cast %10 : vector<1x16xf32> to vector<1x1x16xf32>
    %424 = vector.broadcast %423 : vector<1x1x16xf32> to vector<8x16x16xf32>
    %425 = arith.addf %422, %424 : vector<8x16x16xf32>
    %426 = vector.extract_strided_slice %425 {offsets = [0, 0, 0], sizes = [8, 8, 16], strides = [1, 1, 1]} : vector<8x16x16xf32> to vector<8x8x16xf32>
    %427 = vector.shape_cast %426 : vector<8x8x16xf32> to vector<1x8x8x16xf32>
    %cst_120 = arith.constant dense<0.000000e+00> : vector<1xf32>
    %428 = vector.multi_reduction <add>, %427, %cst_120 [1, 2, 3] : vector<1x8x8x16xf32> to vector<1xf32>
    %429 = vector.shape_cast %428 : vector<1xf32> to vector<1x1x1x1xf32>
    %430 = vector.extract %429[0, 0, 0, 0] : f32 from vector<1x1x1x1xf32>
    %cst_121 = arith.constant 1.024000e+03 : f32
    %431 = arith.divf %430, %cst_121 : f32
    %432 = vector.broadcast %431 : f32 to vector<8x8x16xf32>
    %433 = arith.subf %426, %432 : vector<8x8x16xf32>
    %434 = arith.mulf %433, %433 : vector<8x8x16xf32>
    %435 = vector.shape_cast %434 : vector<8x8x16xf32> to vector<1x8x8x16xf32>
    %cst_122 = arith.constant dense<0.000000e+00> : vector<1xf32>
    %436 = vector.multi_reduction <add>, %435, %cst_122 [1, 2, 3] : vector<1x8x8x16xf32> to vector<1xf32>
    %437 = vector.shape_cast %436 : vector<1xf32> to vector<1x1x1x1xf32>
    %438 = vector.extract %437[0, 0, 0, 0] : f32 from vector<1x1x1x1xf32>
    %cst_123 = arith.constant 1.024000e+03 : f32
    %439 = arith.divf %438, %cst_123 : f32
    %440 = vector.broadcast %431 : f32 to vector<8x8x16xf32>
    %441 = arith.subf %426, %440 : vector<8x8x16xf32>
    %cst_124 = arith.constant 9.99999993E-9 : f32
    %442 = arith.addf %439, %cst_124 : f32
    %443 = math.rsqrt %442 : f32
    %444 = vector.broadcast %443 : f32 to vector<8x8x16xf32>
    %445 = arith.mulf %441, %444 : vector<8x8x16xf32>
    %446 = vector.extract_strided_slice %0 {offsets = [0, 0, 0], sizes = [8, 8, 16], strides = [1, 1, 1]} : vector<8x16x16xf32> to vector<8x8x16xf32>
    %447 = vector.shape_cast %11 : vector<1x16xf32> to vector<1x1x16xf32>
    %448 = vector.broadcast %447 : vector<1x1x16xf32> to vector<8x8x16xf32>
    %449 = arith.mulf %445, %448 : vector<8x8x16xf32>
    %450 = arith.addf %446, %449 : vector<8x8x16xf32>
    %451 = vector.shape_cast %12 : vector<1x16xf32> to vector<1x1x16xf32>
    %452 = vector.broadcast %451 : vector<1x1x16xf32> to vector<8x8x16xf32>
    %453 = arith.addf %450, %452 : vector<8x8x16xf32>
    %c0_125 = arith.constant 0 : index
    %c0_126 = arith.constant 0 : index
    %c0_127 = arith.constant 0 : index
    %454 = vector.load %arg10[%c0_125, %c0_126, %c0_127] : memref<8x16x16xf32, #tpu.memory_space<vmem>>, vector<8x8x16xf32>
    tpu.vector_store %arg10[%c0_125, %c0_126, %c0_127], %453 {strides = array<i32>} : memref<8x16x16xf32, #tpu.memory_space<vmem>>, vector<8x8x16xf32>,
    %455 = vector.extract_strided_slice %425 {offsets = [0, 8, 0], sizes = [8, 8, 16], strides = [1, 1, 1]} : vector<8x16x16xf32> to vector<8x8x16xf32>
    %456 = vector.shape_cast %455 : vector<8x8x16xf32> to vector<1x8x8x16xf32>
    %cst_128 = arith.constant dense<0.000000e+00> : vector<1xf32>
    %457 = vector.multi_reduction <add>, %456, %cst_128 [1, 2, 3] : vector<1x8x8x16xf32> to vector<1xf32>
    %458 = vector.shape_cast %457 : vector<1xf32> to vector<1x1x1x1xf32>
    %459 = vector.extract %458[0, 0, 0, 0] : f32 from vector<1x1x1x1xf32>
    %cst_129 = arith.constant 1.024000e+03 : f32
    %460 = arith.divf %459, %cst_129 : f32
    %461 = vector.broadcast %460 : f32 to vector<8x8x16xf32>
    %462 = arith.subf %455, %461 : vector<8x8x16xf32>
    %463 = arith.mulf %462, %462 : vector<8x8x16xf32>
    %464 = vector.shape_cast %463 : vector<8x8x16xf32> to vector<1x8x8x16xf32>
    %cst_130 = arith.constant dense<0.000000e+00> : vector<1xf32>
    %465 = vector.multi_reduction <add>, %464, %cst_130 [1, 2, 3] : vector<1x8x8x16xf32> to vector<1xf32>
    %466 = vector.shape_cast %465 : vector<1xf32> to vector<1x1x1x1xf32>
    %467 = vector.extract %466[0, 0, 0, 0] : f32 from vector<1x1x1x1xf32>
    %cst_131 = arith.constant 1.024000e+03 : f32
    %468 = arith.divf %467, %cst_131 : f32
    %469 = vector.broadcast %460 : f32 to vector<8x8x16xf32>
    %470 = arith.subf %455, %469 : vector<8x8x16xf32>
    %cst_132 = arith.constant 9.99999993E-9 : f32
    %471 = arith.addf %468, %cst_132 : f32
    %472 = math.rsqrt %471 : f32
    %473 = vector.broadcast %472 : f32 to vector<8x8x16xf32>
    %474 = arith.mulf %470, %473 : vector<8x8x16xf32>
    %475 = vector.extract_strided_slice %0 {offsets = [0, 8, 0], sizes = [8, 8, 16], strides = [1, 1, 1]} : vector<8x16x16xf32> to vector<8x8x16xf32>
    %476 = vector.shape_cast %11 : vector<1x16xf32> to vector<1x1x16xf32>
    %477 = vector.broadcast %476 : vector<1x1x16xf32> to vector<8x8x16xf32>
    %478 = arith.mulf %474, %477 : vector<8x8x16xf32>
    %479 = arith.addf %475, %478 : vector<8x8x16xf32>
    %480 = vector.shape_cast %12 : vector<1x16xf32> to vector<1x1x16xf32>
    %481 = vector.broadcast %480 : vector<1x1x16xf32> to vector<8x8x16xf32>
    %482 = arith.addf %479, %481 : vector<8x8x16xf32>
    %c0_133 = arith.constant 0 : index
    %c8 = arith.constant 8 : index
    %c0_134 = arith.constant 0 : index
    %483 = vector.load %arg10[%c0_133, %c8, %c0_134] : memref<8x16x16xf32, #tpu.memory_space<vmem>>, vector<8x8x16xf32>
    tpu.vector_store %arg10[%c0_133, %c8, %c0_134], %482 {strides = array<i32>} : memref<8x16x16xf32, #tpu.memory_space<vmem>>, vector<8x8x16xf32>,
    return
  }
}

module attributes {stable_mosaic.version = 11 : i64} {
  func.func @_prelu_conv_kernel(%arg0: memref<16x128xf32, #tpu.memory_space<vmem>>, %arg1: memref<1x1xf32, #tpu.memory_space<vmem>>, %arg2: memref<8x16xf32, #tpu.memory_space<vmem>>, %arg3: memref<8x1xf32, #tpu.memory_space<vmem>>, %arg4: memref<8x128xf32, #tpu.memory_space<vmem>>) attributes {dimension_semantics = [], scalar_prefetch = 0 : i64, scratch_operands = 0 : i64, tpu.core_type = #tpu.core_type<tc>} {
    %c0 = arith.constant 0 : index
    %c0_0 = arith.constant 0 : index
    %0 = vector.load %arg0[%c0, %c0_0] : memref<16x128xf32, #tpu.memory_space<vmem>>, vector<16x128xf32>
    %c0_1 = arith.constant 0 : index
    %c0_2 = arith.constant 0 : index
    %1 = vector.load %arg1[%c0_1, %c0_2] : memref<1x1xf32, #tpu.memory_space<vmem>>, vector<1x1xf32>
    %cst = arith.constant 0.000000e+00 : f32
    %2 = vector.broadcast %cst : f32 to vector<16x128xf32>
    %3 = arith.maximumf %0, %2 : vector<16x128xf32>
    %cst_3 = arith.constant 0.000000e+00 : f32
    %4 = vector.broadcast %cst_3 : f32 to vector<16x128xf32>
    %5 = arith.minimumf %0, %4 : vector<16x128xf32>
    %6 = vector.broadcast %1 : vector<1x1xf32> to vector<16x128xf32>
    %7 = arith.mulf %6, %5 : vector<16x128xf32>
    %8 = arith.addf %3, %7 : vector<16x128xf32>
    %c0_4 = arith.constant 0 : index
    %c0_5 = arith.constant 0 : index
    %9 = vector.load %arg2[%c0_4, %c0_5] : memref<8x16xf32, #tpu.memory_space<vmem>>, vector<8x16xf32>
    %cst_6 = arith.constant dense<0.000000e+00> : vector<8x128xf32>
    %10 = tpu.matmul %9, %8, %cst_6 {dimension_numbers = #tpu.dot_dimension_numbers<[1], [0], [0], [1], [0, 0, 1, 1], [], []>} : vector<8x16xf32>, vector<16x128xf32>, vector<8x128xf32> -> vector<8x128xf32>
    %c0_7 = arith.constant 0 : index
    %c0_8 = arith.constant 0 : index
    %11 = vector.load %arg3[%c0_7, %c0_8] : memref<8x1xf32, #tpu.memory_space<vmem>>, vector<8x1xf32>
    %12 = vector.broadcast %11 : vector<8x1xf32> to vector<8x128xf32>
    %13 = arith.addf %10, %12 : vector<8x128xf32>
    %c0_9 = arith.constant 0 : index
    %c0_10 = arith.constant 0 : index
    %14 = vector.load %arg4[%c0_9, %c0_10] : memref<8x128xf32, #tpu.memory_space<vmem>>, vector<8x128xf32>
    tpu.vector_store %arg4[%c0_9, %c0_10], %13 {strides = array<i32>} : memref<8x128xf32, #tpu.memory_space<vmem>>, vector<8x128xf32>,
    return
  }
}

</mosaic_0001>

<llo_original>
// kernel: dprnn_forward.9
$region0: #{dprnn_forward.9}
  #allocation0 [shape = 'u32[]', space=smem, size = 0x4, offset = 0x4, fixed_abs, tag = 'smem constant byte address 0x4 - core index']
  #allocation1 [shape = 'u32[144,128]{1,0:T(1,128)}', space=vmem, size = 0x12000, scoped, tag = 'internal scratch']
  #allocation2 [shape = 'f32[1,1]{1,0:T(1,128)S(1)}', space=vmem, size = 0x200, scoped, tag = 'scoped memory for dprnn_forward.9']
  %s0 = inlined_call_operand.vmem [shape: f32[16,128], index: 0, kind: input, shape index: {}]
  %s1 = inlined_call_operand.<no memory space> [shape: f32[1,1], index: 1, kind: input, shape index: {}]
  %s2 = inlined_call_operand.vmem [shape: f32[8,16], index: 2, kind: input, shape index: {}]
  %s3 = inlined_call_operand.vmem [shape: f32[8,1], index: 3, kind: input, shape index: {}]
  %s4 = inlined_call_operand.vmem [shape: f32[8,128], index: 4, kind: output, shape index: {}]
  %s5 = sld [smem:[#allocation0]]
  $region26: #{dprnn_forward.9} parent=0
    _
  %s7 = ssub.s32 1, %s5
  %s8 = scalar_select 0, %s7, %s5
  %v9 = vstv %s1
  %10 = vst [vmem:[#allocation2] sm:$0x1] %v9
  // Predicated region
  $region2: #{dprnn_forward.9} parent=0 // pred_check
    _
  $region3: #{dprnn_forward.9} parent=0 // pred_check_branch
    %12 = sbr.rel (0) target = $region5
  $region4: #{dprnn_forward.9} parent=0 // pred_region
    _
  $region5: #{dprnn_forward.9} parent=0 // pred_fallthru
    _
  // Predicated region
  $region6: #{dprnn_forward.9} parent=0 // pred_check
    _
  $region7: #{dprnn_forward.9} parent=0 // pred_check_branch
    %14 = sbr.rel (0) target = $region9
  $region8: #{dprnn_forward.9} parent=0 // pred_region
    _
  $region9: #{dprnn_forward.9} parent=0 // pred_fallthru
    _
  // Predicated region
  $region10: #{dprnn_forward.9} parent=0 // pred_check
    _
  $region11: #{dprnn_forward.9} parent=0 // pred_check_branch
    %16 = sbr.rel (0) target = $region13
  $region12: #{dprnn_forward.9} parent=0 // pred_region
    _
  $region13: #{dprnn_forward.9} parent=0 // pred_fallthru
    _
  // Predicated region
  $region14: #{dprnn_forward.9} parent=0 // pred_check
    _
  $region15: #{dprnn_forward.9} parent=0 // pred_check_branch
    %18 = sbr.rel (0) target = $region17
  $region16: #{dprnn_forward.9} parent=0 // pred_region
    _
  $region17: #{dprnn_forward.9} parent=0 // pred_fallthru
    _
  %v19 = vld [vmem:[%s0] sm:$0xff]
  %v20 = vld [vmem:[%s0 + $0x8] sm:$0xff]
  %v21 = vld [vmem:[#allocation2] sm:$0x1]
  %v22 = vmax.f32 %v19, 0.0
  %v23 = vmax.f32 %v20, 0.0
  %v24 = vmin.f32 %v19, 0.0
  %v25 = vmin.f32 %v20, 0.0
  %v27 = vlaneseq
  %v28 = vshrl.u32 %v27, 7
  %v29 = vsub.s32 0, %v28
  %v30 = vrot.slane %v21, %v29
  %31 = vset.pattern.permute.xlu0 0
  %32 = vperm.xlu0 %31, %v30
  %v33 = vpop.permute.xlu0 %32
  %v35 = vmul.f32 %v33, %v24
  %v36 = vmul.f32 %v33, %v25
  %v37 = vadd.f32 %v22, %v35
  %v38 = vadd.f32 %v23, %v36
  %v39 = vld [vmem:[%s2] sm:$0xff]
  %v40 = vld [vmem:[%s3] sm:$0xff]
  %42 = vset.pattern.permute.xlu0 0
  %43 = vperm.xlu0 %42, %v40
  %v44 = vpop.permute.xlu0 %43
  %vm46 = vcmask 130048
  %v48 = vsel %vm46, %v39, 0
  %50 = vmatprep.subr.mxu0 0.0
  %51 = vmatpush1.msra.mxu0 0.0
  %52 = vmatprep.subr.mxu0 0.0
  %53 = vmatpush1.msra.mxu0 0.0
  %54 = vmatprep.subr.mxu0 0.0
  %55 = vmatpush1.msra.mxu0 0.0
  %56 = vmatprep.subr.mxu0 0.0
  %57 = vmatpush1.msra.mxu0 0.0
  %58 = vmatprep.subr.mxu0 0.0
  %59 = vmatpush1.msra.mxu0 0.0
  %60 = vmatprep.subr.mxu0 0.0
  %61 = vmatpush1.msra.mxu0 0.0
  %62 = vmatprep.subr.mxu0 0.0
  %63 = vmatpush1.msra.mxu0 0.0
  %64 = vmatprep.subr.mxu0 0.0
  %65 = vmatpush1.msra.mxu0 0.0
  %66 = vmatprep.subr.mxu0 0.0
  %67 = vmatpush1.msra.mxu0 0.0
  %68 = vmatprep.subr.mxu0 0.0
  %69 = vmatpush1.msra.mxu0 0.0
  %70 = vmatprep.subr.mxu0 0.0
  %71 = vmatpush1.msra.mxu0 0.0
  %72 = vmatprep.subr.mxu0 0.0
  %73 = vmatpush1.msra.mxu0 0.0
  %74 = vmatprep.subr.mxu0 0.0
  %75 = vmatpush1.msra.mxu0 0.0
  %76 = vmatprep.subr.mxu0 0.0
  %77 = vmatpush1.msra.mxu0 0.0
  %78 = vmatprep.subr.mxu0 0.0
  %79 = vmatpush1.msra.mxu0 %v38
  %80 = vmatprep.subr.mxu0 0.0
  %81 = vmatpush1.msra.mxu0 %v37
  %82 = vmatprep.subr.mxu0 0.0
  %83 = vmatpush2.msra.mxu0 0.0
  %84 = vmatprep.subr.mxu0 0.0
  %85 = vmatpush2.msra.mxu0 0.0
  %86 = vmatprep.subr.mxu0 0.0
  %87 = vmatpush2.msra.mxu0 0.0
  %88 = vmatprep.subr.mxu0 0.0
  %89 = vmatpush2.msra.mxu0 0.0
  %90 = vmatprep.subr.mxu0 0.0
  %91 = vmatpush2.msra.mxu0 0.0
  %92 = vmatprep.subr.mxu0 0.0
  %93 = vmatpush2.msra.mxu0 0.0
  %94 = vmatprep.subr.mxu0 0.0
  %95 = vmatpush2.msra.mxu0 0.0
  %96 = vmatprep.subr.mxu0 0.0
  %97 = vmatpush2.msra.mxu0 0.0
  %98 = vmatprep.subr.mxu0 0.0
  %99 = vmatpush2.msra.mxu0 0.0
  %100 = vmatprep.subr.mxu0 0.0
  %101 = vmatpush2.msra.mxu0 0.0
  %102 = vmatprep.subr.mxu0 0.0
  %103 = vmatpush2.msra.mxu0 0.0
  %104 = vmatprep.subr.mxu0 0.0
  %105 = vmatpush2.msra.mxu0 0.0
  %106 = vmatprep.subr.mxu0 0.0
  %107 = vmatpush2.msra.mxu0 0.0
  %108 = vmatprep.subr.mxu0 0.0
  %109 = vmatpush2.msra.mxu0 0.0
  %110 = vmatprep.subr.mxu0 0.0
  %111 = vmatpush2.msra.mxu0 0.0
  %112 = vmatprep.subr.mxu0 0.0
  %113 = vmatpush2.msra.mxu0 0.0
  %114 = vmatprep.mubr.f32.mxu0 0.0
  %115 = vmatmul.mubr.f32.gmra.mxu0 %v48
  %v116 = vpop.f32.mrf.mxu0
  %v117 = vadd.f32 %v44, %v116
  %v118 = vpop.f32.mrf.mxu0
  %119 = vdwg.mxu0
  %120 = vst [vmem:[%s4] sm:$0xff] %v117
  // Predicated region
  $region18: #{dprnn_forward.9} parent=0 // pred_check
    _
  $region19: #{dprnn_forward.9} parent=0 // pred_check_branch
    %122 = sbr.rel (0) target = $region21
  $region20: #{dprnn_forward.9} parent=0 // pred_region
    _
  $region21: #{dprnn_forward.9} parent=0 // pred_fallthru
    _
  // Predicated region
  $region22: #{dprnn_forward.9} parent=0 // pred_check
    _
  $region23: #{dprnn_forward.9} parent=0 // pred_check_branch
    %124 = sbr.rel (0) target = $region25
  $region24: #{dprnn_forward.9} parent=0 // pred_region
    _
  $region25: #{dprnn_forward.9} parent=0 // pred_fallthru
    _

// kernel: dprnn_forward.5
$region0: #{dprnn_forward.5}
  #allocation0 [shape = 'u32[]', space=smem, size = 0x4, offset = 0x4, fixed_abs, tag = 'smem constant byte address 0x4 - core index']
  #allocation1 [shape = 'u32[144,128]{1,0:T(1,128)}', space=vmem, size = 0x12000, scoped, tag = 'internal scratch']
  #allocation2 [shape = 'f32[2,8,16,32]{3,2,1,0:T(8,128)}', space=vmem, size = 0x20000, scoped, tag = 'scratch operand']
  %s0 = inlined_call_operand.vmem [shape: f32[8,16,16], index: 0, kind: input, shape index: {}, may-alias: {0,10}]
  %s1 = inlined_call_operand.vmem [shape: f32[16,256], index: 1, kind: input, shape index: {}]
  %s2 = inlined_call_operand.vmem [shape: f32[32,128], index: 2, kind: input, shape index: {}]
  %s3 = inlined_call_operand.vmem [shape: f32[32,128], index: 3, kind: input, shape index: {}]
  %s4 = inlined_call_operand.vmem [shape: f32[1,128], index: 4, kind: input, shape index: {}]
  %s5 = inlined_call_operand.vmem [shape: f32[1,128], index: 5, kind: input, shape index: {}]
  %s6 = inlined_call_operand.vmem [shape: f32[64,16], index: 6, kind: input, shape index: {}]
  %s7 = inlined_call_operand.vmem [shape: f32[1,16], index: 7, kind: input, shape index: {}]
  %s8 = inlined_call_operand.vmem [shape: f32[1,16], index: 8, kind: input, shape index: {}]
  %s9 = inlined_call_operand.vmem [shape: f32[1,16], index: 9, kind: input, shape index: {}]
  %s10 = inlined_call_operand.vmem [shape: f32[8,16,16], index: 10, kind: output, shape index: {}, may-alias: {0,10}]
  %s11 = sld [smem:[#allocation0]]
  $region50: #{dprnn_forward.5} parent=0
    _
  %s13 = ssub.s32 1, %s11
  %s14 = scalar_select 0, %s13, %s11
  // Predicated region
  $region2: #{dprnn_forward.5} parent=0 // pred_check
    _
  $region3: #{dprnn_forward.5} parent=0 // pred_check_branch
    %16 = sbr.rel (0) target = $region5
  $region4: #{dprnn_forward.5} parent=0 // pred_region
    _
  $region5: #{dprnn_forward.5} parent=0 // pred_fallthru
    _
  // Predicated region
  $region6: #{dprnn_forward.5} parent=0 // pred_check
    _
  $region7: #{dprnn_forward.5} parent=0 // pred_check_branch
    %18 = sbr.rel (0) target = $region9
  $region8: #{dprnn_forward.5} parent=0 // pred_region
    _
  $region9: #{dprnn_forward.5} parent=0 // pred_fallthru
    _
  // Predicated region
  $region10: #{dprnn_forward.5} parent=0 // pred_check
    _
  $region11: #{dprnn_forward.5} parent=0 // pred_check_branch
    %20 = sbr.rel (0) target = $region13
  $region12: #{dprnn_forward.5} parent=0 // pred_region
    _
  $region13: #{dprnn_forward.5} parent=0 // pred_fallthru
    _
  // Predicated region
  $region14: #{dprnn_forward.5} parent=0 // pred_check
    _
  $region15: #{dprnn_forward.5} parent=0 // pred_check_branch
    %22 = sbr.rel (0) target = $region17
  $region16: #{dprnn_forward.5} parent=0 // pred_region
    _
  $region17: #{dprnn_forward.5} parent=0 // pred_fallthru
    _
  // Predicated region
  $region18: #{dprnn_forward.5} parent=0 // pred_check
    _
  $region19: #{dprnn_forward.5} parent=0 // pred_check_branch
    %24 = sbr.rel (0) target = $region21
  $region20: #{dprnn_forward.5} parent=0 // pred_region
    _
  $region21: #{dprnn_forward.5} parent=0 // pred_fallthru
    _
  // Predicated region
  $region22: #{dprnn_forward.5} parent=0 // pred_check
    _
  $region23: #{dprnn_forward.5} parent=0 // pred_check_branch
    %26 = sbr.rel (0) target = $region25
  $region24: #{dprnn_forward.5} parent=0 // pred_region
    _
  $region25: #{dprnn_forward.5} parent=0 // pred_fallthru
    _
  // Predicated region
  $region26: #{dprnn_forward.5} parent=0 // pred_check
    _
  $region27: #{dprnn_forward.5} parent=0 // pred_check_branch
    %28 = sbr.rel (0) target = $region29
  $region28: #{dprnn_forward.5} parent=0 // pred_region
    _
  $region29: #{dprnn_forward.5} parent=0 // pred_fallthru
    _
  // Predicated region
  $region30: #{dprnn_forward.5} parent=0 // pred_check
    _
  $region31: #{dprnn_forward.5} parent=0 // pred_check_branch
    %30 = sbr.rel (0) target = $region33
  $region32: #{dprnn_forward.5} parent=0 // pred_region
    _
  $region33: #{dprnn_forward.5} parent=0 // pred_fallthru
    _
  // Predicated region
  $region34: #{dprnn_forward.5} parent=0 // pred_check
    _
  $region35: #{dprnn_forward.5} parent=0 // pred_check_branch
    %32 = sbr.rel (0) target = $region37
  $region36: #{dprnn_forward.5} parent=0 // pred_region
    _
  $region37: #{dprnn_forward.5} parent=0 // pred_fallthru
    _
  // Predicated region
  $region38: #{dprnn_forward.5} parent=0 // pred_check
    _
  $region39: #{dprnn_forward.5} parent=0 // pred_check_branch
    %34 = sbr.rel (0) target = $region41
  $region40: #{dprnn_forward.5} parent=0 // pred_region
    _
  $region41: #{dprnn_forward.5} parent=0 // pred_fallthru
    _
  %v35 = vld [vmem:[%s0] sm:$0xff]
  %v36 = vld [vmem:[%s0 + $0x8] sm:$0xff]
  %v37 = vld [vmem:[%s0 + $0x10] sm:$0xff]
  %v38 = vld [vmem:[%s0 + $0x18] sm:$0xff]
  %v39 = vld [vmem:[%s0 + $0x20] sm:$0xff]
  %v40 = vld [vmem:[%s0 + $0x28] sm:$0xff]
  %v41 = vld [vmem:[%s0 + $0x30] sm:$0xff]
  %v42 = vld [vmem:[%s0 + $0x38] sm:$0xff]
  %v43 = vld [vmem:[%s0 + $0x40] sm:$0xff]
  %v44 = vld [vmem:[%s0 + $0x48] sm:$0xff]
  %v45 = vld [vmem:[%s0 + $0x50] sm:$0xff]
  %v46 = vld [vmem:[%s0 + $0x58] sm:$0xff]
  %v47 = vld [vmem:[%s0 + $0x60] sm:$0xff]
  %v48 = vld [vmem:[%s0 + $0x68] sm:$0xff]
  %v49 = vld [vmem:[%s0 + $0x70] sm:$0xff]
  %v50 = vld [vmem:[%s0 + $0x78] sm:$0xff]
  %v51 = vld [vmem:[%s1] sm:$0xff]
  %v52 = vld [vmem:[%s1 + $0x8] sm:$0xff]
  %v53 = vld [vmem:[%s1 + $0x10] sm:$0xff]
  %v54 = vld [vmem:[%s1 + $0x18] sm:$0xff]
  %vm55 = vcmask 130048
  %v57 = vsel %vm55, %v35, 0
  %v60 = vsel %vm55, %v36, 0
  %v63 = vsel %vm55, %v37, 0
  %v66 = vsel %vm55, %v38, 0
  %v69 = vsel %vm55, %v39, 0
  %v72 = vsel %vm55, %v40, 0
  %v75 = vsel %vm55, %v41, 0
  %v78 = vsel %vm55, %v42, 0
  %v81 = vsel %vm55, %v43, 0
  %v84 = vsel %vm55, %v44, 0
  %v87 = vsel %vm55, %v45, 0
  %v90 = vsel %vm55, %v46, 0
  %v93 = vsel %vm55, %v47, 0
  %v96 = vsel %vm55, %v48, 0
  %v99 = vsel %vm55, %v49, 0
  %v102 = vsel %vm55, %v50, 0
  %104 = vmatprep.subr.mxu0 0.0
  %105 = vmatpush1.msra.mxu0 0.0
  %106 = vmatprep.subr.mxu0 0.0
  %107 = vmatpush1.msra.mxu0 0.0
  %108 = vmatprep.subr.mxu0 0.0
  %109 = vmatpush1.msra.mxu0 0.0
  %110 = vmatprep.subr.mxu0 0.0
  %111 = vmatpush1.msra.mxu0 0.0
  %112 = vmatprep.subr.mxu0 0.0
  %113 = vmatpush1.msra.mxu0 0.0
  %114 = vmatprep.subr.mxu0 0.0
  %115 = vmatpush1.msra.mxu0 0.0
  %116 = vmatprep.subr.mxu0 0.0
  %117 = vmatpush1.msra.mxu0 0.0
  %118 = vmatprep.subr.mxu0 0.0
  %119 = vmatpush1.msra.mxu0 0.0
  %120 = vmatprep.subr.mxu0 0.0
  %121 = vmatpush1.msra.mxu0 0.0
  %122 = vmatprep.subr.mxu0 0.0
  %123 = vmatpush1.msra.mxu0 0.0
  %124 = vmatprep.subr.mxu0 0.0
  %125 = vmatpush1.msra.mxu0 0.0
  %126 = vmatprep.subr.mxu0 0.0
  %127 = vmatpush1.msra.mxu0 0.0
  %128 = vmatprep.subr.mxu0 0.0
  %129 = vmatpush1.msra.mxu0 0.0
  %130 = vmatprep.subr.mxu0 0.0
  %131 = vmatpush1.msra.mxu0 0.0
  %132 = vmatprep.subr.mxu0 %v54
  %133 = vmatpush1.msra.mxu0 %v53
  %134 = vmatprep.subr.mxu0 %v52
  %135 = vmatpush1.msra.mxu0 %v51
  %136 = vmatprep.subr.mxu0 0.0
  %137 = vmatpush2.msra.mxu0 0.0
  %138 = vmatprep.subr.mxu0 0.0
  %139 = vmatpush2.msra.mxu0 0.0
  %140 = vmatprep.subr.mxu0 0.0
  %141 = vmatpush2.msra.mxu0 0.0
  %142 = vmatprep.subr.mxu0 0.0
  %143 = vmatpush2.msra.mxu0 0.0
  %144 = vmatprep.subr.mxu0 0.0
  %145 = vmatpush2.msra.mxu0 0.0
  %146 = vmatprep.subr.mxu0 0.0
  %147 = vmatpush2.msra.mxu0 0.0
  %148 = vmatprep.subr.mxu0 0.0
  %149 = vmatpush2.msra.mxu0 0.0
  %150 = vmatprep.subr.mxu0 0.0
  %151 = vmatpush2.msra.mxu0 0.0
  %152 = vmatprep.subr.mxu0 0.0
  %153 = vmatpush2.msra.mxu0 0.0
  %154 = vmatprep.subr.mxu0 0.0
  %155 = vmatpush2.msra.mxu0 0.0
  %156 = vmatprep.subr.mxu0 0.0
  %157 = vmatpush2.msra.mxu0 0.0
  %158 = vmatprep.subr.mxu0 0.0
  %159 = vmatpush2.msra.mxu0 0.0
  %160 = vmatprep.subr.mxu0 0.0
  %161 = vmatpush2.msra.mxu0 0.0
  %162 = vmatprep.subr.mxu0 0.0
  %163 = vmatpush2.msra.mxu0 0.0
  %164 = vmatprep.subr.mxu0 0.0
  %165 = vmatpush2.msra.mxu0 0.0
  %166 = vmatprep.subr.mxu0 0.0
  %167 = vmatpush2.msra.mxu0 0.0
  %168 = vmatprep.mubr.f32.mxu0 0.0
  %169 = vmatmul.mubr.f32.gmra.mxu0 %v57
  %v170 = vpop.f32.mrf.mxu0
  %v171 = vadd.f32 0.0, %v170
  %v172 = vpop.f32.mrf.mxu0
  %v173 = vadd.f32 0.0, %v172
  %174 = vmatprep.mubr.f32.mxu0 0.0
  %175 = vmatmul.mubr.f32.gmra.mxu0 %v60
  %v176 = vpop.f32.mrf.mxu0
  %v177 = vadd.f32 0.0, %v176
  %v178 = vpop.f32.mrf.mxu0
  %v179 = vadd.f32 0.0, %v178
  %180 = vmatprep.mubr.f32.mxu0 0.0
  %181 = vmatmul.mubr.f32.gmra.mxu0 %v63
  %v182 = vpop.f32.mrf.mxu0
  %v183 = vadd.f32 0.0, %v182
  %v184 = vpop.f32.mrf.mxu0
  %v185 = vadd.f32 0.0, %v184
  %186 = vmatprep.mubr.f32.mxu0 0.0
  %187 = vmatmul.mubr.f32.gmra.mxu0 %v66
  %v188 = vpop.f32.mrf.mxu0
  %v189 = vadd.f32 0.0, %v188
  %v190 = vpop.f32.mrf.mxu0
  %v191 = vadd.f32 0.0, %v190
  %192 = vmatprep.mubr.f32.mxu0 0.0
  %193 = vmatmul.mubr.f32.gmra.mxu0 %v69
  %v194 = vpop.f32.mrf.mxu0
  %v195 = vadd.f32 0.0, %v194
  %v196 = vpop.f32.mrf.mxu0
  %v197 = vadd.f32 0.0, %v196
  %198 = vmatprep.mubr.f32.mxu0 0.0
  %199 = vmatmul.mubr.f32.gmra.mxu0 %v72
  %v200 = vpop.f32.mrf.mxu0
  %v201 = vadd.f32 0.0, %v200
  %v202 = vpop.f32.mrf.mxu0
  %v203 = vadd.f32 0.0, %v202
  %204 = vmatprep.mubr.f32.mxu0 0.0
  %205 = vmatmul.mubr.f32.gmra.mxu0 %v75
  %v206 = vpop.f32.mrf.mxu0
  %v207 = vadd.f32 0.0, %v206
  %v208 = vpop.f32.mrf.mxu0
  %v209 = vadd.f32 0.0, %v208
  %210 = vmatprep.mubr.f32.mxu0 0.0
  %211 = vmatmul.mubr.f32.gmra.mxu0 %v78
  %v212 = vpop.f32.mrf.mxu0
  %v213 = vadd.f32 0.0, %v212
  %v214 = vpop.f32.mrf.mxu0
  %v215 = vadd.f32 0.0, %v214
  %216 = vmatprep.mubr.f32.mxu0 0.0
  %217 = vmatmul.mubr.f32.gmra.mxu0 %v81
  %v218 = vpop.f32.mrf.mxu0
  %v219 = vadd.f32 0.0, %v218
  %v220 = vpop.f32.mrf.mxu0
  %v221 = vadd.f32 0.0, %v220
  %222 = vmatprep.mubr.f32.mxu0 0.0
  %223 = vmatmul.mubr.f32.gmra.mxu0 %v84
  %v224 = vpop.f32.mrf.mxu0
  %v225 = vadd.f32 0.0, %v224
  %v226 = vpop.f32.mrf.mxu0
  %v227 = vadd.f32 0.0, %v226
  %228 = vmatprep.mubr.f32.mxu0 0.0
  %229 = vmatmul.mubr.f32.gmra.mxu0 %v87
  %v230 = vpop.f32.mrf.mxu0
  %v231 = vadd.f32 0.0, %v230
  %v232 = vpop.f32.mrf.mxu0
  %v233 = vadd.f32 0.0, %v232
  %234 = vmatprep.mubr.f32.mxu0 0.0
  %235 = vmatmul.mubr.f32.gmra.mxu0 %v90
  %v236 = vpop.f32.mrf.mxu0
  %v237 = vadd.f32 0.0, %v236
  %v238 = vpop.f32.mrf.mxu0
  %v239 = vadd.f32 0.0, %v238
  %240 = vmatprep.mubr.f32.mxu0 0.0
  %241 = vmatmul.mubr.f32.gmra.mxu0 %v93
  %v242 = vpop.f32.mrf.mxu0
  %v243 = vadd.f32 0.0, %v242
  %v244 = vpop.f32.mrf.mxu0
  %v245 = vadd.f32 0.0, %v244
  %246 = vmatprep.mubr.f32.mxu0 0.0
  %247 = vmatmul.mubr.f32.gmra.mxu0 %v96
  %v248 = vpop.f32.mrf.mxu0
  %v249 = vadd.f32 0.0, %v248
  %v250 = vpop.f32.mrf.mxu0
  %v251 = vadd.f32 0.0, %v250
  %252 = vmatprep.mubr.f32.mxu0 0.0
  %253 = vmatmul.mubr.f32.gmra.mxu0 %v99
  %v254 = vpop.f32.mrf.mxu0
  %v255 = vadd.f32 0.0, %v254
  %v256 = vpop.f32.mrf.mxu0
  %v257 = vadd.f32 0.0, %v256
  %258 = vmatprep.mubr.f32.mxu0 0.0
  %259 = vmatmul.mubr.f32.gmra.mxu0 %v102
  %v260 = vpop.f32.mrf.mxu0
  %v261 = vadd.f32 0.0, %v260
  %v262 = vpop.f32.mrf.mxu0
  %v263 = vadd.f32 0.0, %v262
  %264 = vdwg.mxu0
  %v265 = vld [vmem:[%s2] sm:$0xff]
  %v266 = vld [vmem:[%s2 + $0x8] sm:$0xff]
  %v267 = vld [vmem:[%s2 + $0x10] sm:$0xff]
  %v268 = vld [vmem:[%s2 + $0x18] sm:$0xff]
  %v269 = vld [vmem:[%s3] sm:$0xff]
  %v270 = vld [vmem:[%s3 + $0x8] sm:$0xff]
  %v271 = vld [vmem:[%s3 + $0x10] sm:$0xff]
  %v272 = vld [vmem:[%s3 + $0x18] sm:$0xff]
  %v273 = vld [vmem:[%s4] sm:$0x1]
  %v274 = vld [vmem:[%s5] sm:$0x1]
  %v275 = vld [vmem:[%s6] sm:$0xff]
  %v276 = vld [vmem:[%s6 + $0x8] sm:$0xff]
  %v277 = vld [vmem:[%s6 + $0x10] sm:$0xff]
  %v278 = vld [vmem:[%s6 + $0x18] sm:$0xff]
  %v279 = vld [vmem:[%s6 + $0x20] sm:$0xff]
  %v280 = vld [vmem:[%s6 + $0x28] sm:$0xff]
  %v281 = vld [vmem:[%s6 + $0x30] sm:$0xff]
  %v282 = vld [vmem:[%s6 + $0x38] sm:$0xff]
  %v283 = vld [vmem:[%s7] sm:$0x1]
  %v284 = vld [vmem:[%s8] sm:$0x1]
  %v285 = vld [vmem:[%s9] sm:$0x1]
  %vm286 = vcmask 261120
  %v288 = vsel %vm286, 0.0, 0
  %290 = vmatprep.subr.mxu0 0.0
  %291 = vmatpush1.msra.mxu0 0.0
  %292 = vmatprep.subr.mxu0 0.0
  %293 = vmatpush1.msra.mxu0 0.0
  %294 = vmatprep.subr.mxu0 0.0
  %295 = vmatpush1.msra.mxu0 0.0
  %296 = vmatprep.subr.mxu0 0.0
  %297 = vmatpush1.msra.mxu0 0.0
  %298 = vmatprep.subr.mxu0 0.0
  %299 = vmatpush1.msra.mxu0 0.0
  %300 = vmatprep.subr.mxu0 0.0
  %301 = vmatpush1.msra.mxu0 0.0
  %302 = vmatprep.subr.mxu0 0.0
  %303 = vmatpush1.msra.mxu0 0.0
  %304 = vmatprep.subr.mxu0 0.0
  %305 = vmatpush1.msra.mxu0 0.0
  %306 = vmatprep.subr.mxu0 0.0
  %307 = vmatpush1.msra.mxu0 0.0
  %308 = vmatprep.subr.mxu0 0.0
  %309 = vmatpush1.msra.mxu0 0.0
  %310 = vmatprep.subr.mxu0 0.0
  %311 = vmatpush1.msra.mxu0 0.0
  %312 = vmatprep.subr.mxu0 0.0
  %313 = vmatpush1.msra.mxu0 0.0
  %314 = vmatprep.subr.mxu0 0.0
  %315 = vmatpush1.msra.mxu0 %v268
  %316 = vmatprep.subr.mxu0 0.0
  %317 = vmatpush1.msra.mxu0 %v267
  %318 = vmatprep.subr.mxu0 0.0
  %319 = vmatpush1.msra.mxu0 %v266
  %320 = vmatprep.subr.mxu0 0.0
  %321 = vmatpush1.msra.mxu0 %v265
  %322 = vmatprep.subr.mxu0 0.0
  %323 = vmatpush2.msra.mxu0 0.0
  %324 = vmatprep.subr.mxu0 0.0
  %325 = vmatpush2.msra.mxu0 0.0
  %326 = vmatprep.subr.mxu0 0.0
  %327 = vmatpush2.msra.mxu0 0.0
  %328 = vmatprep.subr.mxu0 0.0
  %329 = vmatpush2.msra.mxu0 0.0
  %330 = vmatprep.subr.mxu0 0.0
  %331 = vmatpush2.msra.mxu0 0.0
  %332 = vmatprep.subr.mxu0 0.0
  %333 = vmatpush2.msra.mxu0 0.0
  %334 = vmatprep.subr.mxu0 0.0
  %335 = vmatpush2.msra.mxu0 0.0
  %336 = vmatprep.subr.mxu0 0.0
  %337 = vmatpush2.msra.mxu0 0.0
  %338 = vmatprep.subr.mxu0 0.0
  %339 = vmatpush2.msra.mxu0 0.0
  %340 = vmatprep.subr.mxu0 0.0
  %341 = vmatpush2.msra.mxu0 0.0
  %342 = vmatprep.subr.mxu0 0.0
  %343 = vmatpush2.msra.mxu0 0.0
  %344 = vmatprep.subr.mxu0 0.0
  %345 = vmatpush2.msra.mxu0 0.0
  %346 = vmatprep.subr.mxu0 0.0
  %347 = vmatpush2.msra.mxu0 0.0
  %348 = vmatprep.subr.mxu0 0.0
  %349 = vmatpush2.msra.mxu0 0.0
  %350 = vmatprep.subr.mxu0 0.0
  %351 = vmatpush2.msra.mxu0 0.0
  %352 = vmatprep.subr.mxu0 0.0
  %353 = vmatpush2.msra.mxu0 0.0
  %354 = vmatprep.mubr.f32.mxu0 0.0
  %355 = vmatmul.mubr.f32.gmra.mxu0 %v288
  %v356 = vpop.f32.mrf.mxu0
  %v357 = vadd.f32 0.0, %v356
  %v358 = vpop.f32.mrf.mxu0
  %359 = vmatprep.mubr.f32.mxu0 0.0
  %360 = vmatmul.mubr.f32.gmra.mxu0 %v288
  %v361 = vpop.f32.mrf.mxu0
  %v362 = vadd.f32 0.0, %v361
  %v363 = vpop.f32.mrf.mxu0
  %364 = vdwg.mxu0
  %v365 = vadd.f32 %v171, %v357
  %v366 = vadd.f32 %v177, %v362
  %v368 = vlaneseq
  %v369 = vshrl.u32 %v368, 7
  %v370 = vsub.s32 0, %v369
  %v371 = vrot.slane %v273, %v370
  %v373 = vadd.f32 %v365, %v371
  %v374 = vadd.f32 %v366, %v371
  %v375 = vxor.u32 %v373, 2147483648
  %v376 = vxor.u32 %v374, 2147483648
  %v377 = vmul.f32 %v375, 1.442695
  %v378 = vpow.pop %v377
  %v379 = vmul.f32 %v376, 1.442695
  %v380 = vpow.pop %v379
  %v381 = vadd.f32 %v378, 1.0
  %v382 = vadd.f32 %v380, 1.0
  %v383 = vrcp.pop %v381
  %v384 = vmul.f32 1.0, %v383
  %v385 = vrcp.pop %v382
  %v386 = vmul.f32 1.0, %v385
  %v387 = vtanh.pop %v373
  %v388 = vtanh.pop %v374
  %v389 = vmul.f32 %v384, 0.0
  %v390 = vmul.f32 %v386, 0.0
  %393 = vrot.lane.b32.xlu0 %v387, 32
  %v394 = vpop.permute.xlu0 %393
  %395 = vrot.lane.b32.xlu0 %v388, 32
  %v396 = vpop.permute.xlu0 %395
  %v399 = vmul.f32 %v384, %v394
  %v400 = vmul.f32 %v386, %v396
  %403 = vrot.lane.b32.xlu0 %v399, 32
  %v404 = vpop.permute.xlu0 %403
  %405 = vrot.lane.b32.xlu0 %v400, 32
  %v406 = vpop.permute.xlu0 %405
  %v409 = vadd.f32 %v389, %v404
  %v410 = vadd.f32 %v390, %v406
  %v411 = vtanh.pop %v409
  %v412 = vtanh.pop %v410
  %415 = vrot.lane.b32.xlu0 %v411, 32
  %v416 = vpop.permute.xlu0 %415
  %417 = vrot.lane.b32.xlu0 %v412, 32
  %v418 = vpop.permute.xlu0 %417
  %v421 = vmul.f32 %v384, %v416
  %v422 = vmul.f32 %v386, %v418
  %425 = vrot.lane.b32.xlu0 %v421, 64
  %v426 = vpop.permute.xlu0 %425
  %427 = vrot.lane.b32.xlu0 %v422, 64
  %v428 = vpop.permute.xlu0 %427
  %431 = vst.msk [vmem:[#allocation2] sm:$0xff] %vm286, %v426
  %432 = vst.msk [vmem:[#allocation2 + $0x8] sm:$0xff] %vm286, %v428
  %v433 = vsel %vm286, %v426, 0
  %v435 = vsel %vm286, %v428, 0
  %437 = vmatprep.subr.mxu0 0.0
  %438 = vmatpush1.msra.mxu0 0.0
  %439 = vmatprep.subr.mxu0 0.0
  %440 = vmatpush1.msra.mxu0 0.0
  %441 = vmatprep.subr.mxu0 0.0
  %442 = vmatpush1.msra.mxu0 0.0
  %443 = vmatprep.subr.mxu0 0.0
  %444 = vmatpush1.msra.mxu0 0.0
  %445 = vmatprep.subr.mxu0 0.0
  %446 = vmatpush1.msra.mxu0 0.0
  %447 = vmatprep.subr.mxu0 0.0
  %448 = vmatpush1.msra.mxu0 0.0
  %449 = vmatprep.subr.mxu0 0.0
  %450 = vmatpush1.msra.mxu0 0.0
  %451 = vmatprep.subr.mxu0 0.0
  %452 = vmatpush1.msra.mxu0 0.0
  %453 = vmatprep.subr.mxu0 0.0
  %454 = vmatpush1.msra.mxu0 0.0
  %455 = vmatprep.subr.mxu0 0.0
  %456 = vmatpush1.msra.mxu0 0.0
  %457 = vmatprep.subr.mxu0 0.0
  %458 = vmatpush1.msra.mxu0 0.0
  %459 = vmatprep.subr.mxu0 0.0
  %460 = vmatpush1.msra.mxu0 0.0
  %461 = vmatprep.subr.mxu0 0.0
  %462 = vmatpush1.msra.mxu0 %v268
  %463 = vmatprep.subr.mxu0 0.0
  %464 = vmatpush1.msra.mxu0 %v267
  %465 = vmatprep.subr.mxu0 0.0
  %466 = vmatpush1.msra.mxu0 %v266
  %467 = vmatprep.subr.mxu0 0.0
  %468 = vmatpush1.msra.mxu0 %v265
  %469 = vmatprep.subr.mxu0 0.0
  %470 = vmatpush2.msra.mxu0 0.0
  %471 = vmatprep.subr.mxu0 0.0
  %472 = vmatpush2.msra.mxu0 0.0
  %473 = vmatprep.subr.mxu0 0.0
  %474 = vmatpush2.msra.mxu0 0.0
  %475 = vmatprep.subr.mxu0 0.0
  %476 = vmatpush2.msra.mxu0 0.0
  %477 = vmatprep.subr.mxu0 0.0
  %478 = vmatpush2.msra.mxu0 0.0
  %479 = vmatprep.subr.mxu0 0.0
  %480 = vmatpush2.msra.mxu0 0.0
  %481 = vmatprep.subr.mxu0 0.0
  %482 = vmatpush2.msra.mxu0 0.0
  %483 = vmatprep.subr.mxu0 0.0
  %484 = vmatpush2.msra.mxu0 0.0
  %485 = vmatprep.subr.mxu0 0.0
  %486 = vmatpush2.msra.mxu0 0.0
  %487 = vmatprep.subr.mxu0 0.0
  %488 = vmatpush2.msra.mxu0 0.0
  %489 = vmatprep.subr.mxu0 0.0
  %490 = vmatpush2.msra.mxu0 0.0
  %491 = vmatprep.subr.mxu0 0.0
  %492 = vmatpush2.msra.mxu0 0.0
  %493 = vmatprep.subr.mxu0 0.0
  %494 = vmatpush2.msra.mxu0 0.0
  %495 = vmatprep.subr.mxu0 0.0
  %496 = vmatpush2.msra.mxu0 0.0
  %497 = vmatprep.subr.mxu0 0.0
  %498 = vmatpush2.msra.mxu0 0.0
  %499 = vmatprep.subr.mxu0 0.0
  %500 = vmatpush2.msra.mxu0 0.0
  %501 = vmatprep.mubr.f32.mxu0 0.0
  %502 = vmatmul.mubr.f32.gmra.mxu0 %v433
  %v503 = vpop.f32.mrf.mxu0
  %v504 = vadd.f32 0.0, %v503
  %v505 = vpop.f32.mrf.mxu0
  %506 = vmatprep.mubr.f32.mxu0 0.0
  %507 = vmatmul.mubr.f32.gmra.mxu0 %v435
  %v508 = vpop.f32.mrf.mxu0
  %v509 = vadd.f32 0.0, %v508
  %v510 = vpop.f32.mrf.mxu0
  %511 = vdwg.mxu0
  %v512 = vadd.f32 %v183, %v504
  %v513 = vadd.f32 %v189, %v509
  %v514 = vadd.f32 %v512, %v371
  %v515 = vadd.f32 %v513, %v371
  %v516 = vxor.u32 %v514, 2147483648
  %v517 = vxor.u32 %v515, 2147483648
  %v518 = vmul.f32 %v516, 1.442695
  %v519 = vpow.pop %v518
  %v520 = vmul.f32 %v517, 1.442695
  %v521 = vpow.pop %v520
  %v522 = vadd.f32 %v519, 1.0
  %v523 = vadd.f32 %v521, 1.0
  %v524 = vrcp.pop %v522
  %v525 = vmul.f32 1.0, %v524
  %v526 = vrcp.pop %v523
  %v527 = vmul.f32 1.0, %v526
  %v528 = vtanh.pop %v514
  %v529 = vtanh.pop %v515
  %v530 = vmul.f32 %v525, %v409
  %v531 = vmul.f32 %v527, %v410
  %534 = vrot.lane.b32.xlu0 %v528, 32
  %v535 = vpop.permute.xlu0 %534
  %536 = vrot.lane.b32.xlu0 %v529, 32
  %v537 = vpop.permute.xlu0 %536
  %v540 = vmul.f32 %v525, %v535
  %v541 = vmul.f32 %v527, %v537
  %544 = vrot.lane.b32.xlu0 %v540, 32
  %v545 = vpop.permute.xlu0 %544
  %546 = vrot.lane.b32.xlu0 %v541, 32
  %v547 = vpop.permute.xlu0 %546
  %v550 = vadd.f32 %v530, %v545
  %v551 = vadd.f32 %v531, %v547
  %v552 = vtanh.pop %v550
  %v553 = vtanh.pop %v551
  %556 = vrot.lane.b32.xlu0 %v552, 32
  %v557 = vpop.permute.xlu0 %556
  %558 = vrot.lane.b32.xlu0 %v553, 32
  %v559 = vpop.permute.xlu0 %558
  %v562 = vmul.f32 %v525, %v557
  %v563 = vmul.f32 %v527, %v559
  %566 = vrot.lane.b32.xlu0 %v562, 64
  %v567 = vpop.permute.xlu0 %566
  %568 = vrot.lane.b32.xlu0 %v563, 64
  %v569 = vpop.permute.xlu0 %568
  %s572 = scalar_lea.vmem [#allocation2], 16
  %573 = vst.msk [vmem:[%s572] sm:$0xff] %vm286, %v567
  %574 = vst.msk [vmem:[%s572 + $0x8] sm:$0xff] %vm286, %v569
  %v575 = vsel %vm286, %v567, 0
  %v577 = vsel %vm286, %v569, 0
  %579 = vmatprep.subr.mxu0 0.0
  %580 = vmatpush1.msra.mxu0 0.0
  %581 = vmatprep.subr.mxu0 0.0
  %582 = vmatpush1.msra.mxu0 0.0
  %583 = vmatprep.subr.mxu0 0.0
  %584 = vmatpush1.msra.mxu0 0.0
  %585 = vmatprep.subr.mxu0 0.0
  %586 = vmatpush1.msra.mxu0 0.0
  %587 = vmatprep.subr.mxu0 0.0
  %588 = vmatpush1.msra.mxu0 0.0
  %589 = vmatprep.subr.mxu0 0.0
  %590 = vmatpush1.msra.mxu0 0.0
  %591 = vmatprep.subr.mxu0 0.0
  %592 = vmatpush1.msra.mxu0 0.0
  %593 = vmatprep.subr.mxu0 0.0
  %594 = vmatpush1.msra.mxu0 0.0
  %595 = vmatprep.subr.mxu0 0.0
  %596 = vmatpush1.msra.mxu0 0.0
  %597 = vmatprep.subr.mxu0 0.0
  %598 = vmatpush1.msra.mxu0 0.0
  %599 = vmatprep.subr.mxu0 0.0
  %600 = vmatpush1.msra.mxu0 0.0
  %601 = vmatprep.subr.mxu0 0.0
  %602 = vmatpush1.msra.mxu0 0.0
  %603 = vmatprep.subr.mxu0 0.0
  %604 = vmatpush1.msra.mxu0 %v268
  %605 = vmatprep.subr.mxu0 0.0
  %606 = vmatpush1.msra.mxu0 %v267
  %607 = vmatprep.subr.mxu0 0.0
  %608 = vmatpush1.msra.mxu0 %v266
  %609 = vmatprep.subr.mxu0 0.0
  %610 = vmatpush1.msra.mxu0 %v265
  %611 = vmatprep.subr.mxu0 0.0
  %612 = vmatpush2.msra.mxu0 0.0
  %613 = vmatprep.subr.mxu0 0.0
  %614 = vmatpush2.msra.mxu0 0.0
  %615 = vmatprep.subr.mxu0 0.0
  %616 = vmatpush2.msra.mxu0 0.0
  %617 = vmatprep.subr.mxu0 0.0
  %618 = vmatpush2.msra.mxu0 0.0
  %619 = vmatprep.subr.mxu0 0.0
  %620 = vmatpush2.msra.mxu0 0.0
  %621 = vmatprep.subr.mxu0 0.0
  %622 = vmatpush2.msra.mxu0 0.0
  %623 = vmatprep.subr.mxu0 0.0
  %624 = vmatpush2.msra.mxu0 0.0
  %625 = vmatprep.subr.mxu0 0.0
  %626 = vmatpush2.msra.mxu0 0.0
  %627 = vmatprep.subr.mxu0 0.0
  %628 = vmatpush2.msra.mxu0 0.0
  %629 = vmatprep.subr.mxu0 0.0
  %630 = vmatpush2.msra.mxu0 0.0
  %631 = vmatprep.subr.mxu0 0.0
  %632 = vmatpush2.msra.mxu0 0.0
  %633 = vmatprep.subr.mxu0 0.0
  %634 = vmatpush2.msra.mxu0 0.0
  %635 = vmatprep.subr.mxu0 0.0
  %636 = vmatpush2.msra.mxu0 0.0
  %637 = vmatprep.subr.mxu0 0.0
  %638 = vmatpush2.msra.mxu0 0.0
  %639 = vmatprep.subr.mxu0 0.0
  %640 = vmatpush2.msra.mxu0 0.0
  %641 = vmatprep.subr.mxu0 0.0
  %642 = vmatpush2.msra.mxu0 0.0
  %643 = vmatprep.mubr.f32.mxu0 0.0
  %644 = vmatmul.mubr.f32.gmra.mxu0 %v575
  %v645 = vpop.f32.mrf.mxu0
  %v646 = vadd.f32 0.0, %v645
  %v647 = vpop.f32.mrf.mxu0
  %648 = vmatprep.mubr.f32.mxu0 0.0
  %649 = vmatmul.mubr.f32.gmra.mxu0 %v577
  %v650 = vpop.f32.mrf.mxu0
  %v651 = vadd.f32 0.0, %v650
  %v652 = vpop.f32.mrf.mxu0
  %653 = vdwg.mxu0
  %v654 = vadd.f32 %v195, %v646
  %v655 = vadd.f32 %v201, %v651
  %v656 = vadd.f32 %v654, %v371
  %v657 = vadd.f32 %v655, %v371
  %v658 = vxor.u32 %v656, 2147483648
  %v659 = vxor.u32 %v657, 2147483648
  %v660 = vmul.f32 %v658, 1.442695
  %v661 = vpow.pop %v660
  %v662 = vmul.f32 %v659, 1.442695
  %v663 = vpow.pop %v662
  %v664 = vadd.f32 %v661, 1.0
  %v665 = vadd.f32 %v663, 1.0
  %v666 = vrcp.pop %v664
  %v667 = vmul.f32 1.0, %v666
  %v668 = vrcp.pop %v665
  %v669 = vmul.f32 1.0, %v668
  %v670 = vtanh.pop %v656
  %v671 = vtanh.pop %v657
  %v672 = vmul.f32 %v667, %v550
  %v673 = vmul.f32 %v669, %v551
  %676 = vrot.lane.b32.xlu0 %v670, 32
  %v677 = vpop.permute.xlu0 %676
  %678 = vrot.lane.b32.xlu0 %v671, 32
  %v679 = vpop.permute.xlu0 %678
  %v682 = vmul.f32 %v667, %v677
  %v683 = vmul.f32 %v669, %v679
  %686 = vrot.lane.b32.xlu0 %v682, 32
  %v687 = vpop.permute.xlu0 %686
  %688 = vrot.lane.b32.xlu0 %v683, 32
  %v689 = vpop.permute.xlu0 %688
  %v692 = vadd.f32 %v672, %v687
  %v693 = vadd.f32 %v673, %v689
  %v694 = vtanh.pop %v692
  %v695 = vtanh.pop %v693
  %698 = vrot.lane.b32.xlu0 %v694, 32
  %v699 = vpop.permute.xlu0 %698
  %700 = vrot.lane.b32.xlu0 %v695, 32
  %v701 = vpop.permute.xlu0 %700
  %v704 = vmul.f32 %v667, %v699
  %v705 = vmul.f32 %v669, %v701
  %708 = vrot.lane.b32.xlu0 %v704, 64
  %v709 = vpop.permute.xlu0 %708
  %710 = vrot.lane.b32.xlu0 %v705, 64
  %v711 = vpop.permute.xlu0 %710
  %s714 = scalar_lea.vmem [#allocation2], 32
  %715 = vst.msk [vmem:[%s714] sm:$0xff] %vm286, %v709
  %716 = vst.msk [vmem:[%s714 + $0x8] sm:$0xff] %vm286, %v711
  %v717 = vsel %vm286, %v709, 0
  %v719 = vsel %vm286, %v711, 0
  %721 = vmatprep.subr.mxu0 0.0
  %722 = vmatpush1.msra.mxu0 0.0
  %723 = vmatprep.subr.mxu0 0.0
  %724 = vmatpush1.msra.mxu0 0.0
  %725 = vmatprep.subr.mxu0 0.0
  %726 = vmatpush1.msra.mxu0 0.0
  %727 = vmatprep.subr.mxu0 0.0
  %728 = vmatpush1.msra.mxu0 0.0
  %729 = vmatprep.subr.mxu0 0.0
  %730 = vmatpush1.msra.mxu0 0.0
  %731 = vmatprep.subr.mxu0 0.0
  %732 = vmatpush1.msra.mxu0 0.0
  %733 = vmatprep.subr.mxu0 0.0
  %734 = vmatpush1.msra.mxu0 0.0
  %735 = vmatprep.subr.mxu0 0.0
  %736 = vmatpush1.msra.mxu0 0.0
  %737 = vmatprep.subr.mxu0 0.0
  %738 = vmatpush1.msra.mxu0 0.0
  %739 = vmatprep.subr.mxu0 0.0
  %740 = vmatpush1.msra.mxu0 0.0
  %741 = vmatprep.subr.mxu0 0.0
  %742 = vmatpush1.msra.mxu0 0.0
  %743 = vmatprep.subr.mxu0 0.0
  %744 = vmatpush1.msra.mxu0 0.0
  %745 = vmatprep.subr.mxu0 0.0
  %746 = vmatpush1.msra.mxu0 %v268
  %747 = vmatprep.subr.mxu0 0.0
  %748 = vmatpush1.msra.mxu0 %v267
  %749 = vmatprep.subr.mxu0 0.0
  %750 = vmatpush1.msra.mxu0 %v266
  %751 = vmatprep.subr.mxu0 0.0
  %752 = vmatpush1.msra.mxu0 %v265
  %753 = vmatprep.subr.mxu0 0.0
  %754 = vmatpush2.msra.mxu0 0.0
  %755 = vmatprep.subr.mxu0 0.0
  %756 = vmatpush2.msra.mxu0 0.0
  %757 = vmatprep.subr.mxu0 0.0
  %758 = vmatpush2.msra.mxu0 0.0
  %759 = vmatprep.subr.mxu0 0.0
  %760 = vmatpush2.msra.mxu0 0.0
  %761 = vmatprep.subr.mxu0 0.0
  %762 = vmatpush2.msra.mxu0 0.0
  %763 = vmatprep.subr.mxu0 0.0
  %764 = vmatpush2.msra.mxu0 0.0
  %765 = vmatprep.subr.mxu0 0.0
  %766 = vmatpush2.msra.mxu0 0.0
  %767 = vmatprep.subr.mxu0 0.0
  %768 = vmatpush2.msra.mxu0 0.0
  %769 = vmatprep.subr.mxu0 0.0
  %770 = vmatpush2.msra.mxu0 0.0
  %771 = vmatprep.subr.mxu0 0.0
  %772 = vmatpush2.msra.mxu0 0.0
  %773 = vmatprep.subr.mxu0 0.0
  %774 = vmatpush2.msra.mxu0 0.0
  %775 = vmatprep.subr.mxu0 0.0
  %776 = vmatpush2.msra.mxu0 0.0
  %777 = vmatprep.subr.mxu0 0.0
  %778 = vmatpush2.msra.mxu0 0.0
  %779 = vmatprep.subr.mxu0 0.0
  %780 = vmatpush2.msra.mxu0 0.0
  %781 = vmatprep.subr.mxu0 0.0
  %782 = vmatpush2.msra.mxu0 0.0
  %783 = vmatprep.subr.mxu0 0.0
  %784 = vmatpush2.msra.mxu0 0.0
  %785 = vmatprep.mubr.f32.mxu0 0.0
  %786 = vmatmul.mubr.f32.gmra.mxu0 %v717
  %v787 = vpop.f32.mrf.mxu0
  %v788 = vadd.f32 0.0, %v787
  %v789 = vpop.f32.mrf.mxu0
  %790 = vmatprep.mubr.f32.mxu0 0.0
  %791 = vmatmul.mubr.f32.gmra.mxu0 %v719
  %v792 = vpop.f32.mrf.mxu0
  %v793 = vadd.f32 0.0, %v792
  %v794 = vpop.f32.mrf.mxu0
  %795 = vdwg.mxu0
  %v796 = vadd.f32 %v207, %v788
  %v797 = vadd.f32 %v213, %v793
  %v798 = vadd.f32 %v796, %v371
  %v799 = vadd.f32 %v797, %v371
  %v800 = vxor.u32 %v798, 2147483648
  %v801 = vxor.u32 %v799, 2147483648
  %v802 = vmul.f32 %v800, 1.442695
  %v803 = vpow.pop %v802
  %v804 = vmul.f32 %v801, 1.442695
  %v805 = vpow.pop %v804
  %v806 = vadd.f32 %v803, 1.0
  %v807 = vadd.f32 %v805, 1.0
  %v808 = vrcp.pop %v806
  %v809 = vmul.f32 1.0, %v808
  %v810 = vrcp.pop %v807
  %v811 = vmul.f32 1.0, %v810
  %v812 = vtanh.pop %v798
  %v813 = vtanh.pop %v799
  %v814 = vmul.f32 %v809, %v692
  %v815 = vmul.f32 %v811, %v693
  %818 = vrot.lane.b32.xlu0 %v812, 32
  %v819 = vpop.permute.xlu0 %818
  %820 = vrot.lane.b32.xlu0 %v813, 32
  %v821 = vpop.permute.xlu0 %820
  %v824 = vmul.f32 %v809, %v819
  %v825 = vmul.f32 %v811, %v821
  %828 = vrot.lane.b32.xlu0 %v824, 32
  %v829 = vpop.permute.xlu0 %828
  %830 = vrot.lane.b32.xlu0 %v825, 32
  %v831 = vpop.permute.xlu0 %830
  %v834 = vadd.f32 %v814, %v829
  %v835 = vadd.f32 %v815, %v831
  %v836 = vtanh.pop %v834
  %v837 = vtanh.pop %v835
  %840 = vrot.lane.b32.xlu0 %v836, 32
  %v841 = vpop.permute.xlu0 %840
  %842 = vrot.lane.b32.xlu0 %v837, 32
  %v843 = vpop.permute.xlu0 %842
  %v846 = vmul.f32 %v809, %v841
  %v847 = vmul.f32 %v811, %v843
  %850 = vrot.lane.b32.xlu0 %v846, 64
  %v851 = vpop.permute.xlu0 %850
  %852 = vrot.lane.b32.xlu0 %v847, 64
  %v853 = vpop.permute.xlu0 %852
  %s856 = scalar_lea.vmem [#allocation2], 48
  %857 = vst.msk [vmem:[%s856] sm:$0xff] %vm286, %v851
  %858 = vst.msk [vmem:[%s856 + $0x8] sm:$0xff] %vm286, %v853
  %v859 = vsel %vm286, %v851, 0
  %v861 = vsel %vm286, %v853, 0
  %863 = vmatprep.subr.mxu0 0.0
  %864 = vmatpush1.msra.mxu0 0.0
  %865 = vmatprep.subr.mxu0 0.0
  %866 = vmatpush1.msra.mxu0 0.0
  %867 = vmatprep.subr.mxu0 0.0
  %868 = vmatpush1.msra.mxu0 0.0
  %869 = vmatprep.subr.mxu0 0.0
  %870 = vmatpush1.msra.mxu0 0.0
  %871 = vmatprep.subr.mxu0 0.0
  %872 = vmatpush1.msra.mxu0 0.0
  %873 = vmatprep.subr.mxu0 0.0
  %874 = vmatpush1.msra.mxu0 0.0
  %875 = vmatprep.subr.mxu0 0.0
  %876 = vmatpush1.msra.mxu0 0.0
  %877 = vmatprep.subr.mxu0 0.0
  %878 = vmatpush1.msra.mxu0 0.0
  %879 = vmatprep.subr.mxu0 0.0
  %880 = vmatpush1.msra.mxu0 0.0
  %881 = vmatprep.subr.mxu0 0.0
  %882 = vmatpush1.msra.mxu0 0.0
  %883 = vmatprep.subr.mxu0 0.0
  %884 = vmatpush1.msra.mxu0 0.0
  %885 = vmatprep.subr.mxu0 0.0
  %886 = vmatpush1.msra.mxu0 0.0
  %887 = vmatprep.subr.mxu0 0.0
  %888 = vmatpush1.msra.mxu0 %v268
  %889 = vmatprep.subr.mxu0 0.0
  %890 = vmatpush1.msra.mxu0 %v267
  %891 = vmatprep.subr.mxu0 0.0
  %892 = vmatpush1.msra.mxu0 %v266
  %893 = vmatprep.subr.mxu0 0.0
  %894 = vmatpush1.msra.mxu0 %v265
  %895 = vmatprep.subr.mxu0 0.0
  %896 = vmatpush2.msra.mxu0 0.0
  %897 = vmatprep.subr.mxu0 0.0
  %898 = vmatpush2.msra.mxu0 0.0
  %899 = vmatprep.subr.mxu0 0.0
  %900 = vmatpush2.msra.mxu0 0.0
  %901 = vmatprep.subr.mxu0 0.0
  %902 = vmatpush2.msra.mxu0 0.0
  %903 = vmatprep.subr.mxu0 0.0
  %904 = vmatpush2.msra.mxu0 0.0
  %905 = vmatprep.subr.mxu0 0.0
  %906 = vmatpush2.msra.mxu0 0.0
  %907 = vmatprep.subr.mxu0 0.0
  %908 = vmatpush2.msra.mxu0 0.0
  %909 = vmatprep.subr.mxu0 0.0
  %910 = vmatpush2.msra.mxu0 0.0
  %911 = vmatprep.subr.mxu0 0.0
  %912 = vmatpush2.msra.mxu0 0.0
  %913 = vmatprep.subr.mxu0 0.0
  %914 = vmatpush2.msra.mxu0 0.0
  %915 = vmatprep.subr.mxu0 0.0
  %916 = vmatpush2.msra.mxu0 0.0
  %917 = vmatprep.subr.mxu0 0.0
  %918 = vmatpush2.msra.mxu0 0.0
  %919 = vmatprep.subr.mxu0 0.0
  %920 = vmatpush2.msra.mxu0 0.0
  %921 = vmatprep.subr.mxu0 0.0
  %922 = vmatpush2.msra.mxu0 0.0
  %923 = vmatprep.subr.mxu0 0.0
  %924 = vmatpush2.msra.mxu0 0.0
  %925 = vmatprep.subr.mxu0 0.0
  %926 = vmatpush2.msra.mxu0 0.0
  %927 = vmatprep.mubr.f32.mxu0 0.0
  %928 = vmatmul.mubr.f32.gmra.mxu0 %v859
  %v929 = vpop.f32.mrf.mxu0
  %v930 = vadd.f32 0.0, %v929
  %v931 = vpop.f32.mrf.mxu0
  %932 = vmatprep.mubr.f32.mxu0 0.0
  %933 = vmatmul.mubr.f32.gmra.mxu0 %v861
  %v934 = vpop.f32.mrf.mxu0
  %v935 = vadd.f32 0.0, %v934
  %v936 = vpop.f32.mrf.mxu0
  %937 = vdwg.mxu0
  %v938 = vadd.f32 %v219, %v930
  %v939 = vadd.f32 %v225, %v935
  %v940 = vadd.f32 %v938, %v371
  %v941 = vadd.f32 %v939, %v371
  %v942 = vxor.u32 %v940, 2147483648
  %v943 = vxor.u32 %v941, 2147483648
  %v944 = vmul.f32 %v942, 1.442695
  %v945 = vpow.pop %v944
  %v946 = vmul.f32 %v943, 1.442695
  %v947 = vpow.pop %v946
  %v948 = vadd.f32 %v945, 1.0
  %v949 = vadd.f32 %v947, 1.0
  %v950 = vrcp.pop %v948
  %v951 = vmul.f32 1.0, %v950
  %v952 = vrcp.pop %v949
  %v953 = vmul.f32 1.0, %v952
  %v954 = vtanh.pop %v940
  %v955 = vtanh.pop %v941
  %v956 = vmul.f32 %v951, %v834
  %v957 = vmul.f32 %v953, %v835
  %960 = vrot.lane.b32.xlu0 %v954, 32
  %v961 = vpop.permute.xlu0 %960
  %962 = vrot.lane.b32.xlu0 %v955, 32
  %v963 = vpop.permute.xlu0 %962
  %v966 = vmul.f32 %v951, %v961
  %v967 = vmul.f32 %v953, %v963
  %970 = vrot.lane.b32.xlu0 %v966, 32
  %v971 = vpop.permute.xlu0 %970
  %972 = vrot.lane.b32.xlu0 %v967, 32
  %v973 = vpop.permute.xlu0 %972
  %v976 = vadd.f32 %v956, %v971
  %v977 = vadd.f32 %v957, %v973
  %v978 = vtanh.pop %v976
  %v979 = vtanh.pop %v977
  %982 = vrot.lane.b32.xlu0 %v978, 32
  %v983 = vpop.permute.xlu0 %982
  %984 = vrot.lane.b32.xlu0 %v979, 32
  %v985 = vpop.permute.xlu0 %984
  %v988 = vmul.f32 %v951, %v983
  %v989 = vmul.f32 %v953, %v985
  %992 = vrot.lane.b32.xlu0 %v988, 64
  %v993 = vpop.permute.xlu0 %992
  %994 = vrot.lane.b32.xlu0 %v989, 64
  %v995 = vpop.permute.xlu0 %994
  %s998 = scalar_lea.vmem [#allocation2], 64
  %999 = vst.msk [vmem:[%s998] sm:$0xff] %vm286, %v993
  %1000 = vst.msk [vmem:[%s998 + $0x8] sm:$0xff] %vm286, %v995
  %v1001 = vsel %vm286, %v993, 0
  %v1003 = vsel %vm286, %v995, 0
  %1005 = vmatprep.subr.mxu0 0.0
  %1006 = vmatpush1.msra.mxu0 0.0
  %1007 = vmatprep.subr.mxu0 0.0
  %1008 = vmatpush1.msra.mxu0 0.0
  %1009 = vmatprep.subr.mxu0 0.0
  %1010 = vmatpush1.msra.mxu0 0.0
  %1011 = vmatprep.subr.mxu0 0.0
  %1012 = vmatpush1.msra.mxu0 0.0
  %1013 = vmatprep.subr.mxu0 0.0
  %1014 = vmatpush1.msra.mxu0 0.0
  %1015 = vmatprep.subr.mxu0 0.0
  %1016 = vmatpush1.msra.mxu0 0.0
  %1017 = vmatprep.subr.mxu0 0.0
  %1018 = vmatpush1.msra.mxu0 0.0
  %1019 = vmatprep.subr.mxu0 0.0
  %1020 = vmatpush1.msra.mxu0 0.0
  %1021 = vmatprep.subr.mxu0 0.0
  %1022 = vmatpush1.msra.mxu0 0.0
  %1023 = vmatprep.subr.mxu0 0.0
  %1024 = vmatpush1.msra.mxu0 0.0
  %1025 = vmatprep.subr.mxu0 0.0
  %1026 = vmatpush1.msra.mxu0 0.0
  %1027 = vmatprep.subr.mxu0 0.0
  %1028 = vmatpush1.msra.mxu0 0.0
  %1029 = vmatprep.subr.mxu0 0.0
  %1030 = vmatpush1.msra.mxu0 %v268
  %1031 = vmatprep.subr.mxu0 0.0
  %1032 = vmatpush1.msra.mxu0 %v267
  %1033 = vmatprep.subr.mxu0 0.0
  %1034 = vmatpush1.msra.mxu0 %v266
  %1035 = vmatprep.subr.mxu0 0.0
  %1036 = vmatpush1.msra.mxu0 %v265
  %1037 = vmatprep.subr.mxu0 0.0
  %1038 = vmatpush2.msra.mxu0 0.0
  %1039 = vmatprep.subr.mxu0 0.0
  %1040 = vmatpush2.msra.mxu0 0.0
  %1041 = vmatprep.subr.mxu0 0.0
  %1042 = vmatpush2.msra.mxu0 0.0
  %1043 = vmatprep.subr.mxu0 0.0
  %1044 = vmatpush2.msra.mxu0 0.0
  %1045 = vmatprep.subr.mxu0 0.0
  %1046 = vmatpush2.msra.mxu0 0.0
  %1047 = vmatprep.subr.mxu0 0.0
  %1048 = vmatpush2.msra.mxu0 0.0
  %1049 = vmatprep.subr.mxu0 0.0
  %1050 = vmatpush2.msra.mxu0 0.0
  %1051 = vmatprep.subr.mxu0 0.0
  %1052 = vmatpush2.msra.mxu0 0.0
  %1053 = vmatprep.subr.mxu0 0.0
  %1054 = vmatpush2.msra.mxu0 0.0
  %1055 = vmatprep.subr.mxu0 0.0
  %1056 = vmatpush2.msra.mxu0 0.0
  %1057 = vmatprep.subr.mxu0 0.0
  %1058 = vmatpush2.msra.mxu0 0.0
  %1059 = vmatprep.subr.mxu0 0.0
  %1060 = vmatpush2.msra.mxu0 0.0
  %1061 = vmatprep.subr.mxu0 0.0
  %1062 = vmatpush2.msra.mxu0 0.0
  %1063 = vmatprep.subr.mxu0 0.0
  %1064 = vmatpush2.msra.mxu0 0.0
  %1065 = vmatprep.subr.mxu0 0.0
  %1066 = vmatpush2.msra.mxu0 0.0
  %1067 = vmatprep.subr.mxu0 0.0
  %1068 = vmatpush2.msra.mxu0 0.0
  %1069 = vmatprep.mubr.f32.mxu0 0.0
  %1070 = vmatmul.mubr.f32.gmra.mxu0 %v1001
  %v1071 = vpop.f32.mrf.mxu0
  %v1072 = vadd.f32 0.0, %v1071
  %v1073 = vpop.f32.mrf.mxu0
  %1074 = vmatprep.mubr.f32.mxu0 0.0
  %1075 = vmatmul.mubr.f32.gmra.mxu0 %v1003
  %v1076 = vpop.f32.mrf.mxu0
  %v1077 = vadd.f32 0.0, %v1076
  %v1078 = vpop.f32.mrf.mxu0
  %1079 = vdwg.mxu0
  %v1080 = vadd.f32 %v231, %v1072
  %v1081 = vadd.f32 %v237, %v1077
  %v1082 = vadd.f32 %v1080, %v371
  %v1083 = vadd.f32 %v1081, %v371
  %v1084 = vxor.u32 %v1082, 2147483648
  %v1085 = vxor.u32 %v1083, 2147483648
  %v1086 = vmul.f32 %v1084, 1.442695
  %v1087 = vpow.pop %v1086
  %v1088 = vmul.f32 %v1085, 1.442695
  %v1089 = vpow.pop %v1088
  %v1090 = vadd.f32 %v1087, 1.0
  %v1091 = vadd.f32 %v1089, 1.0
  %v1092 = vrcp.pop %v1090
  %v1093 = vmul.f32 1.0, %v1092
  %v1094 = vrcp.pop %v1091
  %v1095 = vmul.f32 1.0, %v1094
  %v1096 = vtanh.pop %v1082
  %v1097 = vtanh.pop %v1083
  %v1098 = vmul.f32 %v1093, %v976
  %v1099 = vmul.f32 %v1095, %v977
  %1102 = vrot.lane.b32.xlu0 %v1096, 32
  %v1103 = vpop.permute.xlu0 %1102
  %1104 = vrot.lane.b32.xlu0 %v1097, 32
  %v1105 = vpop.permute.xlu0 %1104
  %v1108 = vmul.f32 %v1093, %v1103
  %v1109 = vmul.f32 %v1095, %v1105
  %1112 = vrot.lane.b32.xlu0 %v1108, 32
  %v1113 = vpop.permute.xlu0 %1112
  %1114 = vrot.lane.b32.xlu0 %v1109, 32
  %v1115 = vpop.permute.xlu0 %1114
  %v1118 = vadd.f32 %v1098, %v1113
  %v1119 = vadd.f32 %v1099, %v1115
  %v1120 = vtanh.pop %v1118
  %v1121 = vtanh.pop %v1119
  %1124 = vrot.lane.b32.xlu0 %v1120, 32
  %v1125 = vpop.permute.xlu0 %1124
  %1126 = vrot.lane.b32.xlu0 %v1121, 32
  %v1127 = vpop.permute.xlu0 %1126
  %v1130 = vmul.f32 %v1093, %v1125
  %v1131 = vmul.f32 %v1095, %v1127
  %1134 = vrot.lane.b32.xlu0 %v1130, 64
  %v1135 = vpop.permute.xlu0 %1134
  %1136 = vrot.lane.b32.xlu0 %v1131, 64
  %v1137 = vpop.permute.xlu0 %1136
  %s1140 = scalar_lea.vmem [#allocation2], 80
  %1141 = vst.msk [vmem:[%s1140] sm:$0xff] %vm286, %v1135
  %1142 = vst.msk [vmem:[%s1140 + $0x8] sm:$0xff] %vm286, %v1137
  %v1143 = vsel %vm286, %v1135, 0
  %v1145 = vsel %vm286, %v1137, 0
  %1147 = vmatprep.subr.mxu0 0.0
  %1148 = vmatpush1.msra.mxu0 0.0
  %1149 = vmatprep.subr.mxu0 0.0
  %1150 = vmatpush1.msra.mxu0 0.0
  %1151 = vmatprep.subr.mxu0 0.0
  %1152 = vmatpush1.msra.mxu0 0.0
  %1153 = vmatprep.subr.mxu0 0.0
  %1154 = vmatpush1.msra.mxu0 0.0
  %1155 = vmatprep.subr.mxu0 0.0
  %1156 = vmatpush1.msra.mxu0 0.0
  %1157 = vmatprep.subr.mxu0 0.0
  %1158 = vmatpush1.msra.mxu0 0.0
  %1159 = vmatprep.subr.mxu0 0.0
  %1160 = vmatpush1.msra.mxu0 0.0
  %1161 = vmatprep.subr.mxu0 0.0
  %1162 = vmatpush1.msra.mxu0 0.0
  %1163 = vmatprep.subr.mxu0 0.0
  %1164 = vmatpush1.msra.mxu0 0.0
  %1165 = vmatprep.subr.mxu0 0.0
  %1166 = vmatpush1.msra.mxu0 0.0
  %1167 = vmatprep.subr.mxu0 0.0
  %1168 = vmatpush1.msra.mxu0 0.0
  %1169 = vmatprep.subr.mxu0 0.0
  %1170 = vmatpush1.msra.mxu0 0.0
  %1171 = vmatprep.subr.mxu0 0.0
  %1172 = vmatpush1.msra.mxu0 %v268
  %1173 = vmatprep.subr.mxu0 0.0
  %1174 = vmatpush1.msra.mxu0 %v267
  %1175 = vmatprep.subr.mxu0 0.0
  %1176 = vmatpush1.msra.mxu0 %v266
  %1177 = vmatprep.subr.mxu0 0.0
  %1178 = vmatpush1.msra.mxu0 %v265
  %1179 = vmatprep.subr.mxu0 0.0
  %1180 = vmatpush2.msra.mxu0 0.0
  %1181 = vmatprep.subr.mxu0 0.0
  %1182 = vmatpush2.msra.mxu0 0.0
  %1183 = vmatprep.subr.mxu0 0.0
  %1184 = vmatpush2.msra.mxu0 0.0
  %1185 = vmatprep.subr.mxu0 0.0
  %1186 = vmatpush2.msra.mxu0 0.0
  %1187 = vmatprep.subr.mxu0 0.0
  %1188 = vmatpush2.msra.mxu0 0.0
  %1189 = vmatprep.subr.mxu0 0.0
  %1190 = vmatpush2.msra.mxu0 0.0
  %1191 = vmatprep.subr.mxu0 0.0
  %1192 = vmatpush2.msra.mxu0 0.0
  %1193 = vmatprep.subr.mxu0 0.0
  %1194 = vmatpush2.msra.mxu0 0.0
  %1195 = vmatprep.subr.mxu0 0.0
  %1196 = vmatpush2.msra.mxu0 0.0
  %1197 = vmatprep.subr.mxu0 0.0
  %1198 = vmatpush2.msra.mxu0 0.0
  %1199 = vmatprep.subr.mxu0 0.0
  %1200 = vmatpush2.msra.mxu0 0.0
  %1201 = vmatprep.subr.mxu0 0.0
  %1202 = vmatpush2.msra.mxu0 0.0
  %1203 = vmatprep.subr.mxu0 0.0
  %1204 = vmatpush2.msra.mxu0 0.0
  %1205 = vmatprep.subr.mxu0 0.0
  %1206 = vmatpush2.msra.mxu0 0.0
  %1207 = vmatprep.subr.mxu0 0.0
  %1208 = vmatpush2.msra.mxu0 0.0
  %1209 = vmatprep.subr.mxu0 0.0
  %1210 = vmatpush2.msra.mxu0 0.0
  %1211 = vmatprep.mubr.f32.mxu0 0.0
  %1212 = vmatmul.mubr.f32.gmra.mxu0 %v1143
  %v1213 = vpop.f32.mrf.mxu0
  %v1214 = vadd.f32 0.0, %v1213
  %v1215 = vpop.f32.mrf.mxu0
  %1216 = vmatprep.mubr.f32.mxu0 0.0
  %1217 = vmatmul.mubr.f32.gmra.mxu0 %v1145
  %v1218 = vpop.f32.mrf.mxu0
  %v1219 = vadd.f32 0.0, %v1218
  %v1220 = vpop.f32.mrf.mxu0
  %1221 = vdwg.mxu0
  %v1222 = vadd.f32 %v243, %v1214
  %v1223 = vadd.f32 %v249, %v1219
  %v1224 = vadd.f32 %v1222, %v371
  %v1225 = vadd.f32 %v1223, %v371
  %v1226 = vxor.u32 %v1224, 2147483648
  %v1227 = vxor.u32 %v1225, 2147483648
  %v1228 = vmul.f32 %v1226, 1.442695
  %v1229 = vpow.pop %v1228
  %v1230 = vmul.f32 %v1227, 1.442695
  %v1231 = vpow.pop %v1230
  %v1232 = vadd.f32 %v1229, 1.0
  %v1233 = vadd.f32 %v1231, 1.0
  %v1234 = vrcp.pop %v1232
  %v1235 = vmul.f32 1.0, %v1234
  %v1236 = vrcp.pop %v1233
  %v1237 = vmul.f32 1.0, %v1236
  %v1238 = vtanh.pop %v1224
  %v1239 = vtanh.pop %v1225
  %v1240 = vmul.f32 %v1235, %v1118
  %v1241 = vmul.f32 %v1237, %v1119
  %1244 = vrot.lane.b32.xlu0 %v1238, 32
  %v1245 = vpop.permute.xlu0 %1244
  %1246 = vrot.lane.b32.xlu0 %v1239, 32
  %v1247 = vpop.permute.xlu0 %1246
  %v1250 = vmul.f32 %v1235, %v1245
  %v1251 = vmul.f32 %v1237, %v1247
  %1254 = vrot.lane.b32.xlu0 %v1250, 32
  %v1255 = vpop.permute.xlu0 %1254
  %1256 = vrot.lane.b32.xlu0 %v1251, 32
  %v1257 = vpop.permute.xlu0 %1256
  %v1260 = vadd.f32 %v1240, %v1255
  %v1261 = vadd.f32 %v1241, %v1257
  %v1262 = vtanh.pop %v1260
  %v1263 = vtanh.pop %v1261
  %1266 = vrot.lane.b32.xlu0 %v1262, 32
  %v1267 = vpop.permute.xlu0 %1266
  %1268 = vrot.lane.b32.xlu0 %v1263, 32
  %v1269 = vpop.permute.xlu0 %1268
  %v1272 = vmul.f32 %v1235, %v1267
  %v1273 = vmul.f32 %v1237, %v1269
  %1276 = vrot.lane.b32.xlu0 %v1272, 64
  %v1277 = vpop.permute.xlu0 %1276
  %1278 = vrot.lane.b32.xlu0 %v1273, 64
  %v1279 = vpop.permute.xlu0 %1278
  %s1282 = scalar_lea.vmem [#allocation2], 96
  %1283 = vst.msk [vmem:[%s1282] sm:$0xff] %vm286, %v1277
  %1284 = vst.msk [vmem:[%s1282 + $0x8] sm:$0xff] %vm286, %v1279
  %v1285 = vsel %vm286, %v1277, 0
  %v1287 = vsel %vm286, %v1279, 0
  %1289 = vmatprep.subr.mxu0 0.0
  %1290 = vmatpush1.msra.mxu0 0.0
  %1291 = vmatprep.subr.mxu0 0.0
  %1292 = vmatpush1.msra.mxu0 0.0
  %1293 = vmatprep.subr.mxu0 0.0
  %1294 = vmatpush1.msra.mxu0 0.0
  %1295 = vmatprep.subr.mxu0 0.0
  %1296 = vmatpush1.msra.mxu0 0.0
  %1297 = vmatprep.subr.mxu0 0.0
  %1298 = vmatpush1.msra.mxu0 0.0
  %1299 = vmatprep.subr.mxu0 0.0
  %1300 = vmatpush1.msra.mxu0 0.0
  %1301 = vmatprep.subr.mxu0 0.0
  %1302 = vmatpush1.msra.mxu0 0.0
  %1303 = vmatprep.subr.mxu0 0.0
  %1304 = vmatpush1.msra.mxu0 0.0
  %1305 = vmatprep.subr.mxu0 0.0
  %1306 = vmatpush1.msra.mxu0 0.0
  %1307 = vmatprep.subr.mxu0 0.0
  %1308 = vmatpush1.msra.mxu0 0.0
  %1309 = vmatprep.subr.mxu0 0.0
  %1310 = vmatpush1.msra.mxu0 0.0
  %1311 = vmatprep.subr.mxu0 0.0
  %1312 = vmatpush1.msra.mxu0 0.0
  %1313 = vmatprep.subr.mxu0 0.0
  %1314 = vmatpush1.msra.mxu0 %v268
  %1315 = vmatprep.subr.mxu0 0.0
  %1316 = vmatpush1.msra.mxu0 %v267
  %1317 = vmatprep.subr.mxu0 0.0
  %1318 = vmatpush1.msra.mxu0 %v266
  %1319 = vmatprep.subr.mxu0 0.0
  %1320 = vmatpush1.msra.mxu0 %v265
  %1321 = vmatprep.subr.mxu0 0.0
  %1322 = vmatpush2.msra.mxu0 0.0
  %1323 = vmatprep.subr.mxu0 0.0
  %1324 = vmatpush2.msra.mxu0 0.0
  %1325 = vmatprep.subr.mxu0 0.0
  %1326 = vmatpush2.msra.mxu0 0.0
  %1327 = vmatprep.subr.mxu0 0.0
  %1328 = vmatpush2.msra.mxu0 0.0
  %1329 = vmatprep.subr.mxu0 0.0
  %1330 = vmatpush2.msra.mxu0 0.0
  %1331 = vmatprep.subr.mxu0 0.0
  %1332 = vmatpush2.msra.mxu0 0.0
  %1333 = vmatprep.subr.mxu0 0.0
  %1334 = vmatpush2.msra.mxu0 0.0
  %1335 = vmatprep.subr.mxu0 0.0
  %1336 = vmatpush2.msra.mxu0 0.0
  %1337 = vmatprep.subr.mxu0 0.0
  %1338 = vmatpush2.msra.mxu0 0.0
  %1339 = vmatprep.subr.mxu0 0.0
  %1340 = vmatpush2.msra.mxu0 0.0
  %1341 = vmatprep.subr.mxu0 0.0
  %1342 = vmatpush2.msra.mxu0 0.0
  %1343 = vmatprep.subr.mxu0 0.0
  %1344 = vmatpush2.msra.mxu0 0.0
  %1345 = vmatprep.subr.mxu0 0.0
  %1346 = vmatpush2.msra.mxu0 0.0
  %1347 = vmatprep.subr.mxu0 0.0
  %1348 = vmatpush2.msra.mxu0 0.0
  %1349 = vmatprep.subr.mxu0 0.0
  %1350 = vmatpush2.msra.mxu0 0.0
  %1351 = vmatprep.subr.mxu0 0.0
  %1352 = vmatpush2.msra.mxu0 0.0
  %1353 = vmatprep.mubr.f32.mxu0 0.0
  %1354 = vmatmul.mubr.f32.gmra.mxu0 %v1285
  %v1355 = vpop.f32.mrf.mxu0
  %v1356 = vadd.f32 0.0, %v1355
  %v1357 = vpop.f32.mrf.mxu0
  %1358 = vmatprep.mubr.f32.mxu0 0.0
  %1359 = vmatmul.mubr.f32.gmra.mxu0 %v1287
  %v1360 = vpop.f32.mrf.mxu0
  %v1361 = vadd.f32 0.0, %v1360
  %v1362 = vpop.f32.mrf.mxu0
  %1363 = vdwg.mxu0
  %v1364 = vadd.f32 %v255, %v1356
  %v1365 = vadd.f32 %v261, %v1361
  %v1366 = vadd.f32 %v1364, %v371
  %v1367 = vadd.f32 %v1365, %v371
  %v1368 = vxor.u32 %v1366, 2147483648
  %v1369 = vxor.u32 %v1367, 2147483648
  %v1370 = vmul.f32 %v1368, 1.442695
  %v1371 = vpow.pop %v1370
  %v1372 = vmul.f32 %v1369, 1.442695
  %v1373 = vpow.pop %v1372
  %v1374 = vadd.f32 %v1371, 1.0
  %v1375 = vadd.f32 %v1373, 1.0
  %v1376 = vrcp.pop %v1374
  %v1377 = vmul.f32 1.0, %v1376
  %v1378 = vrcp.pop %v1375
  %v1379 = vmul.f32 1.0, %v1378
  %v1380 = vtanh.pop %v1366
  %v1381 = vtanh.pop %v1367
  %v1382 = vmul.f32 %v1377, %v1260
  %v1383 = vmul.f32 %v1379, %v1261
  %1386 = vrot.lane.b32.xlu0 %v1380, 32
  %v1387 = vpop.permute.xlu0 %1386
  %1388 = vrot.lane.b32.xlu0 %v1381, 32
  %v1389 = vpop.permute.xlu0 %1388
  %v1392 = vmul.f32 %v1377, %v1387
  %v1393 = vmul.f32 %v1379, %v1389
  %1396 = vrot.lane.b32.xlu0 %v1392, 32
  %v1397 = vpop.permute.xlu0 %1396
  %1398 = vrot.lane.b32.xlu0 %v1393, 32
  %v1399 = vpop.permute.xlu0 %1398
  %v1402 = vadd.f32 %v1382, %v1397
  %v1403 = vadd.f32 %v1383, %v1399
  %v1404 = vtanh.pop %v1402
  %v1405 = vtanh.pop %v1403
  %1408 = vrot.lane.b32.xlu0 %v1404, 32
  %v1409 = vpop.permute.xlu0 %1408
  %1410 = vrot.lane.b32.xlu0 %v1405, 32
  %v1411 = vpop.permute.xlu0 %1410
  %v1414 = vmul.f32 %v1377, %v1409
  %v1415 = vmul.f32 %v1379, %v1411
  %1418 = vrot.lane.b32.xlu0 %v1414, 64
  %v1419 = vpop.permute.xlu0 %1418
  %1420 = vrot.lane.b32.xlu0 %v1415, 64
  %v1421 = vpop.permute.xlu0 %1420
  %s1424 = scalar_lea.vmem [#allocation2], 112
  %1425 = vst.msk [vmem:[%s1424] sm:$0xff] %vm286, %v1419
  %1426 = vst.msk [vmem:[%s1424 + $0x8] sm:$0xff] %vm286, %v1421
  %1427 = vmatprep.subr.mxu0 0.0
  %1428 = vmatpush1.msra.mxu0 0.0
  %1429 = vmatprep.subr.mxu0 0.0
  %1430 = vmatpush1.msra.mxu0 0.0
  %1431 = vmatprep.subr.mxu0 0.0
  %1432 = vmatpush1.msra.mxu0 0.0
  %1433 = vmatprep.subr.mxu0 0.0
  %1434 = vmatpush1.msra.mxu0 0.0
  %1435 = vmatprep.subr.mxu0 0.0
  %1436 = vmatpush1.msra.mxu0 0.0
  %1437 = vmatprep.subr.mxu0 0.0
  %1438 = vmatpush1.msra.mxu0 0.0
  %1439 = vmatprep.subr.mxu0 0.0
  %1440 = vmatpush1.msra.mxu0 0.0
  %1441 = vmatprep.subr.mxu0 0.0
  %1442 = vmatpush1.msra.mxu0 0.0
  %1443 = vmatprep.subr.mxu0 0.0
  %1444 = vmatpush1.msra.mxu0 0.0
  %1445 = vmatprep.subr.mxu0 0.0
  %1446 = vmatpush1.msra.mxu0 0.0
  %1447 = vmatprep.subr.mxu0 0.0
  %1448 = vmatpush1.msra.mxu0 0.0
  %1449 = vmatprep.subr.mxu0 0.0
  %1450 = vmatpush1.msra.mxu0 0.0
  %1451 = vmatprep.subr.mxu0 0.0
  %1452 = vmatpush1.msra.mxu0 %v272
  %1453 = vmatprep.subr.mxu0 0.0
  %1454 = vmatpush1.msra.mxu0 %v271
  %1455 = vmatprep.subr.mxu0 0.0
  %1456 = vmatpush1.msra.mxu0 %v270
  %1457 = vmatprep.subr.mxu0 0.0
  %1458 = vmatpush1.msra.mxu0 %v269
  %1459 = vmatprep.subr.mxu0 0.0
  %1460 = vmatpush2.msra.mxu0 0.0
  %1461 = vmatprep.subr.mxu0 0.0
  %1462 = vmatpush2.msra.mxu0 0.0
  %1463 = vmatprep.subr.mxu0 0.0
  %1464 = vmatpush2.msra.mxu0 0.0
  %1465 = vmatprep.subr.mxu0 0.0
  %1466 = vmatpush2.msra.mxu0 0.0
  %1467 = vmatprep.subr.mxu0 0.0
  %1468 = vmatpush2.msra.mxu0 0.0
  %1469 = vmatprep.subr.mxu0 0.0
  %1470 = vmatpush2.msra.mxu0 0.0
  %1471 = vmatprep.subr.mxu0 0.0
  %1472 = vmatpush2.msra.mxu0 0.0
  %1473 = vmatprep.subr.mxu0 0.0
  %1474 = vmatpush2.msra.mxu0 0.0
  %1475 = vmatprep.subr.mxu0 0.0
  %1476 = vmatpush2.msra.mxu0 0.0
  %1477 = vmatprep.subr.mxu0 0.0
  %1478 = vmatpush2.msra.mxu0 0.0
  %1479 = vmatprep.subr.mxu0 0.0
  %1480 = vmatpush2.msra.mxu0 0.0
  %1481 = vmatprep.subr.mxu0 0.0
  %1482 = vmatpush2.msra.mxu0 0.0
  %1483 = vmatprep.subr.mxu0 0.0
  %1484 = vmatpush2.msra.mxu0 0.0
  %1485 = vmatprep.subr.mxu0 0.0
  %1486 = vmatpush2.msra.mxu0 0.0
  %1487 = vmatprep.subr.mxu0 0.0
  %1488 = vmatpush2.msra.mxu0 0.0
  %1489 = vmatprep.subr.mxu0 0.0
  %1490 = vmatpush2.msra.mxu0 0.0
  %1491 = vmatprep.mubr.f32.mxu0 0.0
  %1492 = vmatmul.mubr.f32.gmra.mxu0 %v288
  %v1493 = vpop.f32.mrf.mxu0
  %v1494 = vadd.f32 0.0, %v1493
  %v1495 = vpop.f32.mrf.mxu0
  %1496 = vmatprep.mubr.f32.mxu0 0.0
  %1497 = vmatmul.mubr.f32.gmra.mxu0 %v288
  %v1498 = vpop.f32.mrf.mxu0
  %v1499 = vadd.f32 0.0, %v1498
  %v1500 = vpop.f32.mrf.mxu0
  %1501 = vdwg.mxu0
  %v1502 = vadd.f32 %v257, %v1494
  %v1503 = vadd.f32 %v263, %v1499
  %v1505 = vlaneseq
  %v1506 = vshrl.u32 %v1505, 7
  %v1507 = vsub.s32 0, %v1506
  %v1508 = vrot.slane %v274, %v1507
  %v1510 = vadd.f32 %v1502, %v1508
  %v1511 = vadd.f32 %v1503, %v1508
  %v1512 = vxor.u32 %v1510, 2147483648
  %v1513 = vxor.u32 %v1511, 2147483648
  %v1514 = vmul.f32 %v1512, 1.442695
  %v1515 = vpow.pop %v1514
  %v1516 = vmul.f32 %v1513, 1.442695
  %v1517 = vpow.pop %v1516
  %v1518 = vadd.f32 %v1515, 1.0
  %v1519 = vadd.f32 %v1517, 1.0
  %v1520 = vrcp.pop %v1518
  %v1521 = vmul.f32 1.0, %v1520
  %v1522 = vrcp.pop %v1519
  %v1523 = vmul.f32 1.0, %v1522
  %v1524 = vtanh.pop %v1510
  %v1525 = vtanh.pop %v1511
  %v1526 = vmul.f32 %v1521, 0.0
  %v1527 = vmul.f32 %v1523, 0.0
  %1530 = vrot.lane.b32.xlu0 %v1524, 32
  %v1531 = vpop.permute.xlu0 %1530
  %1532 = vrot.lane.b32.xlu0 %v1525, 32
  %v1533 = vpop.permute.xlu0 %1532
  %v1536 = vmul.f32 %v1521, %v1531
  %v1537 = vmul.f32 %v1523, %v1533
  %1540 = vrot.lane.b32.xlu0 %v1536, 32
  %v1541 = vpop.permute.xlu0 %1540
  %1542 = vrot.lane.b32.xlu0 %v1537, 32
  %v1543 = vpop.permute.xlu0 %1542
  %v1546 = vadd.f32 %v1526, %v1541
  %v1547 = vadd.f32 %v1527, %v1543
  %v1548 = vtanh.pop %v1546
  %v1549 = vtanh.pop %v1547
  %1552 = vrot.lane.b32.xlu0 %v1548, 32
  %v1553 = vpop.permute.xlu0 %1552
  %1554 = vrot.lane.b32.xlu0 %v1549, 32
  %v1555 = vpop.permute.xlu0 %1554
  %v1558 = vmul.f32 %v1521, %v1553
  %v1559 = vmul.f32 %v1523, %v1555
  %1562 = vrot.lane.b32.xlu0 %v1558, 64
  %v1563 = vpop.permute.xlu0 %1562
  %1564 = vrot.lane.b32.xlu0 %v1559, 64
  %v1565 = vpop.permute.xlu0 %1564
  %s1568 = scalar_lea.vmem [#allocation2], 240
  %1569 = vst.msk [vmem:[%s1568] sm:$0xff] %vm286, %v1563
  %1570 = vst.msk [vmem:[%s1568 + $0x8] sm:$0xff] %vm286, %v1565
  %v1571 = vsel %vm286, %v1563, 0
  %v1573 = vsel %vm286, %v1565, 0
  %1575 = vmatprep.subr.mxu0 0.0
  %1576 = vmatpush1.msra.mxu0 0.0
  %1577 = vmatprep.subr.mxu0 0.0
  %1578 = vmatpush1.msra.mxu0 0.0
  %1579 = vmatprep.subr.mxu0 0.0
  %1580 = vmatpush1.msra.mxu0 0.0
  %1581 = vmatprep.subr.mxu0 0.0
  %1582 = vmatpush1.msra.mxu0 0.0
  %1583 = vmatprep.subr.mxu0 0.0
  %1584 = vmatpush1.msra.mxu0 0.0
  %1585 = vmatprep.subr.mxu0 0.0
  %1586 = vmatpush1.msra.mxu0 0.0
  %1587 = vmatprep.subr.mxu0 0.0
  %1588 = vmatpush1.msra.mxu0 0.0
  %1589 = vmatprep.subr.mxu0 0.0
  %1590 = vmatpush1.msra.mxu0 0.0
  %1591 = vmatprep.subr.mxu0 0.0
  %1592 = vmatpush1.msra.mxu0 0.0
  %1593 = vmatprep.subr.mxu0 0.0
  %1594 = vmatpush1.msra.mxu0 0.0
  %1595 = vmatprep.subr.mxu0 0.0
  %1596 = vmatpush1.msra.mxu0 0.0
  %1597 = vmatprep.subr.mxu0 0.0
  %1598 = vmatpush1.msra.mxu0 0.0
  %1599 = vmatprep.subr.mxu0 0.0
  %1600 = vmatpush1.msra.mxu0 %v272
  %1601 = vmatprep.subr.mxu0 0.0
  %1602 = vmatpush1.msra.mxu0 %v271
  %1603 = vmatprep.subr.mxu0 0.0
  %1604 = vmatpush1.msra.mxu0 %v270
  %1605 = vmatprep.subr.mxu0 0.0
  %1606 = vmatpush1.msra.mxu0 %v269
  %1607 = vmatprep.subr.mxu0 0.0
  %1608 = vmatpush2.msra.mxu0 0.0
  %1609 = vmatprep.subr.mxu0 0.0
  %1610 = vmatpush2.msra.mxu0 0.0
  %1611 = vmatprep.subr.mxu0 0.0
  %1612 = vmatpush2.msra.mxu0 0.0
  %1613 = vmatprep.subr.mxu0 0.0
  %1614 = vmatpush2.msra.mxu0 0.0
  %1615 = vmatprep.subr.mxu0 0.0
  %1616 = vmatpush2.msra.mxu0 0.0
  %1617 = vmatprep.subr.mxu0 0.0
  %1618 = vmatpush2.msra.mxu0 0.0
  %1619 = vmatprep.subr.mxu0 0.0
  %1620 = vmatpush2.msra.mxu0 0.0
  %1621 = vmatprep.subr.mxu0 0.0
  %1622 = vmatpush2.msra.mxu0 0.0
  %1623 = vmatprep.subr.mxu0 0.0
  %1624 = vmatpush2.msra.mxu0 0.0
  %1625 = vmatprep.subr.mxu0 0.0
  %1626 = vmatpush2.msra.mxu0 0.0
  %1627 = vmatprep.subr.mxu0 0.0
  %1628 = vmatpush2.msra.mxu0 0.0
  %1629 = vmatprep.subr.mxu0 0.0
  %1630 = vmatpush2.msra.mxu0 0.0
  %1631 = vmatprep.subr.mxu0 0.0
  %1632 = vmatpush2.msra.mxu0 0.0
  %1633 = vmatprep.subr.mxu0 0.0
  %1634 = vmatpush2.msra.mxu0 0.0
  %1635 = vmatprep.subr.mxu0 0.0
  %1636 = vmatpush2.msra.mxu0 0.0
  %1637 = vmatprep.subr.mxu0 0.0
  %1638 = vmatpush2.msra.mxu0 0.0
  %1639 = vmatprep.mubr.f32.mxu0 0.0
  %1640 = vmatmul.mubr.f32.gmra.mxu0 %v1571
  %v1641 = vpop.f32.mrf.mxu0
  %v1642 = vadd.f32 0.0, %v1641
  %v1643 = vpop.f32.mrf.mxu0
  %1644 = vmatprep.mubr.f32.mxu0 0.0
  %1645 = vmatmul.mubr.f32.gmra.mxu0 %v1573
  %v1646 = vpop.f32.mrf.mxu0
  %v1647 = vadd.f32 0.0, %v1646
  %v1648 = vpop.f32.mrf.mxu0
  %1649 = vdwg.mxu0
  %v1650 = vadd.f32 %v245, %v1642
  %v1651 = vadd.f32 %v251, %v1647
  %v1652 = vadd.f32 %v1650, %v1508
  %v1653 = vadd.f32 %v1651, %v1508
  %v1654 = vxor.u32 %v1652, 2147483648
  %v1655 = vxor.u32 %v1653, 2147483648
  %v1656 = vmul.f32 %v1654, 1.442695
  %v1657 = vpow.pop %v1656
  %v1658 = vmul.f32 %v1655, 1.442695
  %v1659 = vpow.pop %v1658
  %v1660 = vadd.f32 %v1657, 1.0
  %v1661 = vadd.f32 %v1659, 1.0
  %v1662 = vrcp.pop %v1660
  %v1663 = vmul.f32 1.0, %v1662
  %v1664 = vrcp.pop %v1661
  %v1665 = vmul.f32 1.0, %v1664
  %v1666 = vtanh.pop %v1652
  %v1667 = vtanh.pop %v1653
  %v1668 = vmul.f32 %v1663, %v1546
  %v1669 = vmul.f32 %v1665, %v1547
  %1672 = vrot.lane.b32.xlu0 %v1666, 32
  %v1673 = vpop.permute.xlu0 %1672
  %1674 = vrot.lane.b32.xlu0 %v1667, 32
  %v1675 = vpop.permute.xlu0 %1674
  %v1678 = vmul.f32 %v1663, %v1673
  %v1679 = vmul.f32 %v1665, %v1675
  %1682 = vrot.lane.b32.xlu0 %v1678, 32
  %v1683 = vpop.permute.xlu0 %1682
  %1684 = vrot.lane.b32.xlu0 %v1679, 32
  %v1685 = vpop.permute.xlu0 %1684
  %v1688 = vadd.f32 %v1668, %v1683
  %v1689 = vadd.f32 %v1669, %v1685
  %v1690 = vtanh.pop %v1688
  %v1691 = vtanh.pop %v1689
  %1694 = vrot.lane.b32.xlu0 %v1690, 32
  %v1695 = vpop.permute.xlu0 %1694
  %1696 = vrot.lane.b32.xlu0 %v1691, 32
  %v1697 = vpop.permute.xlu0 %1696
  %v1700 = vmul.f32 %v1663, %v1695
  %v1701 = vmul.f32 %v1665, %v1697
  %1704 = vrot.lane.b32.xlu0 %v1700, 64
  %v1705 = vpop.permute.xlu0 %1704
  %1706 = vrot.lane.b32.xlu0 %v1701, 64
  %v1707 = vpop.permute.xlu0 %1706
  %s1710 = scalar_lea.vmem [#allocation2], 224
  %1711 = vst.msk [vmem:[%s1710] sm:$0xff] %vm286, %v1705
  %1712 = vst.msk [vmem:[%s1710 + $0x8] sm:$0xff] %vm286, %v1707
  %v1713 = vsel %vm286, %v1705, 0
  %v1715 = vsel %vm286, %v1707, 0
  %1717 = vmatprep.subr.mxu0 0.0
  %1718 = vmatpush1.msra.mxu0 0.0
  %1719 = vmatprep.subr.mxu0 0.0
  %1720 = vmatpush1.msra.mxu0 0.0
  %1721 = vmatprep.subr.mxu0 0.0
  %1722 = vmatpush1.msra.mxu0 0.0
  %1723 = vmatprep.subr.mxu0 0.0
  %1724 = vmatpush1.msra.mxu0 0.0
  %1725 = vmatprep.subr.mxu0 0.0
  %1726 = vmatpush1.msra.mxu0 0.0
  %1727 = vmatprep.subr.mxu0 0.0
  %1728 = vmatpush1.msra.mxu0 0.0
  %1729 = vmatprep.subr.mxu0 0.0
  %1730 = vmatpush1.msra.mxu0 0.0
  %1731 = vmatprep.subr.mxu0 0.0
  %1732 = vmatpush1.msra.mxu0 0.0
  %1733 = vmatprep.subr.mxu0 0.0
  %1734 = vmatpush1.msra.mxu0 0.0
  %1735 = vmatprep.subr.mxu0 0.0
  %1736 = vmatpush1.msra.mxu0 0.0
  %1737 = vmatprep.subr.mxu0 0.0
  %1738 = vmatpush1.msra.mxu0 0.0
  %1739 = vmatprep.subr.mxu0 0.0
  %1740 = vmatpush1.msra.mxu0 0.0
  %1741 = vmatprep.subr.mxu0 0.0
  %1742 = vmatpush1.msra.mxu0 %v272
  %1743 = vmatprep.subr.mxu0 0.0
  %1744 = vmatpush1.msra.mxu0 %v271
  %1745 = vmatprep.subr.mxu0 0.0
  %1746 = vmatpush1.msra.mxu0 %v270
  %1747 = vmatprep.subr.mxu0 0.0
  %1748 = vmatpush1.msra.mxu0 %v269
  %1749 = vmatprep.subr.mxu0 0.0
  %1750 = vmatpush2.msra.mxu0 0.0
  %1751 = vmatprep.subr.mxu0 0.0
  %1752 = vmatpush2.msra.mxu0 0.0
  %1753 = vmatprep.subr.mxu0 0.0
  %1754 = vmatpush2.msra.mxu0 0.0
  %1755 = vmatprep.subr.mxu0 0.0
  %1756 = vmatpush2.msra.mxu0 0.0
  %1757 = vmatprep.subr.mxu0 0.0
  %1758 = vmatpush2.msra.mxu0 0.0
  %1759 = vmatprep.subr.mxu0 0.0
  %1760 = vmatpush2.msra.mxu0 0.0
  %1761 = vmatprep.subr.mxu0 0.0
  %1762 = vmatpush2.msra.mxu0 0.0
  %1763 = vmatprep.subr.mxu0 0.0
  %1764 = vmatpush2.msra.mxu0 0.0
  %1765 = vmatprep.subr.mxu0 0.0
  %1766 = vmatpush2.msra.mxu0 0.0
  %1767 = vmatprep.subr.mxu0 0.0
  %1768 = vmatpush2.msra.mxu0 0.0
  %1769 = vmatprep.subr.mxu0 0.0
  %1770 = vmatpush2.msra.mxu0 0.0
  %1771 = vmatprep.subr.mxu0 0.0
  %1772 = vmatpush2.msra.mxu0 0.0
  %1773 = vmatprep.subr.mxu0 0.0
  %1774 = vmatpush2.msra.mxu0 0.0
  %1775 = vmatprep.subr.mxu0 0.0
  %1776 = vmatpush2.msra.mxu0 0.0
  %1777 = vmatprep.subr.mxu0 0.0
  %1778 = vmatpush2.msra.mxu0 0.0
  %1779 = vmatprep.subr.mxu0 0.0
  %1780 = vmatpush2.msra.mxu0 0.0
  %1781 = vmatprep.mubr.f32.mxu0 0.0
  %1782 = vmatmul.mubr.f32.gmra.mxu0 %v1713
  %v1783 = vpop.f32.mrf.mxu0
  %v1784 = vadd.f32 0.0, %v1783
  %v1785 = vpop.f32.mrf.mxu0
  %1786 = vmatprep.mubr.f32.mxu0 0.0
  %1787 = vmatmul.mubr.f32.gmra.mxu0 %v1715
  %v1788 = vpop.f32.mrf.mxu0
  %v1789 = vadd.f32 0.0, %v1788
  %v1790 = vpop.f32.mrf.mxu0
  %1791 = vdwg.mxu0
  %v1792 = vadd.f32 %v233, %v1784
  %v1793 = vadd.f32 %v239, %v1789
  %v1794 = vadd.f32 %v1792, %v1508
  %v1795 = vadd.f32 %v1793, %v1508
  %v1796 = vxor.u32 %v1794, 2147483648
  %v1797 = vxor.u32 %v1795, 2147483648
  %v1798 = vmul.f32 %v1796, 1.442695
  %v1799 = vpow.pop %v1798
  %v1800 = vmul.f32 %v1797, 1.442695
  %v1801 = vpow.pop %v1800
  %v1802 = vadd.f32 %v1799, 1.0
  %v1803 = vadd.f32 %v1801, 1.0
  %v1804 = vrcp.pop %v1802
  %v1805 = vmul.f32 1.0, %v1804
  %v1806 = vrcp.pop %v1803
  %v1807 = vmul.f32 1.0, %v1806
  %v1808 = vtanh.pop %v1794
  %v1809 = vtanh.pop %v1795
  %v1810 = vmul.f32 %v1805, %v1688
  %v1811 = vmul.f32 %v1807, %v1689
  %1814 = vrot.lane.b32.xlu0 %v1808, 32
  %v1815 = vpop.permute.xlu0 %1814
  %1816 = vrot.lane.b32.xlu0 %v1809, 32
  %v1817 = vpop.permute.xlu0 %1816
  %v1820 = vmul.f32 %v1805, %v1815
  %v1821 = vmul.f32 %v1807, %v1817
  %1824 = vrot.lane.b32.xlu0 %v1820, 32
  %v1825 = vpop.permute.xlu0 %1824
  %1826 = vrot.lane.b32.xlu0 %v1821, 32
  %v1827 = vpop.permute.xlu0 %1826
  %v1830 = vadd.f32 %v1810, %v1825
  %v1831 = vadd.f32 %v1811, %v1827
  %v1832 = vtanh.pop %v1830
  %v1833 = vtanh.pop %v1831
  %1836 = vrot.lane.b32.xlu0 %v1832, 32
  %v1837 = vpop.permute.xlu0 %1836
  %1838 = vrot.lane.b32.xlu0 %v1833, 32
  %v1839 = vpop.permute.xlu0 %1838
  %v1842 = vmul.f32 %v1805, %v1837
  %v1843 = vmul.f32 %v1807, %v1839
  %1846 = vrot.lane.b32.xlu0 %v1842, 64
  %v1847 = vpop.permute.xlu0 %1846
  %1848 = vrot.lane.b32.xlu0 %v1843, 64
  %v1849 = vpop.permute.xlu0 %1848
  %s1852 = scalar_lea.vmem [#allocation2], 208
  %1853 = vst.msk [vmem:[%s1852] sm:$0xff] %vm286, %v1847
  %1854 = vst.msk [vmem:[%s1852 + $0x8] sm:$0xff] %vm286, %v1849
  %v1855 = vsel %vm286, %v1847, 0
  %v1857 = vsel %vm286, %v1849, 0
  %1859 = vmatprep.subr.mxu0 0.0
  %1860 = vmatpush1.msra.mxu0 0.0
  %1861 = vmatprep.subr.mxu0 0.0
  %1862 = vmatpush1.msra.mxu0 0.0
  %1863 = vmatprep.subr.mxu0 0.0
  %1864 = vmatpush1.msra.mxu0 0.0
  %1865 = vmatprep.subr.mxu0 0.0
  %1866 = vmatpush1.msra.mxu0 0.0
  %1867 = vmatprep.subr.mxu0 0.0
  %1868 = vmatpush1.msra.mxu0 0.0
  %1869 = vmatprep.subr.mxu0 0.0
  %1870 = vmatpush1.msra.mxu0 0.0
  %1871 = vmatprep.subr.mxu0 0.0
  %1872 = vmatpush1.msra.mxu0 0.0
  %1873 = vmatprep.subr.mxu0 0.0
  %1874 = vmatpush1.msra.mxu0 0.0
  %1875 = vmatprep.subr.mxu0 0.0
  %1876 = vmatpush1.msra.mxu0 0.0
  %1877 = vmatprep.subr.mxu0 0.0
  %1878 = vmatpush1.msra.mxu0 0.0
  %1879 = vmatprep.subr.mxu0 0.0
  %1880 = vmatpush1.msra.mxu0 0.0
  %1881 = vmatprep.subr.mxu0 0.0
  %1882 = vmatpush1.msra.mxu0 0.0
  %1883 = vmatprep.subr.mxu0 0.0
  %1884 = vmatpush1.msra.mxu0 %v272
  %1885 = vmatprep.subr.mxu0 0.0
  %1886 = vmatpush1.msra.mxu0 %v271
  %1887 = vmatprep.subr.mxu0 0.0
  %1888 = vmatpush1.msra.mxu0 %v270
  %1889 = vmatprep.subr.mxu0 0.0
  %1890 = vmatpush1.msra.mxu0 %v269
  %1891 = vmatprep.subr.mxu0 0.0
  %1892 = vmatpush2.msra.mxu0 0.0
  %1893 = vmatprep.subr.mxu0 0.0
  %1894 = vmatpush2.msra.mxu0 0.0
  %1895 = vmatprep.subr.mxu0 0.0
  %1896 = vmatpush2.msra.mxu0 0.0
  %1897 = vmatprep.subr.mxu0 0.0
  %1898 = vmatpush2.msra.mxu0 0.0
  %1899 = vmatprep.subr.mxu0 0.0
  %1900 = vmatpush2.msra.mxu0 0.0
  %1901 = vmatprep.subr.mxu0 0.0
  %1902 = vmatpush2.msra.mxu0 0.0
  %1903 = vmatprep.subr.mxu0 0.0
  %1904 = vmatpush2.msra.mxu0 0.0
  %1905 = vmatprep.subr.mxu0 0.0
  %1906 = vmatpush2.msra.mxu0 0.0
  %1907 = vmatprep.subr.mxu0 0.0
  %1908 = vmatpush2.msra.mxu0 0.0
  %1909 = vmatprep.subr.mxu0 0.0
  %1910 = vmatpush2.msra.mxu0 0.0
  %1911 = vmatprep.subr.mxu0 0.0
  %1912 = vmatpush2.msra.mxu0 0.0
  %1913 = vmatprep.subr.mxu0 0.0
  %1914 = vmatpush2.msra.mxu0 0.0
  %1915 = vmatprep.subr.mxu0 0.0
  %1916 = vmatpush2.msra.mxu0 0.0
  %1917 = vmatprep.subr.mxu0 0.0
  %1918 = vmatpush2.msra.mxu0 0.0
  %1919 = vmatprep.subr.mxu0 0.0
  %1920 = vmatpush2.msra.mxu0 0.0
  %1921 = vmatprep.subr.mxu0 0.0
  %1922 = vmatpush2.msra.mxu0 0.0
  %1923 = vmatprep.mubr.f32.mxu0 0.0
  %1924 = vmatmul.mubr.f32.gmra.mxu0 %v1855
  %v1925 = vpop.f32.mrf.mxu0
  %v1926 = vadd.f32 0.0, %v1925
  %v1927 = vpop.f32.mrf.mxu0
  %1928 = vmatprep.mubr.f32.mxu0 0.0
  %1929 = vmatmul.mubr.f32.gmra.mxu0 %v1857
  %v1930 = vpop.f32.mrf.mxu0
  %v1931 = vadd.f32 0.0, %v1930
  %v1932 = vpop.f32.mrf.mxu0
  %1933 = vdwg.mxu0
  %v1934 = vadd.f32 %v221, %v1926
  %v1935 = vadd.f32 %v227, %v1931
  %v1936 = vadd.f32 %v1934, %v1508
  %v1937 = vadd.f32 %v1935, %v1508
  %v1938 = vxor.u32 %v1936, 2147483648
  %v1939 = vxor.u32 %v1937, 2147483648
  %v1940 = vmul.f32 %v1938, 1.442695
  %v1941 = vpow.pop %v1940
  %v1942 = vmul.f32 %v1939, 1.442695
  %v1943 = vpow.pop %v1942
  %v1944 = vadd.f32 %v1941, 1.0
  %v1945 = vadd.f32 %v1943, 1.0
  %v1946 = vrcp.pop %v1944
  %v1947 = vmul.f32 1.0, %v1946
  %v1948 = vrcp.pop %v1945
  %v1949 = vmul.f32 1.0, %v1948
  %v1950 = vtanh.pop %v1936
  %v1951 = vtanh.pop %v1937
  %v1952 = vmul.f32 %v1947, %v1830
  %v1953 = vmul.f32 %v1949, %v1831
  %1956 = vrot.lane.b32.xlu0 %v1950, 32
  %v1957 = vpop.permute.xlu0 %1956
  %1958 = vrot.lane.b32.xlu0 %v1951, 32
  %v1959 = vpop.permute.xlu0 %1958
  %v1962 = vmul.f32 %v1947, %v1957
  %v1963 = vmul.f32 %v1949, %v1959
  %1966 = vrot.lane.b32.xlu0 %v1962, 32
  %v1967 = vpop.permute.xlu0 %1966
  %1968 = vrot.lane.b32.xlu0 %v1963, 32
  %v1969 = vpop.permute.xlu0 %1968
  %v1972 = vadd.f32 %v1952, %v1967
  %v1973 = vadd.f32 %v1953, %v1969
  %v1974 = vtanh.pop %v1972
  %v1975 = vtanh.pop %v1973
  %1978 = vrot.lane.b32.xlu0 %v1974, 32
  %v1979 = vpop.permute.xlu0 %1978
  %1980 = vrot.lane.b32.xlu0 %v1975, 32
  %v1981 = vpop.permute.xlu0 %1980
  %v1984 = vmul.f32 %v1947, %v1979
  %v1985 = vmul.f32 %v1949, %v1981
  %1988 = vrot.lane.b32.xlu0 %v1984, 64
  %v1989 = vpop.permute.xlu0 %1988
  %1990 = vrot.lane.b32.xlu0 %v1985, 64
  %v1991 = vpop.permute.xlu0 %1990
  %s1994 = scalar_lea.vmem [#allocation2], 192
  %1995 = vst.msk [vmem:[%s1994] sm:$0xff] %vm286, %v1989
  %1996 = vst.msk [vmem:[%s1994 + $0x8] sm:$0xff] %vm286, %v1991
  %v1997 = vsel %vm286, %v1989, 0
  %v1999 = vsel %vm286, %v1991, 0
  %2001 = vmatprep.subr.mxu0 0.0
  %2002 = vmatpush1.msra.mxu0 0.0
  %2003 = vmatprep.subr.mxu0 0.0
  %2004 = vmatpush1.msra.mxu0 0.0
  %2005 = vmatprep.subr.mxu0 0.0
  %2006 = vmatpush1.msra.mxu0 0.0
  %2007 = vmatprep.subr.mxu0 0.0
  %2008 = vmatpush1.msra.mxu0 0.0
  %2009 = vmatprep.subr.mxu0 0.0
  %2010 = vmatpush1.msra.mxu0 0.0
  %2011 = vmatprep.subr.mxu0 0.0
  %2012 = vmatpush1.msra.mxu0 0.0
  %2013 = vmatprep.subr.mxu0 0.0
  %2014 = vmatpush1.msra.mxu0 0.0
  %2015 = vmatprep.subr.mxu0 0.0
  %2016 = vmatpush1.msra.mxu0 0.0
  %2017 = vmatprep.subr.mxu0 0.0
  %2018 = vmatpush1.msra.mxu0 0.0
  %2019 = vmatprep.subr.mxu0 0.0
  %2020 = vmatpush1.msra.mxu0 0.0
  %2021 = vmatprep.subr.mxu0 0.0
  %2022 = vmatpush1.msra.mxu0 0.0
  %2023 = vmatprep.subr.mxu0 0.0
  %2024 = vmatpush1.msra.mxu0 0.0
  %2025 = vmatprep.subr.mxu0 0.0
  %2026 = vmatpush1.msra.mxu0 %v272
  %2027 = vmatprep.subr.mxu0 0.0
  %2028 = vmatpush1.msra.mxu0 %v271
  %2029 = vmatprep.subr.mxu0 0.0
  %2030 = vmatpush1.msra.mxu0 %v270
  %2031 = vmatprep.subr.mxu0 0.0
  %2032 = vmatpush1.msra.mxu0 %v269
  %2033 = vmatprep.subr.mxu0 0.0
  %2034 = vmatpush2.msra.mxu0 0.0
  %2035 = vmatprep.subr.mxu0 0.0
  %2036 = vmatpush2.msra.mxu0 0.0
  %2037 = vmatprep.subr.mxu0 0.0
  %2038 = vmatpush2.msra.mxu0 0.0
  %2039 = vmatprep.subr.mxu0 0.0
  %2040 = vmatpush2.msra.mxu0 0.0
  %2041 = vmatprep.subr.mxu0 0.0
  %2042 = vmatpush2.msra.mxu0 0.0
  %2043 = vmatprep.subr.mxu0 0.0
  %2044 = vmatpush2.msra.mxu0 0.0
  %2045 = vmatprep.subr.mxu0 0.0
  %2046 = vmatpush2.msra.mxu0 0.0
  %2047 = vmatprep.subr.mxu0 0.0
  %2048 = vmatpush2.msra.mxu0 0.0
  %2049 = vmatprep.subr.mxu0 0.0
  %2050 = vmatpush2.msra.mxu0 0.0
  %2051 = vmatprep.subr.mxu0 0.0
  %2052 = vmatpush2.msra.mxu0 0.0
  %2053 = vmatprep.subr.mxu0 0.0
  %2054 = vmatpush2.msra.mxu0 0.0
  %2055 = vmatprep.subr.mxu0 0.0
  %2056 = vmatpush2.msra.mxu0 0.0
  %2057 = vmatprep.subr.mxu0 0.0
  %2058 = vmatpush2.msra.mxu0 0.0
  %2059 = vmatprep.subr.mxu0 0.0
  %2060 = vmatpush2.msra.mxu0 0.0
  %2061 = vmatprep.subr.mxu0 0.0
  %2062 = vmatpush2.msra.mxu0 0.0
  %2063 = vmatprep.subr.mxu0 0.0
  %2064 = vmatpush2.msra.mxu0 0.0
  %2065 = vmatprep.mubr.f32.mxu0 0.0
  %2066 = vmatmul.mubr.f32.gmra.mxu0 %v1997
  %v2067 = vpop.f32.mrf.mxu0
  %v2068 = vadd.f32 0.0, %v2067
  %v2069 = vpop.f32.mrf.mxu0
  %2070 = vmatprep.mubr.f32.mxu0 0.0
  %2071 = vmatmul.mubr.f32.gmra.mxu0 %v1999
  %v2072 = vpop.f32.mrf.mxu0
  %v2073 = vadd.f32 0.0, %v2072
  %v2074 = vpop.f32.mrf.mxu0
  %2075 = vdwg.mxu0
  %v2076 = vadd.f32 %v209, %v2068
  %v2077 = vadd.f32 %v215, %v2073
  %v2078 = vadd.f32 %v2076, %v1508
  %v2079 = vadd.f32 %v2077, %v1508
  %v2080 = vxor.u32 %v2078, 2147483648
  %v2081 = vxor.u32 %v2079, 2147483648
  %v2082 = vmul.f32 %v2080, 1.442695
  %v2083 = vpow.pop %v2082
  %v2084 = vmul.f32 %v2081, 1.442695
  %v2085 = vpow.pop %v2084
  %v2086 = vadd.f32 %v2083, 1.0
  %v2087 = vadd.f32 %v2085, 1.0
  %v2088 = vrcp.pop %v2086
  %v2089 = vmul.f32 1.0, %v2088
  %v2090 = vrcp.pop %v2087
  %v2091 = vmul.f32 1.0, %v2090
  %v2092 = vtanh.pop %v2078
  %v2093 = vtanh.pop %v2079
  %v2094 = vmul.f32 %v2089, %v1972
  %v2095 = vmul.f32 %v2091, %v1973
  %2098 = vrot.lane.b32.xlu0 %v2092, 32
  %v2099 = vpop.permute.xlu0 %2098
  %2100 = vrot.lane.b32.xlu0 %v2093, 32
  %v2101 = vpop.permute.xlu0 %2100
  %v2104 = vmul.f32 %v2089, %v2099
  %v2105 = vmul.f32 %v2091, %v2101
  %2108 = vrot.lane.b32.xlu0 %v2104, 32
  %v2109 = vpop.permute.xlu0 %2108
  %2110 = vrot.lane.b32.xlu0 %v2105, 32
  %v2111 = vpop.permute.xlu0 %2110
  %v2114 = vadd.f32 %v2094, %v2109
  %v2115 = vadd.f32 %v2095, %v2111
  %v2116 = vtanh.pop %v2114
  %v2117 = vtanh.pop %v2115
  %2120 = vrot.lane.b32.xlu0 %v2116, 32
  %v2121 = vpop.permute.xlu0 %2120
  %2122 = vrot.lane.b32.xlu0 %v2117, 32
  %v2123 = vpop.permute.xlu0 %2122
  %v2126 = vmul.f32 %v2089, %v2121
  %v2127 = vmul.f32 %v2091, %v2123
  %2130 = vrot.lane.b32.xlu0 %v2126, 64
  %v2131 = vpop.permute.xlu0 %2130
  %2132 = vrot.lane.b32.xlu0 %v2127, 64
  %v2133 = vpop.permute.xlu0 %2132
  %s2136 = scalar_lea.vmem [#allocation2], 176
  %2137 = vst.msk [vmem:[%s2136] sm:$0xff] %vm286, %v2131
  %2138 = vst.msk [vmem:[%s2136 + $0x8] sm:$0xff] %vm286, %v2133
  %v2139 = vsel %vm286, %v2131, 0
  %v2141 = vsel %vm286, %v2133, 0
  %2143 = vmatprep.subr.mxu0 0.0
  %2144 = vmatpush1.msra.mxu0 0.0
  %2145 = vmatprep.subr.mxu0 0.0
  %2146 = vmatpush1.msra.mxu0 0.0
  %2147 = vmatprep.subr.mxu0 0.0
  %2148 = vmatpush1.msra.mxu0 0.0
  %2149 = vmatprep.subr.mxu0 0.0
  %2150 = vmatpush1.msra.mxu0 0.0
  %2151 = vmatprep.subr.mxu0 0.0
  %2152 = vmatpush1.msra.mxu0 0.0
  %2153 = vmatprep.subr.mxu0 0.0
  %2154 = vmatpush1.msra.mxu0 0.0
  %2155 = vmatprep.subr.mxu0 0.0
  %2156 = vmatpush1.msra.mxu0 0.0
  %2157 = vmatprep.subr.mxu0 0.0
  %2158 = vmatpush1.msra.mxu0 0.0
  %2159 = vmatprep.subr.mxu0 0.0
  %2160 = vmatpush1.msra.mxu0 0.0
  %2161 = vmatprep.subr.mxu0 0.0
  %2162 = vmatpush1.msra.mxu0 0.0
  %2163 = vmatprep.subr.mxu0 0.0
  %2164 = vmatpush1.msra.mxu0 0.0
  %2165 = vmatprep.subr.mxu0 0.0
  %2166 = vmatpush1.msra.mxu0 0.0
  %2167 = vmatprep.subr.mxu0 0.0
  %2168 = vmatpush1.msra.mxu0 %v272
  %2169 = vmatprep.subr.mxu0 0.0
  %2170 = vmatpush1.msra.mxu0 %v271
  %2171 = vmatprep.subr.mxu0 0.0
  %2172 = vmatpush1.msra.mxu0 %v270
  %2173 = vmatprep.subr.mxu0 0.0
  %2174 = vmatpush1.msra.mxu0 %v269
  %2175 = vmatprep.subr.mxu0 0.0
  %2176 = vmatpush2.msra.mxu0 0.0
  %2177 = vmatprep.subr.mxu0 0.0
  %2178 = vmatpush2.msra.mxu0 0.0
  %2179 = vmatprep.subr.mxu0 0.0
  %2180 = vmatpush2.msra.mxu0 0.0
  %2181 = vmatprep.subr.mxu0 0.0
  %2182 = vmatpush2.msra.mxu0 0.0
  %2183 = vmatprep.subr.mxu0 0.0
  %2184 = vmatpush2.msra.mxu0 0.0
  %2185 = vmatprep.subr.mxu0 0.0
  %2186 = vmatpush2.msra.mxu0 0.0
  %2187 = vmatprep.subr.mxu0 0.0
  %2188 = vmatpush2.msra.mxu0 0.0
  %2189 = vmatprep.subr.mxu0 0.0
  %2190 = vmatpush2.msra.mxu0 0.0
  %2191 = vmatprep.subr.mxu0 0.0
  %2192 = vmatpush2.msra.mxu0 0.0
  %2193 = vmatprep.subr.mxu0 0.0
  %2194 = vmatpush2.msra.mxu0 0.0
  %2195 = vmatprep.subr.mxu0 0.0
  %2196 = vmatpush2.msra.mxu0 0.0
  %2197 = vmatprep.subr.mxu0 0.0
  %2198 = vmatpush2.msra.mxu0 0.0
  %2199 = vmatprep.subr.mxu0 0.0
  %2200 = vmatpush2.msra.mxu0 0.0
  %2201 = vmatprep.subr.mxu0 0.0
  %2202 = vmatpush2.msra.mxu0 0.0
  %2203 = vmatprep.subr.mxu0 0.0
  %2204 = vmatpush2.msra.mxu0 0.0
  %2205 = vmatprep.subr.mxu0 0.0
  %2206 = vmatpush2.msra.mxu0 0.0
  %2207 = vmatprep.mubr.f32.mxu0 0.0
  %2208 = vmatmul.mubr.f32.gmra.mxu0 %v2139
  %v2209 = vpop.f32.mrf.mxu0
  %v2210 = vadd.f32 0.0, %v2209
  %v2211 = vpop.f32.mrf.mxu0
  %2212 = vmatprep.mubr.f32.mxu0 0.0
  %2213 = vmatmul.mubr.f32.gmra.mxu0 %v2141
  %v2214 = vpop.f32.mrf.mxu0
  %v2215 = vadd.f32 0.0, %v2214
  %v2216 = vpop.f32.mrf.mxu0
  %2217 = vdwg.mxu0
  %v2218 = vadd.f32 %v197, %v2210
  %v2219 = vadd.f32 %v203, %v2215
  %v2220 = vadd.f32 %v2218, %v1508
  %v2221 = vadd.f32 %v2219, %v1508
  %v2222 = vxor.u32 %v2220, 2147483648
  %v2223 = vxor.u32 %v2221, 2147483648
  %v2224 = vmul.f32 %v2222, 1.442695
  %v2225 = vpow.pop %v2224
  %v2226 = vmul.f32 %v2223, 1.442695
  %v2227 = vpow.pop %v2226
  %v2228 = vadd.f32 %v2225, 1.0
  %v2229 = vadd.f32 %v2227, 1.0
  %v2230 = vrcp.pop %v2228
  %v2231 = vmul.f32 1.0, %v2230
  %v2232 = vrcp.pop %v2229
  %v2233 = vmul.f32 1.0, %v2232
  %v2234 = vtanh.pop %v2220
  %v2235 = vtanh.pop %v2221
  %v2236 = vmul.f32 %v2231, %v2114
  %v2237 = vmul.f32 %v2233, %v2115
  %2240 = vrot.lane.b32.xlu0 %v2234, 32
  %v2241 = vpop.permute.xlu0 %2240
  %2242 = vrot.lane.b32.xlu0 %v2235, 32
  %v2243 = vpop.permute.xlu0 %2242
  %v2246 = vmul.f32 %v2231, %v2241
  %v2247 = vmul.f32 %v2233, %v2243
  %2250 = vrot.lane.b32.xlu0 %v2246, 32
  %v2251 = vpop.permute.xlu0 %2250
  %2252 = vrot.lane.b32.xlu0 %v2247, 32
  %v2253 = vpop.permute.xlu0 %2252
  %v2256 = vadd.f32 %v2236, %v2251
  %v2257 = vadd.f32 %v2237, %v2253
  %v2258 = vtanh.pop %v2256
  %v2259 = vtanh.pop %v2257
  %2262 = vrot.lane.b32.xlu0 %v2258, 32
  %v2263 = vpop.permute.xlu0 %2262
  %2264 = vrot.lane.b32.xlu0 %v2259, 32
  %v2265 = vpop.permute.xlu0 %2264
  %v2268 = vmul.f32 %v2231, %v2263
  %v2269 = vmul.f32 %v2233, %v2265
  %2272 = vrot.lane.b32.xlu0 %v2268, 64
  %v2273 = vpop.permute.xlu0 %2272
  %2274 = vrot.lane.b32.xlu0 %v2269, 64
  %v2275 = vpop.permute.xlu0 %2274
  %s2278 = scalar_lea.vmem [#allocation2], 160
  %2279 = vst.msk [vmem:[%s2278] sm:$0xff] %vm286, %v2273
  %2280 = vst.msk [vmem:[%s2278 + $0x8] sm:$0xff] %vm286, %v2275
  %v2281 = vsel %vm286, %v2273, 0
  %v2283 = vsel %vm286, %v2275, 0
  %2285 = vmatprep.subr.mxu0 0.0
  %2286 = vmatpush1.msra.mxu0 0.0
  %2287 = vmatprep.subr.mxu0 0.0
  %2288 = vmatpush1.msra.mxu0 0.0
  %2289 = vmatprep.subr.mxu0 0.0
  %2290 = vmatpush1.msra.mxu0 0.0
  %2291 = vmatprep.subr.mxu0 0.0
  %2292 = vmatpush1.msra.mxu0 0.0
  %2293 = vmatprep.subr.mxu0 0.0
  %2294 = vmatpush1.msra.mxu0 0.0
  %2295 = vmatprep.subr.mxu0 0.0
  %2296 = vmatpush1.msra.mxu0 0.0
  %2297 = vmatprep.subr.mxu0 0.0
  %2298 = vmatpush1.msra.mxu0 0.0
  %2299 = vmatprep.subr.mxu0 0.0
  %2300 = vmatpush1.msra.mxu0 0.0
  %2301 = vmatprep.subr.mxu0 0.0
  %2302 = vmatpush1.msra.mxu0 0.0
  %2303 = vmatprep.subr.mxu0 0.0
  %2304 = vmatpush1.msra.mxu0 0.0
  %2305 = vmatprep.subr.mxu0 0.0
  %2306 = vmatpush1.msra.mxu0 0.0
  %2307 = vmatprep.subr.mxu0 0.0
  %2308 = vmatpush1.msra.mxu0 0.0
  %2309 = vmatprep.subr.mxu0 0.0
  %2310 = vmatpush1.msra.mxu0 %v272
  %2311 = vmatprep.subr.mxu0 0.0
  %2312 = vmatpush1.msra.mxu0 %v271
  %2313 = vmatprep.subr.mxu0 0.0
  %2314 = vmatpush1.msra.mxu0 %v270
  %2315 = vmatprep.subr.mxu0 0.0
  %2316 = vmatpush1.msra.mxu0 %v269
  %2317 = vmatprep.subr.mxu0 0.0
  %2318 = vmatpush2.msra.mxu0 0.0
  %2319 = vmatprep.subr.mxu0 0.0
  %2320 = vmatpush2.msra.mxu0 0.0
  %2321 = vmatprep.subr.mxu0 0.0
  %2322 = vmatpush2.msra.mxu0 0.0
  %2323 = vmatprep.subr.mxu0 0.0
  %2324 = vmatpush2.msra.mxu0 0.0
  %2325 = vmatprep.subr.mxu0 0.0
  %2326 = vmatpush2.msra.mxu0 0.0
  %2327 = vmatprep.subr.mxu0 0.0
  %2328 = vmatpush2.msra.mxu0 0.0
  %2329 = vmatprep.subr.mxu0 0.0
  %2330 = vmatpush2.msra.mxu0 0.0
  %2331 = vmatprep.subr.mxu0 0.0
  %2332 = vmatpush2.msra.mxu0 0.0
  %2333 = vmatprep.subr.mxu0 0.0
  %2334 = vmatpush2.msra.mxu0 0.0
  %2335 = vmatprep.subr.mxu0 0.0
  %2336 = vmatpush2.msra.mxu0 0.0
  %2337 = vmatprep.subr.mxu0 0.0
  %2338 = vmatpush2.msra.mxu0 0.0
  %2339 = vmatprep.subr.mxu0 0.0
  %2340 = vmatpush2.msra.mxu0 0.0
  %2341 = vmatprep.subr.mxu0 0.0
  %2342 = vmatpush2.msra.mxu0 0.0
  %2343 = vmatprep.subr.mxu0 0.0
  %2344 = vmatpush2.msra.mxu0 0.0
  %2345 = vmatprep.subr.mxu0 0.0
  %2346 = vmatpush2.msra.mxu0 0.0
  %2347 = vmatprep.subr.mxu0 0.0
  %2348 = vmatpush2.msra.mxu0 0.0
  %2349 = vmatprep.mubr.f32.mxu0 0.0
  %2350 = vmatmul.mubr.f32.gmra.mxu0 %v2281
  %v2351 = vpop.f32.mrf.mxu0
  %v2352 = vadd.f32 0.0, %v2351
  %v2353 = vpop.f32.mrf.mxu0
  %2354 = vmatprep.mubr.f32.mxu0 0.0
  %2355 = vmatmul.mubr.f32.gmra.mxu0 %v2283
  %v2356 = vpop.f32.mrf.mxu0
  %v2357 = vadd.f32 0.0, %v2356
  %v2358 = vpop.f32.mrf.mxu0
  %2359 = vdwg.mxu0
  %v2360 = vadd.f32 %v185, %v2352
  %v2361 = vadd.f32 %v191, %v2357
  %v2362 = vadd.f32 %v2360, %v1508
  %v2363 = vadd.f32 %v2361, %v1508
  %v2364 = vxor.u32 %v2362, 2147483648
  %v2365 = vxor.u32 %v2363, 2147483648
  %v2366 = vmul.f32 %v2364, 1.442695
  %v2367 = vpow.pop %v2366
  %v2368 = vmul.f32 %v2365, 1.442695
  %v2369 = vpow.pop %v2368
  %v2370 = vadd.f32 %v2367, 1.0
  %v2371 = vadd.f32 %v2369, 1.0
  %v2372 = vrcp.pop %v2370
  %v2373 = vmul.f32 1.0, %v2372
  %v2374 = vrcp.pop %v2371
  %v2375 = vmul.f32 1.0, %v2374
  %v2376 = vtanh.pop %v2362
  %v2377 = vtanh.pop %v2363
  %v2378 = vmul.f32 %v2373, %v2256
  %v2379 = vmul.f32 %v2375, %v2257
  %2382 = vrot.lane.b32.xlu0 %v2376, 32
  %v2383 = vpop.permute.xlu0 %2382
  %2384 = vrot.lane.b32.xlu0 %v2377, 32
  %v2385 = vpop.permute.xlu0 %2384
  %v2388 = vmul.f32 %v2373, %v2383
  %v2389 = vmul.f32 %v2375, %v2385
  %2392 = vrot.lane.b32.xlu0 %v2388, 32
  %v2393 = vpop.permute.xlu0 %2392
  %2394 = vrot.lane.b32.xlu0 %v2389, 32
  %v2395 = vpop.permute.xlu0 %2394
  %v2398 = vadd.f32 %v2378, %v2393
  %v2399 = vadd.f32 %v2379, %v2395
  %v2400 = vtanh.pop %v2398
  %v2401 = vtanh.pop %v2399
  %2404 = vrot.lane.b32.xlu0 %v2400, 32
  %v2405 = vpop.permute.xlu0 %2404
  %2406 = vrot.lane.b32.xlu0 %v2401, 32
  %v2407 = vpop.permute.xlu0 %2406
  %v2410 = vmul.f32 %v2373, %v2405
  %v2411 = vmul.f32 %v2375, %v2407
  %2414 = vrot.lane.b32.xlu0 %v2410, 64
  %v2415 = vpop.permute.xlu0 %2414
  %2416 = vrot.lane.b32.xlu0 %v2411, 64
  %v2417 = vpop.permute.xlu0 %2416
  %s2420 = scalar_lea.vmem [#allocation2], 144
  %2421 = vst.msk [vmem:[%s2420] sm:$0xff] %vm286, %v2415
  %2422 = vst.msk [vmem:[%s2420 + $0x8] sm:$0xff] %vm286, %v2417
  %v2423 = vsel %vm286, %v2415, 0
  %v2425 = vsel %vm286, %v2417, 0
  %2427 = vmatprep.subr.mxu0 0.0
  %2428 = vmatpush1.msra.mxu0 0.0
  %2429 = vmatprep.subr.mxu0 0.0
  %2430 = vmatpush1.msra.mxu0 0.0
  %2431 = vmatprep.subr.mxu0 0.0
  %2432 = vmatpush1.msra.mxu0 0.0
  %2433 = vmatprep.subr.mxu0 0.0
  %2434 = vmatpush1.msra.mxu0 0.0
  %2435 = vmatprep.subr.mxu0 0.0
  %2436 = vmatpush1.msra.mxu0 0.0
  %2437 = vmatprep.subr.mxu0 0.0
  %2438 = vmatpush1.msra.mxu0 0.0
  %2439 = vmatprep.subr.mxu0 0.0
  %2440 = vmatpush1.msra.mxu0 0.0
  %2441 = vmatprep.subr.mxu0 0.0
  %2442 = vmatpush1.msra.mxu0 0.0
  %2443 = vmatprep.subr.mxu0 0.0
  %2444 = vmatpush1.msra.mxu0 0.0
  %2445 = vmatprep.subr.mxu0 0.0
  %2446 = vmatpush1.msra.mxu0 0.0
  %2447 = vmatprep.subr.mxu0 0.0
  %2448 = vmatpush1.msra.mxu0 0.0
  %2449 = vmatprep.subr.mxu0 0.0
  %2450 = vmatpush1.msra.mxu0 0.0
  %2451 = vmatprep.subr.mxu0 0.0
  %2452 = vmatpush1.msra.mxu0 %v272
  %2453 = vmatprep.subr.mxu0 0.0
  %2454 = vmatpush1.msra.mxu0 %v271
  %2455 = vmatprep.subr.mxu0 0.0
  %2456 = vmatpush1.msra.mxu0 %v270
  %2457 = vmatprep.subr.mxu0 0.0
  %2458 = vmatpush1.msra.mxu0 %v269
  %2459 = vmatprep.subr.mxu0 0.0
  %2460 = vmatpush2.msra.mxu0 0.0
  %2461 = vmatprep.subr.mxu0 0.0
  %2462 = vmatpush2.msra.mxu0 0.0
  %2463 = vmatprep.subr.mxu0 0.0
  %2464 = vmatpush2.msra.mxu0 0.0
  %2465 = vmatprep.subr.mxu0 0.0
  %2466 = vmatpush2.msra.mxu0 0.0
  %2467 = vmatprep.subr.mxu0 0.0
  %2468 = vmatpush2.msra.mxu0 0.0
  %2469 = vmatprep.subr.mxu0 0.0
  %2470 = vmatpush2.msra.mxu0 0.0
  %2471 = vmatprep.subr.mxu0 0.0
  %2472 = vmatpush2.msra.mxu0 0.0
  %2473 = vmatprep.subr.mxu0 0.0
  %2474 = vmatpush2.msra.mxu0 0.0
  %2475 = vmatprep.subr.mxu0 0.0
  %2476 = vmatpush2.msra.mxu0 0.0
  %2477 = vmatprep.subr.mxu0 0.0
  %2478 = vmatpush2.msra.mxu0 0.0
  %2479 = vmatprep.subr.mxu0 0.0
  %2480 = vmatpush2.msra.mxu0 0.0
  %2481 = vmatprep.subr.mxu0 0.0
  %2482 = vmatpush2.msra.mxu0 0.0
  %2483 = vmatprep.subr.mxu0 0.0
  %2484 = vmatpush2.msra.mxu0 0.0
  %2485 = vmatprep.subr.mxu0 0.0
  %2486 = vmatpush2.msra.mxu0 0.0
  %2487 = vmatprep.subr.mxu0 0.0
  %2488 = vmatpush2.msra.mxu0 0.0
  %2489 = vmatprep.subr.mxu0 0.0
  %2490 = vmatpush2.msra.mxu0 0.0
  %2491 = vmatprep.mubr.f32.mxu0 0.0
  %2492 = vmatmul.mubr.f32.gmra.mxu0 %v2423
  %v2493 = vpop.f32.mrf.mxu0
  %v2494 = vadd.f32 0.0, %v2493
  %v2495 = vpop.f32.mrf.mxu0
  %2496 = vmatprep.mubr.f32.mxu0 0.0
  %2497 = vmatmul.mubr.f32.gmra.mxu0 %v2425
  %v2498 = vpop.f32.mrf.mxu0
  %v2499 = vadd.f32 0.0, %v2498
  %v2500 = vpop.f32.mrf.mxu0
  %2501 = vdwg.mxu0
  %v2502 = vadd.f32 %v173, %v2494
  %v2503 = vadd.f32 %v179, %v2499
  %v2504 = vadd.f32 %v2502, %v1508
  %v2505 = vadd.f32 %v2503, %v1508
  %v2506 = vxor.u32 %v2504, 2147483648
  %v2507 = vxor.u32 %v2505, 2147483648
  %v2508 = vmul.f32 %v2506, 1.442695
  %v2509 = vpow.pop %v2508
  %v2510 = vmul.f32 %v2507, 1.442695
  %v2511 = vpow.pop %v2510
  %v2512 = vadd.f32 %v2509, 1.0
  %v2513 = vadd.f32 %v2511, 1.0
  %v2514 = vrcp.pop %v2512
  %v2515 = vmul.f32 1.0, %v2514
  %v2516 = vrcp.pop %v2513
  %v2517 = vmul.f32 1.0, %v2516
  %v2518 = vtanh.pop %v2504
  %v2519 = vtanh.pop %v2505
  %v2520 = vmul.f32 %v2515, %v2398
  %v2521 = vmul.f32 %v2517, %v2399
  %2524 = vrot.lane.b32.xlu0 %v2518, 32
  %v2525 = vpop.permute.xlu0 %2524
  %2526 = vrot.lane.b32.xlu0 %v2519, 32
  %v2527 = vpop.permute.xlu0 %2526
  %v2530 = vmul.f32 %v2515, %v2525
  %v2531 = vmul.f32 %v2517, %v2527
  %2534 = vrot.lane.b32.xlu0 %v2530, 32
  %v2535 = vpop.permute.xlu0 %2534
  %2536 = vrot.lane.b32.xlu0 %v2531, 32
  %v2537 = vpop.permute.xlu0 %2536
  %v2540 = vadd.f32 %v2520, %v2535
  %v2541 = vadd.f32 %v2521, %v2537
  %v2542 = vtanh.pop %v2540
  %v2543 = vtanh.pop %v2541
  %2546 = vrot.lane.b32.xlu0 %v2542, 32
  %v2547 = vpop.permute.xlu0 %2546
  %2548 = vrot.lane.b32.xlu0 %v2543, 32
  %v2549 = vpop.permute.xlu0 %2548
  %v2552 = vmul.f32 %v2515, %v2547
  %v2553 = vmul.f32 %v2517, %v2549
  %2556 = vrot.lane.b32.xlu0 %v2552, 64
  %v2557 = vpop.permute.xlu0 %2556
  %2558 = vrot.lane.b32.xlu0 %v2553, 64
  %v2559 = vpop.permute.xlu0 %2558
  %s2562 = scalar_lea.vmem [#allocation2], 128
  %2563 = vst.msk [vmem:[%s2562] sm:$0xff] %vm286, %v2557
  %2564 = vst.msk [vmem:[%s2562 + $0x8] sm:$0xff] %vm286, %v2559
  %v2565 = vld [vmem:[#allocation2] sm:$0xff]
  %v2566 = vld [vmem:[#allocation2 + $0x8] sm:$0xff]
  %v2567 = vld [vmem:[#allocation2 + $0x10] sm:$0xff]
  %v2568 = vld [vmem:[#allocation2 + $0x18] sm:$0xff]
  %v2569 = vld [vmem:[#allocation2 + $0x20] sm:$0xff]
  %v2570 = vld [vmem:[#allocation2 + $0x28] sm:$0xff]
  %v2571 = vld [vmem:[#allocation2 + $0x30] sm:$0xff]
  %v2572 = vld [vmem:[#allocation2 + $0x38] sm:$0xff]
  %v2573 = vld [vmem:[#allocation2 + $0x40] sm:$0xff]
  %v2574 = vld [vmem:[#allocation2 + $0x48] sm:$0xff]
  %v2575 = vld [vmem:[#allocation2 + $0x50] sm:$0xff]
  %v2576 = vld [vmem:[#allocation2 + $0x58] sm:$0xff]
  %v2577 = vld [vmem:[#allocation2 + $0x60] sm:$0xff]
  %v2578 = vld [vmem:[#allocation2 + $0x68] sm:$0xff]
  %v2579 = vld [vmem:[#allocation2 + $0x70] sm:$0xff]
  %v2580 = vld [vmem:[#allocation2 + $0x78] sm:$0xff]
  %v2581 = vld [vmem:[%s2562] sm:$0xff]
  %v2582 = vld [vmem:[%s2562 + $0x8] sm:$0xff]
  %v2583 = vld [vmem:[%s2562 + $0x10] sm:$0xff]
  %v2584 = vld [vmem:[%s2562 + $0x18] sm:$0xff]
  %v2585 = vld [vmem:[%s2562 + $0x20] sm:$0xff]
  %v2586 = vld [vmem:[%s2562 + $0x28] sm:$0xff]
  %v2587 = vld [vmem:[%s2562 + $0x30] sm:$0xff]
  %v2588 = vld [vmem:[%s2562 + $0x38] sm:$0xff]
  %v2589 = vld [vmem:[%s2562 + $0x40] sm:$0xff]
  %v2590 = vld [vmem:[%s2562 + $0x48] sm:$0xff]
  %v2591 = vld [vmem:[%s2562 + $0x50] sm:$0xff]
  %v2592 = vld [vmem:[%s2562 + $0x58] sm:$0xff]
  %v2593 = vld [vmem:[%s2562 + $0x60] sm:$0xff]
  %v2594 = vld [vmem:[%s2562 + $0x68] sm:$0xff]
  %v2595 = vld [vmem:[%s2562 + $0x70] sm:$0xff]
  %v2596 = vld [vmem:[%s2562 + $0x78] sm:$0xff]
  %v2598 = vsel %vm286, %v2581, 0
  %v2601 = vsel %vm286, %v2582, 0
  %v2604 = vsel %vm286, %v2583, 0
  %v2607 = vsel %vm286, %v2584, 0
  %v2610 = vsel %vm286, %v2585, 0
  %v2613 = vsel %vm286, %v2586, 0
  %v2616 = vsel %vm286, %v2587, 0
  %v2619 = vsel %vm286, %v2588, 0
  %v2622 = vsel %vm286, %v2589, 0
  %v2625 = vsel %vm286, %v2590, 0
  %v2628 = vsel %vm286, %v2591, 0
  %v2631 = vsel %vm286, %v2592, 0
  %v2634 = vsel %vm286, %v2593, 0
  %v2637 = vsel %vm286, %v2594, 0
  %v2640 = vsel %vm286, %v2595, 0
  %v2643 = vsel %vm286, %v2596, 0
  %2645 = vmatprep.subr.mxu0 0.0
  %2646 = vmatpush1.msra.mxu0 0.0
  %2647 = vmatprep.subr.mxu0 0.0
  %2648 = vmatpush1.msra.mxu0 0.0
  %2649 = vmatprep.subr.mxu0 0.0
  %2650 = vmatpush1.msra.mxu0 0.0
  %2651 = vmatprep.subr.mxu0 0.0
  %2652 = vmatpush1.msra.mxu0 0.0
  %2653 = vmatprep.subr.mxu0 0.0
  %2654 = vmatpush1.msra.mxu0 0.0
  %2655 = vmatprep.subr.mxu0 0.0
  %2656 = vmatpush1.msra.mxu0 0.0
  %2657 = vmatprep.subr.mxu0 0.0
  %2658 = vmatpush1.msra.mxu0 0.0
  %2659 = vmatprep.subr.mxu0 0.0
  %2660 = vmatpush1.msra.mxu0 0.0
  %2661 = vmatprep.subr.mxu0 0.0
  %2662 = vmatpush1.msra.mxu0 0.0
  %2663 = vmatprep.subr.mxu0 0.0
  %2664 = vmatpush1.msra.mxu0 0.0
  %2665 = vmatprep.subr.mxu0 0.0
  %2666 = vmatpush1.msra.mxu0 0.0
  %2667 = vmatprep.subr.mxu0 0.0
  %2668 = vmatpush1.msra.mxu0 0.0
  %2669 = vmatprep.subr.mxu0 0.0
  %2670 = vmatpush1.msra.mxu0 %v282
  %2671 = vmatprep.subr.mxu0 0.0
  %2672 = vmatpush1.msra.mxu0 %v281
  %2673 = vmatprep.subr.mxu0 0.0
  %2674 = vmatpush1.msra.mxu0 %v280
  %2675 = vmatprep.subr.mxu0 0.0
  %2676 = vmatpush1.msra.mxu0 %v279
  %2677 = vmatprep.subr.mxu0 0.0
  %2678 = vmatpush2.msra.mxu0 0.0
  %2679 = vmatprep.subr.mxu0 0.0
  %2680 = vmatpush2.msra.mxu0 0.0
  %2681 = vmatprep.subr.mxu0 0.0
  %2682 = vmatpush2.msra.mxu0 0.0
  %2683 = vmatprep.subr.mxu0 0.0
  %2684 = vmatpush2.msra.mxu0 0.0
  %2685 = vmatprep.subr.mxu0 0.0
  %2686 = vmatpush2.msra.mxu0 0.0
  %2687 = vmatprep.subr.mxu0 0.0
  %2688 = vmatpush2.msra.mxu0 0.0
  %2689 = vmatprep.subr.mxu0 0.0
  %2690 = vmatpush2.msra.mxu0 0.0
  %2691 = vmatprep.subr.mxu0 0.0
  %2692 = vmatpush2.msra.mxu0 0.0
  %2693 = vmatprep.subr.mxu0 0.0
  %2694 = vmatpush2.msra.mxu0 0.0
  %2695 = vmatprep.subr.mxu0 0.0
  %2696 = vmatpush2.msra.mxu0 0.0
  %2697 = vmatprep.subr.mxu0 0.0
  %2698 = vmatpush2.msra.mxu0 0.0
  %2699 = vmatprep.subr.mxu0 0.0
  %2700 = vmatpush2.msra.mxu0 0.0
  %2701 = vmatprep.subr.mxu0 0.0
  %2702 = vmatpush2.msra.mxu0 0.0
  %2703 = vmatprep.subr.mxu0 0.0
  %2704 = vmatpush2.msra.mxu0 0.0
  %2705 = vmatprep.subr.mxu0 0.0
  %2706 = vmatpush2.msra.mxu0 0.0
  %2707 = vmatprep.subr.mxu0 0.0
  %2708 = vmatpush2.msra.mxu0 0.0
  %2709 = vmatprep.mubr.f32.mxu0 0.0
  %2710 = vmatmul.mubr.f32.gmra.mxu0 %v2598
  %v2711 = vpop.f32.mrf.mxu0
  %v2712 = vadd.f32 0.0, %v2711
  %v2713 = vpop.f32.mrf.mxu0
  %2714 = vmatprep.mubr.f32.mxu0 0.0
  %2715 = vmatmul.mubr.f32.gmra.mxu0 %v2601
  %v2716 = vpop.f32.mrf.mxu0
  %v2717 = vadd.f32 0.0, %v2716
  %v2718 = vpop.f32.mrf.mxu0
  %2719 = vmatprep.mubr.f32.mxu0 0.0
  %2720 = vmatmul.mubr.f32.gmra.mxu0 %v2604
  %v2721 = vpop.f32.mrf.mxu0
  %v2722 = vadd.f32 0.0, %v2721
  %v2723 = vpop.f32.mrf.mxu0
  %2724 = vmatprep.mubr.f32.mxu0 0.0
  %2725 = vmatmul.mubr.f32.gmra.mxu0 %v2607
  %v2726 = vpop.f32.mrf.mxu0
  %v2727 = vadd.f32 0.0, %v2726
  %v2728 = vpop.f32.mrf.mxu0
  %2729 = vmatprep.mubr.f32.mxu0 0.0
  %2730 = vmatmul.mubr.f32.gmra.mxu0 %v2610
  %v2731 = vpop.f32.mrf.mxu0
  %v2732 = vadd.f32 0.0, %v2731
  %v2733 = vpop.f32.mrf.mxu0
  %2734 = vmatprep.mubr.f32.mxu0 0.0
  %2735 = vmatmul.mubr.f32.gmra.mxu0 %v2613
  %v2736 = vpop.f32.mrf.mxu0
  %v2737 = vadd.f32 0.0, %v2736
  %v2738 = vpop.f32.mrf.mxu0
  %2739 = vmatprep.mubr.f32.mxu0 0.0
  %2740 = vmatmul.mubr.f32.gmra.mxu0 %v2616
  %v2741 = vpop.f32.mrf.mxu0
  %v2742 = vadd.f32 0.0, %v2741
  %v2743 = vpop.f32.mrf.mxu0
  %2744 = vmatprep.mubr.f32.mxu0 0.0
  %2745 = vmatmul.mubr.f32.gmra.mxu0 %v2619
  %v2746 = vpop.f32.mrf.mxu0
  %v2747 = vadd.f32 0.0, %v2746
  %v2748 = vpop.f32.mrf.mxu0
  %2749 = vmatprep.mubr.f32.mxu0 0.0
  %2750 = vmatmul.mubr.f32.gmra.mxu0 %v2622
  %v2751 = vpop.f32.mrf.mxu0
  %v2752 = vadd.f32 0.0, %v2751
  %v2753 = vpop.f32.mrf.mxu0
  %2754 = vmatprep.mubr.f32.mxu0 0.0
  %2755 = vmatmul.mubr.f32.gmra.mxu0 %v2625
  %v2756 = vpop.f32.mrf.mxu0
  %v2757 = vadd.f32 0.0, %v2756
  %v2758 = vpop.f32.mrf.mxu0
  %2759 = vmatprep.mubr.f32.mxu0 0.0
  %2760 = vmatmul.mubr.f32.gmra.mxu0 %v2628
  %v2761 = vpop.f32.mrf.mxu0
  %v2762 = vadd.f32 0.0, %v2761
  %v2763 = vpop.f32.mrf.mxu0
  %2764 = vmatprep.mubr.f32.mxu0 0.0
  %2765 = vmatmul.mubr.f32.gmra.mxu0 %v2631
  %v2766 = vpop.f32.mrf.mxu0
  %v2767 = vadd.f32 0.0, %v2766
  %v2768 = vpop.f32.mrf.mxu0
  %2769 = vmatprep.mubr.f32.mxu0 0.0
  %2770 = vmatmul.mubr.f32.gmra.mxu0 %v2634
  %v2771 = vpop.f32.mrf.mxu0
  %v2772 = vadd.f32 0.0, %v2771
  %v2773 = vpop.f32.mrf.mxu0
  %2774 = vmatprep.mubr.f32.mxu0 0.0
  %2775 = vmatmul.mubr.f32.gmra.mxu0 %v2637
  %v2776 = vpop.f32.mrf.mxu0
  %v2777 = vadd.f32 0.0, %v2776
  %v2778 = vpop.f32.mrf.mxu0
  %2779 = vmatprep.mubr.f32.mxu0 0.0
  %2780 = vmatmul.mubr.f32.gmra.mxu0 %v2640
  %v2781 = vpop.f32.mrf.mxu0
  %v2782 = vadd.f32 0.0, %v2781
  %v2783 = vpop.f32.mrf.mxu0
  %2784 = vmatprep.mubr.f32.mxu0 0.0
  %2785 = vmatmul.mubr.f32.gmra.mxu0 %v2643
  %v2786 = vpop.f32.mrf.mxu0
  %v2787 = vadd.f32 0.0, %v2786
  %v2788 = vpop.f32.mrf.mxu0
  %2789 = vdwg.mxu0
  %v2791 = vsel %vm286, %v2565, 0
  %v2794 = vsel %vm286, %v2566, 0
  %v2797 = vsel %vm286, %v2567, 0
  %v2800 = vsel %vm286, %v2568, 0
  %v2803 = vsel %vm286, %v2569, 0
  %v2806 = vsel %vm286, %v2570, 0
  %v2809 = vsel %vm286, %v2571, 0
  %v2812 = vsel %vm286, %v2572, 0
  %v2815 = vsel %vm286, %v2573, 0
  %v2818 = vsel %vm286, %v2574, 0
  %v2821 = vsel %vm286, %v2575, 0
  %v2824 = vsel %vm286, %v2576, 0
  %v2827 = vsel %vm286, %v2577, 0
  %v2830 = vsel %vm286, %v2578, 0
  %v2833 = vsel %vm286, %v2579, 0
  %v2836 = vsel %vm286, %v2580, 0
  %2838 = vmatprep.subr.mxu0 0.0
  %2839 = vmatpush1.msra.mxu0 0.0
  %2840 = vmatprep.subr.mxu0 0.0
  %2841 = vmatpush1.msra.mxu0 0.0
  %2842 = vmatprep.subr.mxu0 0.0
  %2843 = vmatpush1.msra.mxu0 0.0
  %2844 = vmatprep.subr.mxu0 0.0
  %2845 = vmatpush1.msra.mxu0 0.0
  %2846 = vmatprep.subr.mxu0 0.0
  %2847 = vmatpush1.msra.mxu0 0.0
  %2848 = vmatprep.subr.mxu0 0.0
  %2849 = vmatpush1.msra.mxu0 0.0
  %2850 = vmatprep.subr.mxu0 0.0
  %2851 = vmatpush1.msra.mxu0 0.0
  %2852 = vmatprep.subr.mxu0 0.0
  %2853 = vmatpush1.msra.mxu0 0.0
  %2854 = vmatprep.subr.mxu0 0.0
  %2855 = vmatpush1.msra.mxu0 0.0
  %2856 = vmatprep.subr.mxu0 0.0
  %2857 = vmatpush1.msra.mxu0 0.0
  %2858 = vmatprep.subr.mxu0 0.0
  %2859 = vmatpush1.msra.mxu0 0.0
  %2860 = vmatprep.subr.mxu0 0.0
  %2861 = vmatpush1.msra.mxu0 0.0
  %2862 = vmatprep.subr.mxu0 0.0
  %2863 = vmatpush1.msra.mxu0 %v278
  %2864 = vmatprep.subr.mxu0 0.0
  %2865 = vmatpush1.msra.mxu0 %v277
  %2866 = vmatprep.subr.mxu0 0.0
  %2867 = vmatpush1.msra.mxu0 %v276
  %2868 = vmatprep.subr.mxu0 0.0
  %2869 = vmatpush1.msra.mxu0 %v275
  %2870 = vmatprep.subr.mxu0 0.0
  %2871 = vmatpush2.msra.mxu0 0.0
  %2872 = vmatprep.subr.mxu0 0.0
  %2873 = vmatpush2.msra.mxu0 0.0
  %2874 = vmatprep.subr.mxu0 0.0
  %2875 = vmatpush2.msra.mxu0 0.0
  %2876 = vmatprep.subr.mxu0 0.0
  %2877 = vmatpush2.msra.mxu0 0.0
  %2878 = vmatprep.subr.mxu0 0.0
  %2879 = vmatpush2.msra.mxu0 0.0
  %2880 = vmatprep.subr.mxu0 0.0
  %2881 = vmatpush2.msra.mxu0 0.0
  %2882 = vmatprep.subr.mxu0 0.0
  %2883 = vmatpush2.msra.mxu0 0.0
  %2884 = vmatprep.subr.mxu0 0.0
  %2885 = vmatpush2.msra.mxu0 0.0
  %2886 = vmatprep.subr.mxu0 0.0
  %2887 = vmatpush2.msra.mxu0 0.0
  %2888 = vmatprep.subr.mxu0 0.0
  %2889 = vmatpush2.msra.mxu0 0.0
  %2890 = vmatprep.subr.mxu0 0.0
  %2891 = vmatpush2.msra.mxu0 0.0
  %2892 = vmatprep.subr.mxu0 0.0
  %2893 = vmatpush2.msra.mxu0 0.0
  %2894 = vmatprep.subr.mxu0 0.0
  %2895 = vmatpush2.msra.mxu0 0.0
  %2896 = vmatprep.subr.mxu0 0.0
  %2897 = vmatpush2.msra.mxu0 0.0
  %2898 = vmatprep.subr.mxu0 0.0
  %2899 = vmatpush2.msra.mxu0 0.0
  %2900 = vmatprep.subr.mxu0 0.0
  %2901 = vmatpush2.msra.mxu0 0.0
  %2902 = vmatprep.mubr.f32.mxu0 0.0
  %2903 = vmatmul.mubr.f32.gmra.mxu0 %v2791
  %v2904 = vpop.f32.mrf.mxu0
  %v2905 = vadd.f32 %v2712, %v2904
  %v2906 = vpop.f32.mrf.mxu0
  %2907 = vmatprep.mubr.f32.mxu0 0.0
  %2908 = vmatmul.mubr.f32.gmra.mxu0 %v2794
  %v2909 = vpop.f32.mrf.mxu0
  %v2910 = vadd.f32 %v2717, %v2909
  %v2911 = vpop.f32.mrf.mxu0
  %2912 = vmatprep.mubr.f32.mxu0 0.0
  %2913 = vmatmul.mubr.f32.gmra.mxu0 %v2797
  %v2914 = vpop.f32.mrf.mxu0
  %v2915 = vadd.f32 %v2722, %v2914
  %v2916 = vpop.f32.mrf.mxu0
  %2917 = vmatprep.mubr.f32.mxu0 0.0
  %2918 = vmatmul.mubr.f32.gmra.mxu0 %v2800
  %v2919 = vpop.f32.mrf.mxu0
  %v2920 = vadd.f32 %v2727, %v2919
  %v2921 = vpop.f32.mrf.mxu0
  %2922 = vmatprep.mubr.f32.mxu0 0.0
  %2923 = vmatmul.mubr.f32.gmra.mxu0 %v2803
  %v2924 = vpop.f32.mrf.mxu0
  %v2925 = vadd.f32 %v2732, %v2924
  %v2926 = vpop.f32.mrf.mxu0
  %2927 = vmatprep.mubr.f32.mxu0 0.0
  %2928 = vmatmul.mubr.f32.gmra.mxu0 %v2806
  %v2929 = vpop.f32.mrf.mxu0
  %v2930 = vadd.f32 %v2737, %v2929
  %v2931 = vpop.f32.mrf.mxu0
  %2932 = vmatprep.mubr.f32.mxu0 0.0
  %2933 = vmatmul.mubr.f32.gmra.mxu0 %v2809
  %v2934 = vpop.f32.mrf.mxu0
  %v2935 = vadd.f32 %v2742, %v2934
  %v2936 = vpop.f32.mrf.mxu0
  %2937 = vmatprep.mubr.f32.mxu0 0.0
  %2938 = vmatmul.mubr.f32.gmra.mxu0 %v2812
  %v2939 = vpop.f32.mrf.mxu0
  %v2940 = vadd.f32 %v2747, %v2939
  %v2941 = vpop.f32.mrf.mxu0
  %2942 = vmatprep.mubr.f32.mxu0 0.0
  %2943 = vmatmul.mubr.f32.gmra.mxu0 %v2815
  %v2944 = vpop.f32.mrf.mxu0
  %v2945 = vadd.f32 %v2752, %v2944
  %v2946 = vpop.f32.mrf.mxu0
  %2947 = vmatprep.mubr.f32.mxu0 0.0
  %2948 = vmatmul.mubr.f32.gmra.mxu0 %v2818
  %v2949 = vpop.f32.mrf.mxu0
  %v2950 = vadd.f32 %v2757, %v2949
  %v2951 = vpop.f32.mrf.mxu0
  %2952 = vmatprep.mubr.f32.mxu0 0.0
  %2953 = vmatmul.mubr.f32.gmra.mxu0 %v2821
  %v2954 = vpop.f32.mrf.mxu0
  %v2955 = vadd.f32 %v2762, %v2954
  %v2956 = vpop.f32.mrf.mxu0
  %2957 = vmatprep.mubr.f32.mxu0 0.0
  %2958 = vmatmul.mubr.f32.gmra.mxu0 %v2824
  %v2959 = vpop.f32.mrf.mxu0
  %v2960 = vadd.f32 %v2767, %v2959
  %v2961 = vpop.f32.mrf.mxu0
  %2962 = vmatprep.mubr.f32.mxu0 0.0
  %2963 = vmatmul.mubr.f32.gmra.mxu0 %v2827
  %v2964 = vpop.f32.mrf.mxu0
  %v2965 = vadd.f32 %v2772, %v2964
  %v2966 = vpop.f32.mrf.mxu0
  %2967 = vmatprep.mubr.f32.mxu0 0.0
  %2968 = vmatmul.mubr.f32.gmra.mxu0 %v2830
  %v2969 = vpop.f32.mrf.mxu0
  %v2970 = vadd.f32 %v2777, %v2969
  %v2971 = vpop.f32.mrf.mxu0
  %2972 = vmatprep.mubr.f32.mxu0 0.0
  %2973 = vmatmul.mubr.f32.gmra.mxu0 %v2833
  %v2974 = vpop.f32.mrf.mxu0
  %v2975 = vadd.f32 %v2782, %v2974
  %v2976 = vpop.f32.mrf.mxu0
  %2977 = vmatprep.mubr.f32.mxu0 0.0
  %2978 = vmatmul.mubr.f32.gmra.mxu0 %v2836
  %v2979 = vpop.f32.mrf.mxu0
  %v2980 = vadd.f32 %v2787, %v2979
  %v2981 = vpop.f32.mrf.mxu0
  %2982 = vdwg.mxu0
  %v2984 = vlaneseq
  %v2985 = vshrl.u32 %v2984, 7
  %v2986 = vsub.s32 0, %v2985
  %v2987 = vrot.slane %v283, %v2986
  %v2989 = vadd.f32 %v2905, %v2987
  %v2990 = vadd.f32 %v2910, %v2987
  %v2991 = vadd.f32 %v2915, %v2987
  %v2992 = vadd.f32 %v2920, %v2987
  %v2993 = vadd.f32 %v2925, %v2987
  %v2994 = vadd.f32 %v2930, %v2987
  %v2995 = vadd.f32 %v2935, %v2987
  %v2996 = vadd.f32 %v2940, %v2987
  %v2997 = vadd.f32 %v2945, %v2987
  %v2998 = vadd.f32 %v2950, %v2987
  %v2999 = vadd.f32 %v2955, %v2987
  %v3000 = vadd.f32 %v2960, %v2987
  %v3001 = vadd.f32 %v2965, %v2987
  %v3002 = vadd.f32 %v2970, %v2987
  %v3003 = vadd.f32 %v2975, %v2987
  %v3004 = vadd.f32 %v2980, %v2987
  %v3005 = vsel %vm55, %v2989, 0.0
  %v3006 = vsel %vm55, %v2991, 0.0
  %v3007 = vadd.f32 %v3005, %v3006
  %v3008 = vsel %vm55, %v2993, 0.0
  %v3009 = vadd.f32 %v3007, %v3008
  %v3010 = vsel %vm55, %v2995, 0.0
  %v3011 = vadd.f32 %v3009, %v3010
  %v3012 = vsel %vm55, %v2997, 0.0
  %v3013 = vadd.f32 %v3011, %v3012
  %v3014 = vsel %vm55, %v2999, 0.0
  %v3015 = vadd.f32 %v3013, %v3014
  %v3016 = vsel %vm55, %v3001, 0.0
  %v3017 = vadd.f32 %v3015, %v3016
  %v3018 = vsel %vm55, %v3003, 0.0
  %v3019 = vadd.f32 %v3017, %v3018
  %3020 = vadd.xlane.f32.xlu0 %v3019
  %v3021 = vpop.xlane.xlu0 %3020
  %v3022 = vrot.slane %v3021, 4
  %v3023 = vadd.f32 %v3021, %v3022
  %v3024 = vrot.slane %v3023, 2
  %v3025 = vadd.f32 %v3023, %v3024
  %v3026 = vrot.slane %v3025, 1
  %v3027 = vadd.f32 %v3025, %v3026
  %s3028 = vtos %v3027
  %v3029 = vrcp.pop 1024.0
  %s3030 = vtos %v3029
  %s3031 = smul.f32 %s3028, %s3030
  %v3032 = vstv %s3031
  %v3033 = vsub.f32 %v2989, %v3032
  %v3034 = vsub.f32 %v2991, %v3032
  %v3035 = vsub.f32 %v2993, %v3032
  %v3036 = vsub.f32 %v2995, %v3032
  %v3037 = vsub.f32 %v2997, %v3032
  %v3038 = vsub.f32 %v2999, %v3032
  %v3039 = vsub.f32 %v3001, %v3032
  %v3040 = vsub.f32 %v3003, %v3032
  %v3041 = vmul.f32 %v3033, %v3033
  %v3042 = vmul.f32 %v3034, %v3034
  %v3043 = vmul.f32 %v3035, %v3035
  %v3044 = vmul.f32 %v3036, %v3036
  %v3045 = vmul.f32 %v3037, %v3037
  %v3046 = vmul.f32 %v3038, %v3038
  %v3047 = vmul.f32 %v3039, %v3039
  %v3048 = vmul.f32 %v3040, %v3040
  %v3049 = vsel %vm55, %v3041, 0.0
  %v3050 = vsel %vm55, %v3042, 0.0
  %v3051 = vadd.f32 %v3049, %v3050
  %v3052 = vsel %vm55, %v3043, 0.0
  %v3053 = vadd.f32 %v3051, %v3052
  %v3054 = vsel %vm55, %v3044, 0.0
  %v3055 = vadd.f32 %v3053, %v3054
  %v3056 = vsel %vm55, %v3045, 0.0
  %v3057 = vadd.f32 %v3055, %v3056
  %v3058 = vsel %vm55, %v3046, 0.0
  %v3059 = vadd.f32 %v3057, %v3058
  %v3060 = vsel %vm55, %v3047, 0.0
  %v3061 = vadd.f32 %v3059, %v3060
  %v3062 = vsel %vm55, %v3048, 0.0
  %v3063 = vadd.f32 %v3061, %v3062
  %3064 = vadd.xlane.f32.xlu0 %v3063
  %v3065 = vpop.xlane.xlu0 %3064
  %v3066 = vrot.slane %v3065, 4
  %v3067 = vadd.f32 %v3065, %v3066
  %v3068 = vrot.slane %v3067, 2
  %v3069 = vadd.f32 %v3067, %v3068
  %v3070 = vrot.slane %v3069, 1
  %v3071 = vadd.f32 %v3069, %v3070
  %s3072 = vtos %v3071
  %v3073 = vrcp.pop 1024.0
  %s3074 = vtos %v3073
  %s3075 = smul.f32 %s3072, %s3074
  %s3076 = sadd.f32 %s3075, 1e-08
  %v3077 = vstv %s3076
  %v3078 = vrsqrt.pop %v3077
  %s3079 = vtos %v3078
  %v3080 = vstv %s3079
  %v3081 = vmul.f32 %v3033, %v3080
  %v3082 = vmul.f32 %v3034, %v3080
  %v3083 = vmul.f32 %v3035, %v3080
  %v3084 = vmul.f32 %v3036, %v3080
  %v3085 = vmul.f32 %v3037, %v3080
  %v3086 = vmul.f32 %v3038, %v3080
  %v3087 = vmul.f32 %v3039, %v3080
  %v3088 = vmul.f32 %v3040, %v3080
  %v3090 = vlaneseq
  %v3091 = vshrl.u32 %v3090, 7
  %v3092 = vsub.s32 0, %v3091
  %v3093 = vrot.slane %v284, %v3092
  %v3095 = vmul.f32 %v3081, %v3093
  %v3096 = vmul.f32 %v3082, %v3093
  %v3097 = vmul.f32 %v3083, %v3093
  %v3098 = vmul.f32 %v3084, %v3093
  %v3099 = vmul.f32 %v3085, %v3093
  %v3100 = vmul.f32 %v3086, %v3093
  %v3101 = vmul.f32 %v3087, %v3093
  %v3102 = vmul.f32 %v3088, %v3093
  %v3103 = vadd.f32 %v35, %v3095
  %v3104 = vadd.f32 %v37, %v3096
  %v3105 = vadd.f32 %v39, %v3097
  %v3106 = vadd.f32 %v41, %v3098
  %v3107 = vadd.f32 %v43, %v3099
  %v3108 = vadd.f32 %v45, %v3100
  %v3109 = vadd.f32 %v47, %v3101
  %v3110 = vadd.f32 %v49, %v3102
  %v3112 = vlaneseq
  %v3113 = vshrl.u32 %v3112, 7
  %v3114 = vsub.s32 0, %v3113
  %v3115 = vrot.slane %v285, %v3114
  %v3117 = vadd.f32 %v3103, %v3115
  %v3118 = vadd.f32 %v3104, %v3115
  %v3119 = vadd.f32 %v3105, %v3115
  %v3120 = vadd.f32 %v3106, %v3115
  %v3121 = vadd.f32 %v3107, %v3115
  %v3122 = vadd.f32 %v3108, %v3115
  %v3123 = vadd.f32 %v3109, %v3115
  %v3124 = vadd.f32 %v3110, %v3115
  %3125 = vst.msk [vmem:[%s10] sm:$0xff] %vm55, %v3117
  %3126 = vst.msk [vmem:[%s10 + $0x10] sm:$0xff] %vm55, %v3118
  %3127 = vst.msk [vmem:[%s10 + $0x20] sm:$0xff] %vm55, %v3119
  %3128 = vst.msk [vmem:[%s10 + $0x30] sm:$0xff] %vm55, %v3120
  %3129 = vst.msk [vmem:[%s10 + $0x40] sm:$0xff] %vm55, %v3121
  %3130 = vst.msk [vmem:[%s10 + $0x50] sm:$0xff] %vm55, %v3122
  %3131 = vst.msk [vmem:[%s10 + $0x60] sm:$0xff] %vm55, %v3123
  %3132 = vst.msk [vmem:[%s10 + $0x70] sm:$0xff] %vm55, %v3124
  %v3133 = vsel %vm55, %v2990, 0.0
  %v3134 = vsel %vm55, %v2992, 0.0
  %v3135 = vadd.f32 %v3133, %v3134
  %v3136 = vsel %vm55, %v2994, 0.0
  %v3137 = vadd.f32 %v3135, %v3136
  %v3138 = vsel %vm55, %v2996, 0.0
  %v3139 = vadd.f32 %v3137, %v3138
  %v3140 = vsel %vm55, %v2998, 0.0
  %v3141 = vadd.f32 %v3139, %v3140
  %v3142 = vsel %vm55, %v3000, 0.0
  %v3143 = vadd.f32 %v3141, %v3142
  %v3144 = vsel %vm55, %v3002, 0.0
  %v3145 = vadd.f32 %v3143, %v3144
  %v3146 = vsel %vm55, %v3004, 0.0
  %v3147 = vadd.f32 %v3145, %v3146
  %3148 = vadd.xlane.f32.xlu0 %v3147
  %v3149 = vpop.xlane.xlu0 %3148
  %v3150 = vrot.slane %v3149, 4
  %v3151 = vadd.f32 %v3149, %v3150
  %v3152 = vrot.slane %v3151, 2
  %v3153 = vadd.f32 %v3151, %v3152
  %v3154 = vrot.slane %v3153, 1
  %v3155 = vadd.f32 %v3153, %v3154
  %s3156 = vtos %v3155
  %v3157 = vrcp.pop 1024.0
  %s3158 = vtos %v3157
  %s3159 = smul.f32 %s3156, %s3158
  %v3160 = vstv %s3159
  %v3161 = vsub.f32 %v2990, %v3160
  %v3162 = vsub.f32 %v2992, %v3160
  %v3163 = vsub.f32 %v2994, %v3160
  %v3164 = vsub.f32 %v2996, %v3160
  %v3165 = vsub.f32 %v2998, %v3160
  %v3166 = vsub.f32 %v3000, %v3160
  %v3167 = vsub.f32 %v3002, %v3160
  %v3168 = vsub.f32 %v3004, %v3160
  %v3169 = vmul.f32 %v3161, %v3161
  %v3170 = vmul.f32 %v3162, %v3162
  %v3171 = vmul.f32 %v3163, %v3163
  %v3172 = vmul.f32 %v3164, %v3164
  %v3173 = vmul.f32 %v3165, %v3165
  %v3174 = vmul.f32 %v3166, %v3166
  %v3175 = vmul.f32 %v3167, %v3167
  %v3176 = vmul.f32 %v3168, %v3168
  %v3177 = vsel %vm55, %v3169, 0.0
  %v3178 = vsel %vm55, %v3170, 0.0
  %v3179 = vadd.f32 %v3177, %v3178
  %v3180 = vsel %vm55, %v3171, 0.0
  %v3181 = vadd.f32 %v3179, %v3180
  %v3182 = vsel %vm55, %v3172, 0.0
  %v3183 = vadd.f32 %v3181, %v3182
  %v3184 = vsel %vm55, %v3173, 0.0
  %v3185 = vadd.f32 %v3183, %v3184
  %v3186 = vsel %vm55, %v3174, 0.0
  %v3187 = vadd.f32 %v3185, %v3186
  %v3188 = vsel %vm55, %v3175, 0.0
  %v3189 = vadd.f32 %v3187, %v3188
  %v3190 = vsel %vm55, %v3176, 0.0
  %v3191 = vadd.f32 %v3189, %v3190
  %3192 = vadd.xlane.f32.xlu0 %v3191
  %v3193 = vpop.xlane.xlu0 %3192
  %v3194 = vrot.slane %v3193, 4
  %v3195 = vadd.f32 %v3193, %v3194
  %v3196 = vrot.slane %v3195, 2
  %v3197 = vadd.f32 %v3195, %v3196
  %v3198 = vrot.slane %v3197, 1
  %v3199 = vadd.f32 %v3197, %v3198
  %s3200 = vtos %v3199
  %v3201 = vrcp.pop 1024.0
  %s3202 = vtos %v3201
  %s3203 = smul.f32 %s3200, %s3202
  %s3204 = sadd.f32 %s3203, 1e-08
  %v3205 = vstv %s3204
  %v3206 = vrsqrt.pop %v3205
  %s3207 = vtos %v3206
  %v3208 = vstv %s3207
  %v3209 = vmul.f32 %v3161, %v3208
  %v3210 = vmul.f32 %v3162, %v3208
  %v3211 = vmul.f32 %v3163, %v3208
  %v3212 = vmul.f32 %v3164, %v3208
  %v3213 = vmul.f32 %v3165, %v3208
  %v3214 = vmul.f32 %v3166, %v3208
  %v3215 = vmul.f32 %v3167, %v3208
  %v3216 = vmul.f32 %v3168, %v3208
  %v3217 = vmul.f32 %v3209, %v3093
  %v3218 = vmul.f32 %v3210, %v3093
  %v3219 = vmul.f32 %v3211, %v3093
  %v3220 = vmul.f32 %v3212, %v3093
  %v3221 = vmul.f32 %v3213, %v3093
  %v3222 = vmul.f32 %v3214, %v3093
  %v3223 = vmul.f32 %v3215, %v3093
  %v3224 = vmul.f32 %v3216, %v3093
  %v3225 = vadd.f32 %v36, %v3217
  %v3226 = vadd.f32 %v38, %v3218
  %v3227 = vadd.f32 %v40, %v3219
  %v3228 = vadd.f32 %v42, %v3220
  %v3229 = vadd.f32 %v44, %v3221
  %v3230 = vadd.f32 %v46, %v3222
  %v3231 = vadd.f32 %v48, %v3223
  %v3232 = vadd.f32 %v50, %v3224
  %v3233 = vadd.f32 %v3225, %v3115
  %v3234 = vadd.f32 %v3226, %v3115
  %v3235 = vadd.f32 %v3227, %v3115
  %v3236 = vadd.f32 %v3228, %v3115
  %v3237 = vadd.f32 %v3229, %v3115
  %v3238 = vadd.f32 %v3230, %v3115
  %v3239 = vadd.f32 %v3231, %v3115
  %v3240 = vadd.f32 %v3232, %v3115
  %3241 = vst.msk [vmem:[%s10 + $0x8] sm:$0xff] %vm55, %v3233
  %3242 = vst.msk [vmem:[%s10 + $0x18] sm:$0xff] %vm55, %v3234
  %3243 = vst.msk [vmem:[%s10 + $0x28] sm:$0xff] %vm55, %v3235
  %3244 = vst.msk [vmem:[%s10 + $0x38] sm:$0xff] %vm55, %v3236
  %3245 = vst.msk [vmem:[%s10 + $0x48] sm:$0xff] %vm55, %v3237
  %3246 = vst.msk [vmem:[%s10 + $0x58] sm:$0xff] %vm55, %v3238
  %3247 = vst.msk [vmem:[%s10 + $0x68] sm:$0xff] %vm55, %v3239
  %3248 = vst.msk [vmem:[%s10 + $0x78] sm:$0xff] %vm55, %v3240
  // Predicated region
  $region42: #{dprnn_forward.5} parent=0 // pred_check
    _
  $region43: #{dprnn_forward.5} parent=0 // pred_check_branch
    %3250 = sbr.rel (0) target = $region45
  $region44: #{dprnn_forward.5} parent=0 // pred_region
    _
  $region45: #{dprnn_forward.5} parent=0 // pred_fallthru
    _
  // Predicated region
  $region46: #{dprnn_forward.5} parent=0 // pred_check
    _
  $region47: #{dprnn_forward.5} parent=0 // pred_check_branch
    %3252 = sbr.rel (0) target = $region49
  $region48: #{dprnn_forward.5} parent=0 // pred_region
    _
  $region49: #{dprnn_forward.5} parent=0 // pred_fallthru
    _

</llo_original>
